<compile_context>
chip_gen: v5e
topology: v5e:2x2
jax: 0.10.0
libtpu: 0.0.40
codegen_flags: <defaults>
</compile_context>

<pallas_src>
import functools

import jax
import jax.numpy as jnp
from jax.experimental import pallas as pl
from jax.experimental.pallas import tpu as pltpu


# -----------------------------------------------------------------------------
# In-kernel helpers
# -----------------------------------------------------------------------------
def _layer_norm(v, g, b, eps=1e-5):
    mu = jnp.mean(v, axis=-1, keepdims=True)
    var = jnp.mean((v - mu) ** 2, axis=-1, keepdims=True)
    return (v - mu) * jax.lax.rsqrt(var + eps) * g + b


def _mha(q, k, v, num_heads):
    """Heads-batched multi-head softmax attention (no per-head Python loop).

    q: (Sq, D) f32, k/v: (Sk, D) f32.  Matmul inputs cast to bf16 (f32 MXU
    accumulation); softmax denominator via the EUP approx reciprocal.
    """
    Sq, D = q.shape
    Sk = k.shape[0]
    hd = D // num_heads
    scale = float(hd) ** -0.5
    qh = q.reshape(Sq, num_heads, hd).transpose(1, 0, 2).astype(jnp.bfloat16)
    kh = k.reshape(Sk, num_heads, hd).transpose(1, 0, 2).astype(jnp.bfloat16)
    vh = v.reshape(Sk, num_heads, hd).transpose(1, 0, 2).astype(jnp.bfloat16)
    s = jnp.einsum("hqd,hkd->hqk", qh, kh,
                   preferred_element_type=jnp.float32) * scale
    s = s - jnp.max(s, axis=-1, keepdims=True)
    p = jnp.exp(s)
    p = p * pl.reciprocal(jnp.sum(p, axis=-1, keepdims=True), approx=True)
    o = jnp.einsum("hqk,hkd->hqd", p.astype(jnp.bfloat16), vh,
                   preferred_element_type=jnp.float32)
    return o.transpose(1, 0, 2).reshape(Sq, D)


# -----------------------------------------------------------------------------
# Fused kernel: all encoder layers + latent cross-attention
# -----------------------------------------------------------------------------
def fused_encoder_kernel(x_ref,
                         ln1_g, ln1_b, wqkv, bqkv, wo, bo,
                         ln2_g, ln2_b, wmi, bmi, wmo, bmo,
                         latents, lwq, lbq, lwk, lbk, lwv, lbv, lwo, lbo,
                         o_ref, act_ref, *, num_heads):
    """grid = (batch, depth).  Activation lives in VMEM scratch across depth;
    output (latent tokens) is written only on the last depth step."""
    layer = pl.program_id(1)
    last = pl.num_programs(1) - 1

    @pl.when(layer == 0)
    def _():
        act_ref[...] = x_ref[0].astype(jnp.float32)

    x = act_ref[...]                                       # (S, D) f32
    D = x.shape[-1]

    # --- PreLayerNorm + SelfAttention + residual ------------------------------
    xn = _layer_norm(x, ln1_g[0], ln1_b[0])
    qkv = jnp.dot(xn.astype(jnp.bfloat16), wqkv[0],
                  preferred_element_type=jnp.float32) + bqkv[0]
    attn = _mha(qkv[:, :D], qkv[:, D:2 * D], qkv[:, 2 * D:], num_heads)
    attn = jnp.dot(attn.astype(jnp.bfloat16), wo[0],
                   preferred_element_type=jnp.float32) + bo[0]
    x = x + attn

    # --- PreLayerNorm + GatedMLP + residual ------------------------------------
    xn = _layer_norm(x, ln2_g[0], ln2_b[0])
    h = jnp.dot(xn.astype(jnp.bfloat16), wmi[0],
                preferred_element_type=jnp.float32) + bmi[0]
    hidden = wmo.shape[1]
    gated = h[:, :hidden] * h[:, hidden:]                  # activation=None -> identity
    mlp = jnp.dot(gated.astype(jnp.bfloat16), wmo[0],
                  preferred_element_type=jnp.float32) + bmo[0]
    x = x + mlp

    act_ref[...] = x

    # --- LatentCrossAttention on the final activation (last layer only) --------
    @pl.when(layer == last)
    def _():
        lat = latents[...].astype(jnp.float32)             # (L, D)
        xb = x.astype(jnp.bfloat16)
        q = jnp.dot(lat.astype(jnp.bfloat16), lwq[...],
                    preferred_element_type=jnp.float32) + lbq[0]
        k = jnp.dot(xb, lwk[...], preferred_element_type=jnp.float32) + lbk[0]
        v = jnp.dot(xb, lwv[...], preferred_element_type=jnp.float32) + lbv[0]
        out = _mha(q, k, v, num_heads)
        out = jnp.dot(out.astype(jnp.bfloat16), lwo[...],
                      preferred_element_type=jnp.float32) + lbo[0]
        o_ref[0] = (lat + out).astype(o_ref.dtype)


# -----------------------------------------------------------------------------
# pallas_call plumbing
# -----------------------------------------------------------------------------
LAYER_KEYS = ("ln1_g", "ln1_b", "wqkv", "bqkv", "wo", "bo",
              "ln2_g", "ln2_b", "wmi", "bmi", "wmo", "bmo")
LATENT_KEYS = ("latents", "wq", "bq", "wk", "bk", "wv", "bv", "wo", "bo")


def _layer_spec(arr):
    """One layer slice of a [depth, ...] stacked parameter, indexed by grid axis 1."""
    block = (1,) + arr.shape[1:]
    zeros = (0,) * (arr.ndim - 1)
    return pl.BlockSpec(block, lambda b, l, _z=zeros: (l,) + _z)


def _const_spec(arr):
    """Whole array, same block for every grid step."""
    zeros = (0,) * arr.ndim
    return pl.BlockSpec(arr.shape, lambda b, l, _z=zeros: _z)


def _vmem_limit_bytes(S, D, H, L, num_heads):
    f32, bf16 = 4, 2
    blocks = (S * D * f32                                     # x tile
              + D * 3 * D * bf16 + D * D * bf16               # wqkv, wo
              + D * 2 * H * bf16 + H * D * bf16               # wmi, wmo
              + (4 * D + 3 * D + 2 * H + 2 * D) * f32         # LN / bias rows
              + L * D * f32 + 4 * D * D * bf16 + 4 * D * f32  # latent params
              + L * D * f32)                                  # output tile
    scratch = S * D * f32
    inter = (S * 3 * D + S * 2 * H + num_heads * S * S + 6 * S * D) * f32
    est = 2 * blocks + scratch + inter                        # double-buffered blocks
    return int(min(max(2 * est, 32 * 1024 * 1024), 64 * 1024 * 1024))


def transformer_encoder(x, params, *, num_heads, num_latent_tokens):
    B, S, D = x.shape
    lyr, lat = params["layers"], params["latent"]
    depth = lyr["wqkv"].shape[0]
    H = lyr["wmo"].shape[1]
    L = num_latent_tokens

    layer_args = [lyr[k] for k in LAYER_KEYS]
    latent_args = [lat[k] for k in LATENT_KEYS]

    in_specs = ([pl.BlockSpec((1, S, D), lambda b, l: (b, 0, 0))]
                + [_layer_spec(a) for a in layer_args]
                + [_const_spec(a) for a in latent_args])

    return pl.pallas_call(
        functools.partial(fused_encoder_kernel, num_heads=num_heads),
        out_shape=jax.ShapeDtypeStruct((B, L, D), x.dtype),
        grid=(B, depth),
        in_specs=in_specs,
        out_specs=pl.BlockSpec((1, L, D), lambda b, l: (b, 0, 0)),
        scratch_shapes=[pltpu.VMEM((S, D), jnp.float32)],
        compiler_params=pltpu.CompilerParams(
            dimension_semantics=("parallel", "arbitrary"),
            vmem_limit_bytes=_vmem_limit_bytes(S, D, H, L, num_heads)),
    )(x, *layer_args, *latent_args)


# -----------------------------------------------------------------------------
# Deterministic parameter construction (weights in bf16, norms/biases in f32)
# -----------------------------------------------------------------------------
def init_params(key, model_dim, depth, num_latent_tokens, expansion_factor):
    D = model_dim
    H = D * expansion_factor
    ks = jax.random.split(key, 9)
    w = lambda kk, shape: (0.02 * jax.random.normal(kk, shape, jnp.float32)
                           ).astype(jnp.bfloat16)
    layers = {
        "ln1_g": jnp.ones((depth, 1, D), jnp.float32),
        "ln1_b": jnp.zeros((depth, 1, D), jnp.float32),
        "wqkv": w(ks[0], (depth, D, 3 * D)),
        "bqkv": jnp.zeros((depth, 1, 3 * D), jnp.float32),
        "wo": w(ks[1], (depth, D, D)),
        "bo": jnp.zeros((depth, 1, D), jnp.float32),
        "ln2_g": jnp.ones((depth, 1, D), jnp.float32),
        "ln2_b": jnp.zeros((depth, 1, D), jnp.float32),
        "wmi": w(ks[2], (depth, D, 2 * H)),
        "bmi": jnp.zeros((depth, 1, 2 * H), jnp.float32),
        "wmo": w(ks[3], (depth, H, D)),
        "bmo": jnp.zeros((depth, 1, D), jnp.float32),
    }
    latent = {
        "latents": 0.02 * jax.random.normal(ks[4], (num_latent_tokens, D),
                                            jnp.float32),
        "wq": w(ks[5], (D, D)), "bq": jnp.zeros((1, D), jnp.float32),
        "wk": w(ks[6], (D, D)), "bk": jnp.zeros((1, D), jnp.float32),
        "wv": w(ks[7], (D, D)), "bv": jnp.zeros((1, D), jnp.float32),
        "wo": w(ks[8], (D, D)), "bo": jnp.zeros((1, D), jnp.float32),
    }
    return {"layers": layers, "latent": latent}


# -----------------------------------------------------------------------------
if __name__ == "__main__":
    # Small config consistent with the module's forward:
    #   x: [batch, tokens, model_dim] -> out: [batch, num_latent_tokens, model_dim]
    batch, tokens, model_dim = 2, 8, 32
    depth, num_heads, num_latent_tokens, expansion_factor = 2, 4, 4, 4

    key = jax.random.PRNGKey(0)
    kx, kp = jax.random.split(key)
    x = jax.random.normal(kx, (batch, tokens, model_dim), jnp.float32)
    params = init_params(kp, model_dim, depth, num_latent_tokens, expansion_factor)

    out = transformer_encoder(x, params, num_heads=num_heads,
                              num_latent_tokens=num_latent_tokens)
    out = jax.block_until_ready(out)
    assert out.shape == (batch, num_latent_tokens, model_dim), out.shape
    assert jnp.all(jnp.isfinite(out))
    print("KERNEL_OK")
</pallas_src>

<mosaic_0001>
module attributes {stable_mosaic.version = 11 : i64} {
  func.func @fused_encoder_kernel(%arg0: i32, %arg1: i32, %arg2: memref<1x8x32xf32, #tpu.memory_space<vmem>>, %arg3: memref<1x1x32xf32, #tpu.memory_space<vmem>>, %arg4: memref<1x1x32xf32, #tpu.memory_space<vmem>>, %arg5: memref<1x32x96xbf16, #tpu.memory_space<vmem>>, %arg6: memref<1x1x96xf32, #tpu.memory_space<vmem>>, %arg7: memref<1x32x32xbf16, #tpu.memory_space<vmem>>, %arg8: memref<1x1x32xf32, #tpu.memory_space<vmem>>, %arg9: memref<1x1x32xf32, #tpu.memory_space<vmem>>, %arg10: memref<1x1x32xf32, #tpu.memory_space<vmem>>, %arg11: memref<1x32x256xbf16, #tpu.memory_space<vmem>>, %arg12: memref<1x1x256xf32, #tpu.memory_space<vmem>>, %arg13: memref<1x128x32xbf16, #tpu.memory_space<vmem>>, %arg14: memref<1x1x32xf32, #tpu.memory_space<vmem>>, %arg15: memref<4x32xf32, #tpu.memory_space<vmem>>, %arg16: memref<32x32xbf16, #tpu.memory_space<vmem>>, %arg17: memref<1x32xf32, #tpu.memory_space<vmem>>, %arg18: memref<32x32xbf16, #tpu.memory_space<vmem>>, %arg19: memref<1x32xf32, #tpu.memory_space<vmem>>, %arg20: memref<32x32xbf16, #tpu.memory_space<vmem>>, %arg21: memref<1x32xf32, #tpu.memory_space<vmem>>, %arg22: memref<32x32xbf16, #tpu.memory_space<vmem>>, %arg23: memref<1x32xf32, #tpu.memory_space<vmem>>, %arg24: memref<1x4x32xf32, #tpu.memory_space<vmem>>, %arg25: memref<8x32xf32, #tpu.memory_space<vmem>>) attributes {dimension_semantics = [#tpu.dimension_semantics<parallel>, #tpu.dimension_semantics<arbitrary>], iteration_bounds = array<i64: 2, 2>, scalar_prefetch = 0 : i64, scratch_operands = 1 : i64, tpu.core_type = #tpu.core_type<tc>, window_params = [{transform_indices = @transform_0, window_bounds = array<i64: 1, 8, 32>}, {transform_indices = @transform_1, window_bounds = array<i64: 1, 1, 32>}, {transform_indices = @transform_2, window_bounds = array<i64: 1, 1, 32>}, {transform_indices = @transform_3, window_bounds = array<i64: 1, 32, 96>}, {transform_indices = @transform_4, window_bounds = array<i64: 1, 1, 96>}, {transform_indices = @transform_5, window_bounds = array<i64: 1, 32, 32>}, {transform_indices = @transform_6, window_bounds = array<i64: 1, 1, 32>}, {transform_indices = @transform_7, window_bounds = array<i64: 1, 1, 32>}, {transform_indices = @transform_8, window_bounds = array<i64: 1, 1, 32>}, {transform_indices = @transform_9, window_bounds = array<i64: 1, 32, 256>}, {transform_indices = @transform_10, window_bounds = array<i64: 1, 1, 256>}, {transform_indices = @transform_11, window_bounds = array<i64: 1, 128, 32>}, {transform_indices = @transform_12, window_bounds = array<i64: 1, 1, 32>}, {pipeline_mode = #tpu.pipeline_mode<synchronous>, transform_indices = @transform_13, window_bounds = array<i64: 4, 32>}, {pipeline_mode = #tpu.pipeline_mode<synchronous>, transform_indices = @transform_14, window_bounds = array<i64: 32, 32>}, {pipeline_mode = #tpu.pipeline_mode<synchronous>, transform_indices = @transform_15, window_bounds = array<i64: 1, 32>}, {pipeline_mode = #tpu.pipeline_mode<synchronous>, transform_indices = @transform_16, window_bounds = array<i64: 32, 32>}, {pipeline_mode = #tpu.pipeline_mode<synchronous>, transform_indices = @transform_17, window_bounds = array<i64: 1, 32>}, {pipeline_mode = #tpu.pipeline_mode<synchronous>, transform_indices = @transform_18, window_bounds = array<i64: 32, 32>}, {pipeline_mode = #tpu.pipeline_mode<synchronous>, transform_indices = @transform_19, window_bounds = array<i64: 1, 32>}, {pipeline_mode = #tpu.pipeline_mode<synchronous>, transform_indices = @transform_20, window_bounds = array<i64: 32, 32>}, {pipeline_mode = #tpu.pipeline_mode<synchronous>, transform_indices = @transform_21, window_bounds = array<i64: 1, 32>}, {transform_indices = @transform_22, window_bounds = array<i64: 1, 4, 32>}]} {
    %c0_i32 = arith.constant 0 : i32
    %0 = arith.cmpi eq, %arg1, %c0_i32 : i32
    %1 = arith.extui %0 : i1 to i32
    %c0_i32_0 = arith.constant 0 : i32
    %2 = arith.cmpi ne, %1, %c0_i32_0 : i32
    scf.if %2 {
      %c0_59 = arith.constant 0 : index
      %c0_60 = arith.constant 0 : index
      %c0_61 = arith.constant 0 : index
      %126 = vector.load %arg2[%c0_59, %c0_60, %c0_61] : memref<1x8x32xf32, #tpu.memory_space<vmem>>, vector<1x8x32xf32>
      %127 = vector.shape_cast %126 : vector<1x8x32xf32> to vector<8x32xf32>
      %c0_62 = arith.constant 0 : index
      %c0_63 = arith.constant 0 : index
      %128 = vector.load %arg25[%c0_62, %c0_63] : memref<8x32xf32, #tpu.memory_space<vmem>>, vector<8x32xf32>
      tpu.vector_store %arg25[%c0_62, %c0_63], %127 {strides = array<i32>} : memref<8x32xf32, #tpu.memory_space<vmem>>, vector<8x32xf32>,
    } else {
    }
    %c0 = arith.constant 0 : index
    %c0_1 = arith.constant 0 : index
    %3 = vector.load %arg25[%c0, %c0_1] : memref<8x32xf32, #tpu.memory_space<vmem>>, vector<8x32xf32>
    %c0_2 = arith.constant 0 : index
    %c0_3 = arith.constant 0 : index
    %c0_4 = arith.constant 0 : index
    %4 = vector.load %arg3[%c0_2, %c0_3, %c0_4] : memref<1x1x32xf32, #tpu.memory_space<vmem>>, vector<1x1x32xf32>
    %5 = vector.shape_cast %4 : vector<1x1x32xf32> to vector<1x32xf32>
    %c0_5 = arith.constant 0 : index
    %c0_6 = arith.constant 0 : index
    %c0_7 = arith.constant 0 : index
    %6 = vector.load %arg4[%c0_5, %c0_6, %c0_7] : memref<1x1x32xf32, #tpu.memory_space<vmem>>, vector<1x1x32xf32>
    %7 = vector.shape_cast %6 : vector<1x1x32xf32> to vector<1x32xf32>
    %cst = arith.constant dense<0.000000e+00> : vector<8xf32>
    %8 = vector.multi_reduction <add>, %3, %cst [1] : vector<8x32xf32> to vector<8xf32>
    %9 = vector.shape_cast %8 : vector<8xf32> to vector<8x1xf32>
    %cst_8 = arith.constant 3.200000e+01 : f32
    %10 = vector.broadcast %cst_8 : f32 to vector<8x1xf32>
    %11 = arith.divf %9, %10 : vector<8x1xf32>
    %12 = vector.broadcast %11 : vector<8x1xf32> to vector<8x32xf32>
    %13 = arith.subf %3, %12 : vector<8x32xf32>
    %14 = arith.mulf %13, %13 : vector<8x32xf32>
    %cst_9 = arith.constant dense<0.000000e+00> : vector<8xf32>
    %15 = vector.multi_reduction <add>, %14, %cst_9 [1] : vector<8x32xf32> to vector<8xf32>
    %16 = vector.shape_cast %15 : vector<8xf32> to vector<8x1xf32>
    %cst_10 = arith.constant 3.200000e+01 : f32
    %17 = vector.broadcast %cst_10 : f32 to vector<8x1xf32>
    %18 = arith.divf %16, %17 : vector<8x1xf32>
    %19 = vector.broadcast %11 : vector<8x1xf32> to vector<8x32xf32>
    %20 = arith.subf %3, %19 : vector<8x32xf32>
    %cst_11 = arith.constant 9.99999974E-6 : f32
    %21 = vector.broadcast %cst_11 : f32 to vector<8x1xf32>
    %22 = arith.addf %18, %21 : vector<8x1xf32>
    %23 = math.rsqrt %22 : vector<8x1xf32>
    %24 = vector.broadcast %23 : vector<8x1xf32> to vector<8x32xf32>
    %25 = arith.mulf %20, %24 : vector<8x32xf32>
    %26 = vector.broadcast %5 : vector<1x32xf32> to vector<8x32xf32>
    %27 = arith.mulf %25, %26 : vector<8x32xf32>
    %28 = vector.broadcast %7 : vector<1x32xf32> to vector<8x32xf32>
    %29 = arith.addf %27, %28 : vector<8x32xf32>
    %30 = arith.truncf %29 : vector<8x32xf32> to vector<8x32xbf16>
    %c0_12 = arith.constant 0 : index
    %c0_13 = arith.constant 0 : index
    %c0_14 = arith.constant 0 : index
    %31 = vector.load %arg5[%c0_12, %c0_13, %c0_14] : memref<1x32x96xbf16, #tpu.memory_space<vmem>>, vector<1x32x96xbf16>
    %32 = vector.shape_cast %31 : vector<1x32x96xbf16> to vector<32x96xbf16>
    %cst_15 = arith.constant dense<0.000000e+00> : vector<8x96xf32>
    %33 = tpu.matmul %30, %32, %cst_15 {dimension_numbers = #tpu.dot_dimension_numbers<[1], [0], [0], [1], [0, 0, 1, 1], [], []>} : vector<8x32xbf16>, vector<32x96xbf16>, vector<8x96xf32> -> vector<8x96xf32>
    %c0_16 = arith.constant 0 : index
    %c0_17 = arith.constant 0 : index
    %c0_18 = arith.constant 0 : index
    %34 = vector.load %arg6[%c0_16, %c0_17, %c0_18] : memref<1x1x96xf32, #tpu.memory_space<vmem>>, vector<1x1x96xf32>
    %35 = vector.shape_cast %34 : vector<1x1x96xf32> to vector<1x96xf32>
    %36 = vector.broadcast %35 : vector<1x96xf32> to vector<8x96xf32>
    %37 = arith.addf %33, %36 : vector<8x96xf32>
    %38 = vector.extract_strided_slice %37 {offsets = [0, 0], sizes = [8, 32], strides = [1, 1]} : vector<8x96xf32> to vector<8x32xf32>
    %39 = vector.extract_strided_slice %37 {offsets = [0, 32], sizes = [8, 32], strides = [1, 1]} : vector<8x96xf32> to vector<8x32xf32>
    %40 = vector.extract_strided_slice %37 {offsets = [0, 64], sizes = [8, 32], strides = [1, 1]} : vector<8x96xf32> to vector<8x32xf32>
    %41 = vector.shape_cast %38 : vector<8x32xf32> to vector<8x4x8xf32>
    %42 = tpu.transpose %41, [1, 0, 2] : vector<8x4x8xf32> -> vector<4x8x8xf32>
    %43 = arith.truncf %42 : vector<4x8x8xf32> to vector<4x8x8xbf16>
    %44 = vector.shape_cast %39 : vector<8x32xf32> to vector<8x4x8xf32>
    %45 = tpu.transpose %44, [1, 0, 2] : vector<8x4x8xf32> -> vector<4x8x8xf32>
    %46 = arith.truncf %45 : vector<4x8x8xf32> to vector<4x8x8xbf16>
    %47 = vector.shape_cast %40 : vector<8x32xf32> to vector<8x4x8xf32>
    %48 = tpu.transpose %47, [1, 0, 2] : vector<8x4x8xf32> -> vector<4x8x8xf32>
    %49 = arith.truncf %48 : vector<4x8x8xf32> to vector<4x8x8xbf16>
    "tpu.trace_start"() <{level = 10 : i32, message = "hqd,hkd->hqk"}> : () -> ()
    %cst_19 = arith.constant dense<0.000000e+00> : vector<4x8x8xf32>
    %50 = tpu.matmul %43, %46, %cst_19 {dimension_numbers = #tpu.dot_dimension_numbers<[2], [2], [1], [1], [0, 0, 0, 1, 1, 1], [0], [0]>} : vector<4x8x8xbf16>, vector<4x8x8xbf16>, vector<4x8x8xf32> -> vector<4x8x8xf32>
    "tpu.trace_stop"() : () -> ()
    %cst_20 = arith.constant 0.353553385 : f32
    %51 = vector.broadcast %cst_20 : f32 to vector<4x8x8xf32>
    %52 = arith.mulf %50, %51 : vector<4x8x8xf32>
    %cst_21 = arith.constant dense<0xFF800000> : vector<4x8xf32>
    %53 = vector.multi_reduction <maximumf>, %52, %cst_21 [2] : vector<4x8x8xf32> to vector<4x8xf32>
    %54 = vector.shape_cast %53 : vector<4x8xf32> to vector<4x8x1xf32>
    %55 = vector.broadcast %54 : vector<4x8x1xf32> to vector<4x8x8xf32>
    %56 = arith.subf %52, %55 : vector<4x8x8xf32>
    %57 = math.exp %56 : vector<4x8x8xf32>
    %cst_22 = arith.constant dense<0.000000e+00> : vector<4x8xf32>
    %58 = vector.multi_reduction <add>, %57, %cst_22 [2] : vector<4x8x8xf32> to vector<4x8xf32>
    %59 = vector.shape_cast %58 : vector<4x8xf32> to vector<4x8x1xf32>
    %60 = tpu.reciprocal %59 {approx = true} : vector<4x8x1xf32> -> vector<4x8x1xf32>
    %61 = vector.broadcast %60 : vector<4x8x1xf32> to vector<4x8x8xf32>
    %62 = arith.mulf %57, %61 : vector<4x8x8xf32>
    %63 = arith.truncf %62 : vector<4x8x8xf32> to vector<4x8x8xbf16>
    "tpu.trace_start"() <{level = 10 : i32, message = "hqk,hkd->hqd"}> : () -> ()
    %cst_23 = arith.constant dense<0.000000e+00> : vector<4x8x8xf32>
    %64 = tpu.matmul %63, %49, %cst_23 {dimension_numbers = #tpu.dot_dimension_numbers<[2], [1], [1], [2], [0, 0, 0, 1, 1, 2], [0], [0]>} : vector<4x8x8xbf16>, vector<4x8x8xbf16>, vector<4x8x8xf32> -> vector<4x8x8xf32>
    "tpu.trace_stop"() : () -> ()
    %65 = tpu.transpose %64, [1, 0, 2] : vector<4x8x8xf32> -> vector<8x4x8xf32>
    %66 = vector.shape_cast %65 : vector<8x4x8xf32> to vector<8x32xf32>
    %67 = arith.truncf %66 : vector<8x32xf32> to vector<8x32xbf16>
    %c0_24 = arith.constant 0 : index
    %c0_25 = arith.constant 0 : index
    %c0_26 = arith.constant 0 : index
    %68 = vector.load %arg7[%c0_24, %c0_25, %c0_26] : memref<1x32x32xbf16, #tpu.memory_space<vmem>>, vector<1x32x32xbf16>
    %69 = vector.shape_cast %68 : vector<1x32x32xbf16> to vector<32x32xbf16>
    %cst_27 = arith.constant dense<0.000000e+00> : vector<8x32xf32>
    %70 = tpu.matmul %67, %69, %cst_27 {dimension_numbers = #tpu.dot_dimension_numbers<[1], [0], [0], [1], [0, 0, 1, 1], [], []>} : vector<8x32xbf16>, vector<32x32xbf16>, vector<8x32xf32> -> vector<8x32xf32>
    %c0_28 = arith.constant 0 : index
    %c0_29 = arith.constant 0 : index
    %c0_30 = arith.constant 0 : index
    %71 = vector.load %arg8[%c0_28, %c0_29, %c0_30] : memref<1x1x32xf32, #tpu.memory_space<vmem>>, vector<1x1x32xf32>
    %72 = vector.shape_cast %71 : vector<1x1x32xf32> to vector<1x32xf32>
    %73 = vector.broadcast %72 : vector<1x32xf32> to vector<8x32xf32>
    %74 = arith.addf %70, %73 : vector<8x32xf32>
    %75 = arith.addf %3, %74 : vector<8x32xf32>
    %c0_31 = arith.constant 0 : index
    %c0_32 = arith.constant 0 : index
    %c0_33 = arith.constant 0 : index
    %76 = vector.load %arg9[%c0_31, %c0_32, %c0_33] : memref<1x1x32xf32, #tpu.memory_space<vmem>>, vector<1x1x32xf32>
    %77 = vector.shape_cast %76 : vector<1x1x32xf32> to vector<1x32xf32>
    %c0_34 = arith.constant 0 : index
    %c0_35 = arith.constant 0 : index
    %c0_36 = arith.constant 0 : index
    %78 = vector.load %arg10[%c0_34, %c0_35, %c0_36] : memref<1x1x32xf32, #tpu.memory_space<vmem>>, vector<1x1x32xf32>
    %79 = vector.shape_cast %78 : vector<1x1x32xf32> to vector<1x32xf32>
    %cst_37 = arith.constant dense<0.000000e+00> : vector<8xf32>
    %80 = vector.multi_reduction <add>, %75, %cst_37 [1] : vector<8x32xf32> to vector<8xf32>
    %81 = vector.shape_cast %80 : vector<8xf32> to vector<8x1xf32>
    %cst_38 = arith.constant 3.200000e+01 : f32
    %82 = vector.broadcast %cst_38 : f32 to vector<8x1xf32>
    %83 = arith.divf %81, %82 : vector<8x1xf32>
    %84 = vector.broadcast %83 : vector<8x1xf32> to vector<8x32xf32>
    %85 = arith.subf %75, %84 : vector<8x32xf32>
    %86 = arith.mulf %85, %85 : vector<8x32xf32>
    %cst_39 = arith.constant dense<0.000000e+00> : vector<8xf32>
    %87 = vector.multi_reduction <add>, %86, %cst_39 [1] : vector<8x32xf32> to vector<8xf32>
    %88 = vector.shape_cast %87 : vector<8xf32> to vector<8x1xf32>
    %cst_40 = arith.constant 3.200000e+01 : f32
    %89 = vector.broadcast %cst_40 : f32 to vector<8x1xf32>
    %90 = arith.divf %88, %89 : vector<8x1xf32>
    %91 = vector.broadcast %83 : vector<8x1xf32> to vector<8x32xf32>
    %92 = arith.subf %75, %91 : vector<8x32xf32>
    %cst_41 = arith.constant 9.99999974E-6 : f32
    %93 = vector.broadcast %cst_41 : f32 to vector<8x1xf32>
    %94 = arith.addf %90, %93 : vector<8x1xf32>
    %95 = math.rsqrt %94 : vector<8x1xf32>
    %96 = vector.broadcast %95 : vector<8x1xf32> to vector<8x32xf32>
    %97 = arith.mulf %92, %96 : vector<8x32xf32>
    %98 = vector.broadcast %77 : vector<1x32xf32> to vector<8x32xf32>
    %99 = arith.mulf %97, %98 : vector<8x32xf32>
    %100 = vector.broadcast %79 : vector<1x32xf32> to vector<8x32xf32>
    %101 = arith.addf %99, %100 : vector<8x32xf32>
    %102 = arith.truncf %101 : vector<8x32xf32> to vector<8x32xbf16>
    %c0_42 = arith.constant 0 : index
    %c0_43 = arith.constant 0 : index
    %c0_44 = arith.constant 0 : index
    %103 = vector.load %arg11[%c0_42, %c0_43, %c0_44] : memref<1x32x256xbf16, #tpu.memory_space<vmem>>, vector<1x32x256xbf16>
    %104 = vector.shape_cast %103 : vector<1x32x256xbf16> to vector<32x256xbf16>
    %cst_45 = arith.constant dense<0.000000e+00> : vector<8x256xf32>
    %105 = tpu.matmul %102, %104, %cst_45 {dimension_numbers = #tpu.dot_dimension_numbers<[1], [0], [0], [1], [0, 0, 1, 1], [], []>} : vector<8x32xbf16>, vector<32x256xbf16>, vector<8x256xf32> -> vector<8x256xf32>
    %c0_46 = arith.constant 0 : index
    %c0_47 = arith.constant 0 : index
    %c0_48 = arith.constant 0 : index
    %106 = vector.load %arg12[%c0_46, %c0_47, %c0_48] : memref<1x1x256xf32, #tpu.memory_space<vmem>>, vector<1x1x256xf32>
    %107 = vector.shape_cast %106 : vector<1x1x256xf32> to vector<1x256xf32>
    %108 = vector.broadcast %107 : vector<1x256xf32> to vector<8x256xf32>
    %109 = arith.addf %105, %108 : vector<8x256xf32>
    %110 = vector.extract_strided_slice %109 {offsets = [0, 0], sizes = [8, 128], strides = [1, 1]} : vector<8x256xf32> to vector<8x128xf32>
    %111 = vector.extract_strided_slice %109 {offsets = [0, 128], sizes = [8, 128], strides = [1, 1]} : vector<8x256xf32> to vector<8x128xf32>
    %112 = arith.mulf %110, %111 : vector<8x128xf32>
    %113 = arith.truncf %112 : vector<8x128xf32> to vector<8x128xbf16>
    %c0_49 = arith.constant 0 : index
    %c0_50 = arith.constant 0 : index
    %c0_51 = arith.constant 0 : index
    %114 = vector.load %arg13[%c0_49, %c0_50, %c0_51] : memref<1x128x32xbf16, #tpu.memory_space<vmem>>, vector<1x128x32xbf16>
    %115 = vector.shape_cast %114 : vector<1x128x32xbf16> to vector<128x32xbf16>
    %cst_52 = arith.constant dense<0.000000e+00> : vector<8x32xf32>
    %116 = tpu.matmul %113, %115, %cst_52 {dimension_numbers = #tpu.dot_dimension_numbers<[1], [0], [0], [1], [0, 0, 1, 1], [], []>} : vector<8x128xbf16>, vector<128x32xbf16>, vector<8x32xf32> -> vector<8x32xf32>
    %c0_53 = arith.constant 0 : index
    %c0_54 = arith.constant 0 : index
    %c0_55 = arith.constant 0 : index
    %117 = vector.load %arg14[%c0_53, %c0_54, %c0_55] : memref<1x1x32xf32, #tpu.memory_space<vmem>>, vector<1x1x32xf32>
    %118 = vector.shape_cast %117 : vector<1x1x32xf32> to vector<1x32xf32>
    %119 = vector.broadcast %118 : vector<1x32xf32> to vector<8x32xf32>
    %120 = arith.addf %116, %119 : vector<8x32xf32>
    %121 = arith.addf %75, %120 : vector<8x32xf32>
    %c0_56 = arith.constant 0 : index
    %c0_57 = arith.constant 0 : index
    %122 = vector.load %arg25[%c0_56, %c0_57] : memref<8x32xf32, #tpu.memory_space<vmem>>, vector<8x32xf32>
    tpu.vector_store %arg25[%c0_56, %c0_57], %121 {strides = array<i32>} : memref<8x32xf32, #tpu.memory_space<vmem>>, vector<8x32xf32>,
    %c1_i32 = arith.constant 1 : i32
    %123 = arith.cmpi eq, %arg1, %c1_i32 : i32
    %124 = arith.extui %123 : i1 to i32
    %c0_i32_58 = arith.constant 0 : i32
    %125 = arith.cmpi ne, %124, %c0_i32_58 : i32
    scf.if %125 {
      %c0_59 = arith.constant 0 : index
      %c0_60 = arith.constant 0 : index
      %126 = vector.load %arg15[%c0_59, %c0_60] : memref<4x32xf32, #tpu.memory_space<vmem>>, vector<4x32xf32>
      %127 = arith.truncf %121 : vector<8x32xf32> to vector<8x32xbf16>
      %128 = arith.truncf %126 : vector<4x32xf32> to vector<4x32xbf16>
      %c0_61 = arith.constant 0 : index
      %c0_62 = arith.constant 0 : index
      %129 = vector.load %arg16[%c0_61, %c0_62] : memref<32x32xbf16, #tpu.memory_space<vmem>>, vector<32x32xbf16>
      %cst_63 = arith.constant dense<0.000000e+00> : vector<4x32xf32>
      %130 = tpu.matmul %128, %129, %cst_63 {dimension_numbers = #tpu.dot_dimension_numbers<[1], [0], [0], [1], [0, 0, 1, 1], [], []>} : vector<4x32xbf16>, vector<32x32xbf16>, vector<4x32xf32> -> vector<4x32xf32>
      %c0_64 = arith.constant 0 : index
      %c0_65 = arith.constant 0 : index
      %131 = vector.load %arg17[%c0_64, %c0_65] : memref<1x32xf32, #tpu.memory_space<vmem>>, vector<1x32xf32>
      %132 = vector.shape_cast %131 : vector<1x32xf32> to vector<32xf32>
      %133 = vector.shape_cast %132 : vector<32xf32> to vector<1x32xf32>
      %134 = vector.broadcast %133 : vector<1x32xf32> to vector<4x32xf32>
      %135 = arith.addf %130, %134 : vector<4x32xf32>
      %c0_66 = arith.constant 0 : index
      %c0_67 = arith.constant 0 : index
      %136 = vector.load %arg18[%c0_66, %c0_67] : memref<32x32xbf16, #tpu.memory_space<vmem>>, vector<32x32xbf16>
      %cst_68 = arith.constant dense<0.000000e+00> : vector<8x32xf32>
      %137 = tpu.matmul %127, %136, %cst_68 {dimension_numbers = #tpu.dot_dimension_numbers<[1], [0], [0], [1], [0, 0, 1, 1], [], []>} : vector<8x32xbf16>, vector<32x32xbf16>, vector<8x32xf32> -> vector<8x32xf32>
      %c0_69 = arith.constant 0 : index
      %c0_70 = arith.constant 0 : index
      %138 = vector.load %arg19[%c0_69, %c0_70] : memref<1x32xf32, #tpu.memory_space<vmem>>, vector<1x32xf32>
      %139 = vector.shape_cast %138 : vector<1x32xf32> to vector<32xf32>
      %140 = vector.shape_cast %139 : vector<32xf32> to vector<1x32xf32>
      %141 = vector.broadcast %140 : vector<1x32xf32> to vector<8x32xf32>
      %142 = arith.addf %137, %141 : vector<8x32xf32>
      %c0_71 = arith.constant 0 : index
      %c0_72 = arith.constant 0 : index
      %143 = vector.load %arg20[%c0_71, %c0_72] : memref<32x32xbf16, #tpu.memory_space<vmem>>, vector<32x32xbf16>
      %cst_73 = arith.constant dense<0.000000e+00> : vector<8x32xf32>
      %144 = tpu.matmul %127, %143, %cst_73 {dimension_numbers = #tpu.dot_dimension_numbers<[1], [0], [0], [1], [0, 0, 1, 1], [], []>} : vector<8x32xbf16>, vector<32x32xbf16>, vector<8x32xf32> -> vector<8x32xf32>
      %c0_74 = arith.constant 0 : index
      %c0_75 = arith.constant 0 : index
      %145 = vector.load %arg21[%c0_74, %c0_75] : memref<1x32xf32, #tpu.memory_space<vmem>>, vector<1x32xf32>
      %146 = vector.shape_cast %145 : vector<1x32xf32> to vector<32xf32>
      %147 = vector.shape_cast %146 : vector<32xf32> to vector<1x32xf32>
      %148 = vector.broadcast %147 : vector<1x32xf32> to vector<8x32xf32>
      %149 = arith.addf %144, %148 : vector<8x32xf32>
      %150 = vector.shape_cast %135 : vector<4x32xf32> to vector<4x4x8xf32>
      %151 = tpu.transpose %150, [1, 0, 2] : vector<4x4x8xf32> -> vector<4x4x8xf32>
      %152 = arith.truncf %151 : vector<4x4x8xf32> to vector<4x4x8xbf16>
      %153 = vector.shape_cast %142 : vector<8x32xf32> to vector<8x4x8xf32>
      %154 = tpu.transpose %153, [1, 0, 2] : vector<8x4x8xf32> -> vector<4x8x8xf32>
      %155 = arith.truncf %154 : vector<4x8x8xf32> to vector<4x8x8xbf16>
      %156 = vector.shape_cast %149 : vector<8x32xf32> to vector<8x4x8xf32>
      %157 = tpu.transpose %156, [1, 0, 2] : vector<8x4x8xf32> -> vector<4x8x8xf32>
      %158 = arith.truncf %157 : vector<4x8x8xf32> to vector<4x8x8xbf16>
      "tpu.trace_start"() <{level = 10 : i32, message = "hqd,hkd->hqk"}> : () -> ()
      %cst_76 = arith.constant dense<0.000000e+00> : vector<4x4x8xf32>
      %159 = tpu.matmul %152, %155, %cst_76 {dimension_numbers = #tpu.dot_dimension_numbers<[2], [2], [1], [1], [0, 0, 0, 1, 1, 1], [0], [0]>} : vector<4x4x8xbf16>, vector<4x8x8xbf16>, vector<4x4x8xf32> -> vector<4x4x8xf32>
      "tpu.trace_stop"() : () -> ()
      %cst_77 = arith.constant 0.353553385 : f32
      %160 = vector.broadcast %cst_77 : f32 to vector<4x4x8xf32>
      %161 = arith.mulf %159, %160 : vector<4x4x8xf32>
      %cst_78 = arith.constant dense<0xFF800000> : vector<4x4xf32>
      %162 = vector.multi_reduction <maximumf>, %161, %cst_78 [2] : vector<4x4x8xf32> to vector<4x4xf32>
      %163 = vector.shape_cast %162 : vector<4x4xf32> to vector<4x4x1xf32>
      %164 = vector.broadcast %163 : vector<4x4x1xf32> to vector<4x4x8xf32>
      %165 = arith.subf %161, %164 : vector<4x4x8xf32>
      %166 = math.exp %165 : vector<4x4x8xf32>
      %cst_79 = arith.constant dense<0.000000e+00> : vector<4x4xf32>
      %167 = vector.multi_reduction <add>, %166, %cst_79 [2] : vector<4x4x8xf32> to vector<4x4xf32>
      %168 = vector.shape_cast %167 : vector<4x4xf32> to vector<4x4x1xf32>
      %169 = tpu.reciprocal %168 {approx = true} : vector<4x4x1xf32> -> vector<4x4x1xf32>
      %170 = vector.broadcast %169 : vector<4x4x1xf32> to vector<4x4x8xf32>
      %171 = arith.mulf %166, %170 : vector<4x4x8xf32>
      %172 = arith.truncf %171 : vector<4x4x8xf32> to vector<4x4x8xbf16>
      "tpu.trace_start"() <{level = 10 : i32, message = "hqk,hkd->hqd"}> : () -> ()
      %cst_80 = arith.constant dense<0.000000e+00> : vector<4x4x8xf32>
      %173 = tpu.matmul %172, %158, %cst_80 {dimension_numbers = #tpu.dot_dimension_numbers<[2], [1], [1], [2], [0, 0, 0, 1, 1, 2], [0], [0]>} : vector<4x4x8xbf16>, vector<4x8x8xbf16>, vector<4x4x8xf32> -> vector<4x4x8xf32>
      "tpu.trace_stop"() : () -> ()
      %174 = tpu.transpose %173, [1, 0, 2] : vector<4x4x8xf32> -> vector<4x4x8xf32>
      %175 = vector.shape_cast %174 : vector<4x4x8xf32> to vector<4x32xf32>
      %176 = arith.truncf %175 : vector<4x32xf32> to vector<4x32xbf16>
      %c0_81 = arith.constant 0 : index
      %c0_82 = arith.constant 0 : index
      %177 = vector.load %arg22[%c0_81, %c0_82] : memref<32x32xbf16, #tpu.memory_space<vmem>>, vector<32x32xbf16>
      %cst_83 = arith.constant dense<0.000000e+00> : vector<4x32xf32>
      %178 = tpu.matmul %176, %177, %cst_83 {dimension_numbers = #tpu.dot_dimension_numbers<[1], [0], [0], [1], [0, 0, 1, 1], [], []>} : vector<4x32xbf16>, vector<32x32xbf16>, vector<4x32xf32> -> vector<4x32xf32>
      %c0_84 = arith.constant 0 : index
      %c0_85 = arith.constant 0 : index
      %179 = vector.load %arg23[%c0_84, %c0_85] : memref<1x32xf32, #tpu.memory_space<vmem>>, vector<1x32xf32>
      %180 = vector.shape_cast %179 : vector<1x32xf32> to vector<32xf32>
      %181 = vector.shape_cast %180 : vector<32xf32> to vector<1x32xf32>
      %182 = vector.broadcast %181 : vector<1x32xf32> to vector<4x32xf32>
      %183 = arith.addf %178, %182 : vector<4x32xf32>
      %184 = arith.addf %126, %183 : vector<4x32xf32>
      %c0_86 = arith.constant 0 : index
      %c0_87 = arith.constant 0 : index
      %c0_88 = arith.constant 0 : index
      %185 = vector.load %arg24[%c0_86, %c0_87, %c0_88] : memref<1x4x32xf32, #tpu.memory_space<vmem>>, vector<1x4x32xf32>
      %186 = vector.shape_cast %185 : vector<1x4x32xf32> to vector<4x32xf32>
      %187 = vector.shape_cast %184 : vector<4x32xf32> to vector<1x4x32xf32>
      tpu.vector_store %arg24[%c0_86, %c0_87, %c0_88], %187 {strides = array<i32>} : memref<1x4x32xf32, #tpu.memory_space<vmem>>, vector<1x4x32xf32>,
    } else {
    }
    return
  }
  func.func @transform_0(%arg0: i32, %arg1: i32) -> (i32, i32, i32) {
    %c0_i32 = arith.constant 0 : i32
    %c0_i32_0 = arith.constant 0 : i32
    %c0_i32_1 = arith.constant 0 : i32
    return %arg0, %c0_i32, %c0_i32_0 : i32, i32, i32
  }
  func.func @transform_1(%arg0: i32, %arg1: i32) -> (i32, i32, i32) {
    %c0_i32 = arith.constant 0 : i32
    %c0_i32_0 = arith.constant 0 : i32
    %c0_i32_1 = arith.constant 0 : i32
    return %arg1, %c0_i32, %c0_i32_0 : i32, i32, i32
  }
  func.func @transform_2(%arg0: i32, %arg1: i32) -> (i32, i32, i32) {
    %c0_i32 = arith.constant 0 : i32
    %c0_i32_0 = arith.constant 0 : i32
    %c0_i32_1 = arith.constant 0 : i32
    return %arg1, %c0_i32, %c0_i32_0 : i32, i32, i32
  }
  func.func @transform_3(%arg0: i32, %arg1: i32) -> (i32, i32, i32) {
    %c0_i32 = arith.constant 0 : i32
    %c0_i32_0 = arith.constant 0 : i32
    %c0_i32_1 = arith.constant 0 : i32
    return %arg1, %c0_i32, %c0_i32_0 : i32, i32, i32
  }
  func.func @transform_4(%arg0: i32, %arg1: i32) -> (i32, i32, i32) {
    %c0_i32 = arith.constant 0 : i32
    %c0_i32_0 = arith.constant 0 : i32
    %c0_i32_1 = arith.constant 0 : i32
    return %arg1, %c0_i32, %c0_i32_0 : i32, i32, i32
  }
  func.func @transform_5(%arg0: i32, %arg1: i32) -> (i32, i32, i32) {
    %c0_i32 = arith.constant 0 : i32
    %c0_i32_0 = arith.constant 0 : i32
    %c0_i32_1 = arith.constant 0 : i32
    return %arg1, %c0_i32, %c0_i32_0 : i32, i32, i32
  }
  func.func @transform_6(%arg0: i32, %arg1: i32) -> (i32, i32, i32) {
    %c0_i32 = arith.constant 0 : i32
    %c0_i32_0 = arith.constant 0 : i32
    %c0_i32_1 = arith.constant 0 : i32
    return %arg1, %c0_i32, %c0_i32_0 : i32, i32, i32
  }
  func.func @transform_7(%arg0: i32, %arg1: i32) -> (i32, i32, i32) {
    %c0_i32 = arith.constant 0 : i32
    %c0_i32_0 = arith.constant 0 : i32
    %c0_i32_1 = arith.constant 0 : i32
    return %arg1, %c0_i32, %c0_i32_0 : i32, i32, i32
  }
  func.func @transform_8(%arg0: i32, %arg1: i32) -> (i32, i32, i32) {
    %c0_i32 = arith.constant 0 : i32
    %c0_i32_0 = arith.constant 0 : i32
    %c0_i32_1 = arith.constant 0 : i32
    return %arg1, %c0_i32, %c0_i32_0 : i32, i32, i32
  }
  func.func @transform_9(%arg0: i32, %arg1: i32) -> (i32, i32, i32) {
    %c0_i32 = arith.constant 0 : i32
    %c0_i32_0 = arith.constant 0 : i32
    %c0_i32_1 = arith.constant 0 : i32
    return %arg1, %c0_i32, %c0_i32_0 : i32, i32, i32
  }
  func.func @transform_10(%arg0: i32, %arg1: i32) -> (i32, i32, i32) {
    %c0_i32 = arith.constant 0 : i32
    %c0_i32_0 = arith.constant 0 : i32
    %c0_i32_1 = arith.constant 0 : i32
    return %arg1, %c0_i32, %c0_i32_0 : i32, i32, i32
  }
  func.func @transform_11(%arg0: i32, %arg1: i32) -> (i32, i32, i32) {
    %c0_i32 = arith.constant 0 : i32
    %c0_i32_0 = arith.constant 0 : i32
    %c0_i32_1 = arith.constant 0 : i32
    return %arg1, %c0_i32, %c0_i32_0 : i32, i32, i32
  }
  func.func @transform_12(%arg0: i32, %arg1: i32) -> (i32, i32, i32) {
    %c0_i32 = arith.constant 0 : i32
    %c0_i32_0 = arith.constant 0 : i32
    %c0_i32_1 = arith.constant 0 : i32
    return %arg1, %c0_i32, %c0_i32_0 : i32, i32, i32
  }
  func.func @transform_13(%arg0: i32, %arg1: i32) -> (i32, i32) {
    %c0_i32 = arith.constant 0 : i32
    %c0_i32_0 = arith.constant 0 : i32
    %c0_i32_1 = arith.constant 0 : i32
    return %c0_i32, %c0_i32_0 : i32, i32
  }
  func.func @transform_14(%arg0: i32, %arg1: i32) -> (i32, i32) {
    %c0_i32 = arith.constant 0 : i32
    %c0_i32_0 = arith.constant 0 : i32
    %c0_i32_1 = arith.constant 0 : i32
    return %c0_i32, %c0_i32_0 : i32, i32
  }
  func.func @transform_15(%arg0: i32, %arg1: i32) -> (i32, i32) {
    %c0_i32 = arith.constant 0 : i32
    %c0_i32_0 = arith.constant 0 : i32
    %c0_i32_1 = arith.constant 0 : i32
    return %c0_i32, %c0_i32_0 : i32, i32
  }
  func.func @transform_16(%arg0: i32, %arg1: i32) -> (i32, i32) {
    %c0_i32 = arith.constant 0 : i32
    %c0_i32_0 = arith.constant 0 : i32
    %c0_i32_1 = arith.constant 0 : i32
    return %c0_i32, %c0_i32_0 : i32, i32
  }
  func.func @transform_17(%arg0: i32, %arg1: i32) -> (i32, i32) {
    %c0_i32 = arith.constant 0 : i32
    %c0_i32_0 = arith.constant 0 : i32
    %c0_i32_1 = arith.constant 0 : i32
    return %c0_i32, %c0_i32_0 : i32, i32
  }
  func.func @transform_18(%arg0: i32, %arg1: i32) -> (i32, i32) {
    %c0_i32 = arith.constant 0 : i32
    %c0_i32_0 = arith.constant 0 : i32
    %c0_i32_1 = arith.constant 0 : i32
    return %c0_i32, %c0_i32_0 : i32, i32
  }
  func.func @transform_19(%arg0: i32, %arg1: i32) -> (i32, i32) {
    %c0_i32 = arith.constant 0 : i32
    %c0_i32_0 = arith.constant 0 : i32
    %c0_i32_1 = arith.constant 0 : i32
    return %c0_i32, %c0_i32_0 : i32, i32
  }
  func.func @transform_20(%arg0: i32, %arg1: i32) -> (i32, i32) {
    %c0_i32 = arith.constant 0 : i32
    %c0_i32_0 = arith.constant 0 : i32
    %c0_i32_1 = arith.constant 0 : i32
    return %c0_i32, %c0_i32_0 : i32, i32
  }
  func.func @transform_21(%arg0: i32, %arg1: i32) -> (i32, i32) {
    %c0_i32 = arith.constant 0 : i32
    %c0_i32_0 = arith.constant 0 : i32
    %c0_i32_1 = arith.constant 0 : i32
    return %c0_i32, %c0_i32_0 : i32, i32
  }
  func.func @transform_22(%arg0: i32, %arg1: i32) -> (i32, i32, i32) {
    %c0_i32 = arith.constant 0 : i32
    %c0_i32_0 = arith.constant 0 : i32
    %c0_i32_1 = arith.constant 0 : i32
    return %arg0, %c0_i32, %c0_i32_0 : i32, i32, i32
  }
}

</mosaic_0001>

<llo_original>
// kernel: tpu_custom_call.1
$region0: #{tpu_custom_call.1}
  #allocation0 [shape = 'u32[]', space=smem, size = 0x4, offset = 0x4, fixed_abs, tag = 'smem constant byte address 0x4 - core index']
  #allocation1 [shape = 'u32[72,128]{1,0:T(1,128)}', space=vmem, size = 0x9000, scoped, tag = 'internal scratch']
  #allocation2 [shape = 'f32[8,32]{1,0:T(8,128)}', space=vmem, size = 0x1000, scoped, tag = 'scratch operand']
  %s0 = inlined_call_operand.vmem [shape: f32[2,8,32], index: 0, kind: input, shape index: {}]
  %s1 = inlined_call_operand.hbm [shape: f32[2,1,32], index: 1, kind: input, shape index: {}]
  %s2 = inlined_call_operand.hbm [shape: f32[2,1,32], index: 2, kind: input, shape index: {}]
  %s3 = inlined_call_operand.vmem [shape: bf16[2,32,96], index: 3, kind: input, shape index: {}]
  %s4 = inlined_call_operand.hbm [shape: f32[2,1,96], index: 4, kind: input, shape index: {}]
  %s5 = inlined_call_operand.vmem [shape: bf16[2,32,32], index: 5, kind: input, shape index: {}]
  %s6 = inlined_call_operand.hbm [shape: f32[2,1,32], index: 6, kind: input, shape index: {}]
  %s7 = inlined_call_operand.hbm [shape: f32[2,1,32], index: 7, kind: input, shape index: {}]
  %s8 = inlined_call_operand.hbm [shape: f32[2,1,32], index: 8, kind: input, shape index: {}]
  %s9 = inlined_call_operand.vmem [shape: bf16[2,32,256], index: 9, kind: input, shape index: {}]
  %s10 = inlined_call_operand.hbm [shape: f32[2,1,256], index: 10, kind: input, shape index: {}]
  %s11 = inlined_call_operand.vmem [shape: bf16[2,128,32], index: 11, kind: input, shape index: {}]
  %s12 = inlined_call_operand.hbm [shape: f32[2,1,32], index: 12, kind: input, shape index: {}]
  %s13 = inlined_call_operand.hbm [shape: f32[4,32], index: 13, kind: input, shape index: {}]
  %s14 = inlined_call_operand.vmem [shape: bf16[32,32], index: 14, kind: input, shape index: {}]
  %s15 = inlined_call_operand.vmem [shape: f32[1,32], index: 15, kind: input, shape index: {}]
  %s16 = inlined_call_operand.hbm [shape: bf16[32,32], index: 16, kind: input, shape index: {}]
  %s17 = inlined_call_operand.hbm [shape: f32[1,32], index: 17, kind: input, shape index: {}]
  %s18 = inlined_call_operand.vmem [shape: bf16[32,32], index: 18, kind: input, shape index: {}]
  %s19 = inlined_call_operand.hbm [shape: f32[1,32], index: 19, kind: input, shape index: {}]
  %s20 = inlined_call_operand.hbm [shape: bf16[32,32], index: 20, kind: input, shape index: {}]
  %s21 = inlined_call_operand.vmem [shape: f32[1,32], index: 21, kind: input, shape index: {}]
  %s22 = inlined_call_operand.hbm [shape: f32[2,4,32], index: 22, kind: output, shape index: {}]
  %s23 = sld [smem:[#allocation0]]
  $region181: #{tpu_custom_call.1} parent=0
    _
  %s25 = ssub.s32 1, %s23
  %s26 = scalar_select 0, %s25, %s23
  $region1: #{tpu_custom_call.1} parent=0
    #allocation3 [shape = 'u8[1024]{0}', space=vmem, size = 0x400, scoped, tag = 'input window, operand 1']
    #allocation4 [shape = 's32[2]{0}', space=sflag, size = 0x8, scoped, tag = 'scoped memory for tpu_custom_call.1']
    #allocation5 [shape = 's32[2]{0}', space=sflag, size = 0x8, scoped, tag = 'scoped memory for tpu_custom_call.1']
    #allocation6 [shape = 'u8[1024]{0}', space=vmem, size = 0x400, scoped, tag = 'input window, operand 2']
    #allocation7 [shape = 's32[2]{0}', space=sflag, size = 0x8, scoped, tag = 'scoped memory for tpu_custom_call.1']
    #allocation8 [shape = 'u8[1024]{0}', space=vmem, size = 0x400, scoped, tag = 'input window, operand 4']
    #allocation9 [shape = 'u8[1024]{0}', space=vmem, size = 0x400, scoped, tag = 'input window, operand 6']
    #allocation10 [shape = 's32[2]{0}', space=sflag, size = 0x8, scoped, tag = 'scoped memory for tpu_custom_call.1']
    #allocation11 [shape = 'u8[1024]{0}', space=vmem, size = 0x400, scoped, tag = 'input window, operand 7']
    #allocation12 [shape = 'u8[1024]{0}', space=vmem, size = 0x400, scoped, tag = 'input window, operand 8']
    #allocation13 [shape = 's32[2]{0}', space=sflag, size = 0x8, scoped, tag = 'scoped memory for tpu_custom_call.1']
    #allocation14 [shape = 'u8[2048]{0}', space=vmem, size = 0x800, scoped, tag = 'input window, operand 10']
    #allocation15 [shape = 'u8[1024]{0}', space=vmem, size = 0x400, scoped, tag = 'input window, operand 12']
    #allocation16 [shape = 's32[2]{0}', space=sflag, size = 0x8, scoped, tag = 'scoped memory for tpu_custom_call.1']
    #allocation17 [shape = 'u8[2048]{0}', space=vmem, size = 0x800, scoped, tag = 'input window, operand 13, single buffered']
    #allocation18 [shape = 'u8[8192]{0}', space=vmem, size = 0x2000, scoped, tag = 'input window, operand 16, single buffered']
    #allocation19 [shape = 's32[1]{0}', space=sflag, size = 0x4, scoped, tag = 'scoped memory for tpu_custom_call.1']
    #allocation20 [shape = 'u8[512]{0}', space=vmem, size = 0x400, scoped, tag = 'input window, operand 17, single buffered']
    #allocation21 [shape = 'u8[512]{0}', space=vmem, size = 0x400, scoped, tag = 'input window, operand 19, single buffered']
    #allocation22 [shape = 's32[1]{0}', space=sflag, size = 0x4, scoped, tag = 'scoped memory for tpu_custom_call.1']
    #allocation23 [shape = 'u8[8192]{0}', space=vmem, size = 0x2000, scoped, tag = 'input window, operand 20, single buffered']
    #allocation24 [shape = 'u8[4096]{0}', space=vmem, size = 0x1000, scoped, tag = 'output window, operand 0']
    %27 = vsyncpa [#allocation4], 0
    %s28 = scalar_lea.sflag [#allocation4], 1
    %29 = vsyncpa %s28, 0
    %30 = vsyncpa [#allocation7], 0
    %s31 = scalar_lea.sflag [#allocation7], 1
    %32 = vsyncpa %s31, 0
    %33 = vsyncpa [#allocation10], 0
    %s34 = scalar_lea.sflag [#allocation10], 1
    %35 = vsyncpa %s34, 0
    %36 = vsyncpa [#allocation13], 0
    %s37 = scalar_lea.sflag [#allocation13], 1
    %38 = vsyncpa %s37, 0
    %39 = vsyncpa [#allocation16], 0
    %s40 = scalar_lea.sflag [#allocation16], 1
    %41 = vsyncpa %s40, 0
    %42 = vsyncpa [#allocation19], 0
    %43 = vsyncpa [#allocation22], 0
    %44 = vsyncpa [#allocation5], 0
    %s45 = scalar_lea.sflag [#allocation5], 1
    %46 = vsyncpa %s45, 0
    loop: start=0, step=1, limit=6
    $region2: #{tpu_custom_call.1} parent=1 // loop_pre_header
      _
    $region3: #{tpu_custom_call.1} parent=1 // loop_header
      %s48 = sphi 0, %s52
      %p49 = scmp.ge.s32.totalorder %s48, 6
      %s55 = sphi 0, %s67
      %s56 = sphi 0, %s63
      %s57 = sphi 0, %s55
      %s58 = sphi 0, %s56
      %s59 = sphi 0, %s57
      %s60 = sphi 0, %s58
      %s70 = sphi 0, %s72
      %s73 = sphi 0, %s70
      %s74 = sphi 0, %s73
      %s90 = sphi 0, %s74
      %s96 = sphi 0, %s98
      %s99 = sphi 0, %s96
      %s100 = sphi 0, %s99
      %s116 = sphi 0, %s100
      %s122 = sphi 0, %s124
      %s125 = sphi 0, %s122
      %s126 = sphi 0, %s125
      %s142 = sphi 0, %s126
      %s148 = sphi 0, %s150
      %s151 = sphi 0, %s148
      %s152 = sphi 0, %s151
      %s168 = sphi 0, %s152
      %s174 = sphi 0, %s176
      %s177 = sphi 0, %s174
      %s178 = sphi 0, %s177
      %s194 = sphi 0, %s178
      %s200 = sphi 0, %s202
      %s203 = sphi 0, %s200
      %s204 = sphi 0, %s203
      %s220 = sphi 0, %s204
      %s226 = sphi 0, %s228
      %s229 = sphi 0, %s226
      %s230 = sphi 0, %s229
      %s246 = sphi 0, %s230
      %s252 = sphi 0, %s254
      %s255 = sphi 0, %s252
      %s256 = sphi 0, %s255
      %s272 = sphi 0, %s256
      %s278 = sphi 0, %s280
      %s281 = sphi 0, %s278
      %s282 = sphi 0, %s281
      %s298 = sphi 0, %s282
      %s304 = sphi 0, %s306
      %s307 = sphi 0, %s304
      %s308 = sphi 0, %s307
      %s324 = sphi 0, %s308
      %s330 = sphi 0, %s332
      %s333 = sphi 0, %s330
      %s334 = sphi 0, %s333
      %s350 = sphi 0, %s334
      %s356 = sphi 0, %s358
      %s359 = sphi 0, %s356
      %s360 = sphi 0, %s359
      %s376 = sphi 0, %s360
      %s382 = sphi 0, %s384
      %s385 = sphi 0, %s382
      %s386 = sphi 0, %s385
      %s402 = sphi 0, %s386
      %s406 = sphi 0, %s406
      %s408 = sphi 0, %s406
      %s409 = sphi 0, %s408
      %s423 = sphi 0, %s409
      %s427 = sphi 0, %s427
      %s429 = sphi 0, %s427
      %s430 = sphi 0, %s429
      %s444 = sphi 0, %s430
      %s448 = sphi 0, %s448
      %s450 = sphi 0, %s448
      %s451 = sphi 0, %s450
      %s465 = sphi 0, %s451
      %s469 = sphi 0, %s469
      %s471 = sphi 0, %s469
      %s472 = sphi 0, %s471
      %s486 = sphi 0, %s472
      %s490 = sphi 0, %s490
      %s492 = sphi 0, %s490
      %s493 = sphi 0, %s492
      %s507 = sphi 0, %s493
      %s511 = sphi 0, %s511
      %s513 = sphi 0, %s511
      %s514 = sphi 0, %s513
      %s528 = sphi 0, %s514
      %s532 = sphi 0, %s532
      %s534 = sphi 0, %s532
      %s535 = sphi 0, %s534
      %s549 = sphi 0, %s535
      %s553 = sphi 0, %s553
      %s555 = sphi 0, %s553
      %s556 = sphi 0, %s555
      %s570 = sphi 0, %s556
      %s574 = sphi 0, %s574
      %s576 = sphi 0, %s574
      %s577 = sphi 0, %s576
      %s591 = sphi 0, %s577
      %s597 = sphi 0, %s599
      %s600 = sphi 0, %s597
      %s601 = sphi 0, %s600
      %s617 = sphi 0, %s601
    $region4: #{tpu_custom_call.1} parent=1 // loop_header_branch
      %51 = sbr.rel (%p49) target = $region8
    $region5: #{tpu_custom_call.1} parent=1 // loop_body
      %s53 = ssub.s32 %s48, 1
      %s54 = ssub.s32 %s48, 2
      %s61 = sadd.s32 1, %s56
      %p62 = scmp.ge.s32.totalorder %s61, 2
      %s63 = scalar_select %p62, 0, %s61
      %s64 = sadd.s32 1, %s55
      %s65 = scalar_select %p62, %s64, %s55
      %p66 = scmp.ge.s32.totalorder %s65, 2
      %s67 = scalar_select %p66, 0, %s65
      %s68 = ssub.s32 %s55, %s67
      %p69 = scmp.eq.s32.totalorder %s68, 0
      %s71 = sadd.s32 %s70, 1
      %s72 = scalar_select %p69, %s70, %s71
      %p75 = pneg %p69
      %p76 = scmp.eq.s32.totalorder %s48, 3
      %p77 = por %p75, %p76
      %p78 = scmp.ne.s32.totalorder %s70, %s73
      %p79 = scmp.eq.s32.totalorder %s48, 0
      %p80 = por %p78, %p79
      %p81 = scmp.ne.s32.totalorder %s70, %s73
      %p82 = scmp.eq.s32.totalorder %s53, 3
      %p83 = por %p81, %p82
      %p84 = scmp.ne.s32.totalorder %s73, %s74
      %p85 = scmp.eq.s32.totalorder %s53, 0
      %p86 = por %p84, %p85
      %p87 = scmp.ne.s32.totalorder %s73, %s74
      %p88 = scmp.eq.s32.totalorder %s54, 3
      %p89 = por %p87, %p88
      %p91 = scmp.ne.s32.totalorder %s74, %s90
      %p92 = scmp.eq.s32.totalorder %s54, 0
      %p93 = por %p91, %p92
      %s94 = ssub.s32 %s56, %s63
      %p95 = scmp.eq.s32.totalorder %s94, 0
      %s97 = sadd.s32 %s96, 1
      %s98 = scalar_select %p95, %s96, %s97
      %p101 = pneg %p95
      %p102 = scmp.eq.s32.totalorder %s48, 3
      %p103 = por %p101, %p102
      %p104 = scmp.ne.s32.totalorder %s96, %s99
      %p105 = scmp.eq.s32.totalorder %s48, 0
      %p106 = por %p104, %p105
      %p107 = scmp.ne.s32.totalorder %s96, %s99
      %p108 = scmp.eq.s32.totalorder %s53, 3
      %p109 = por %p107, %p108
      %p110 = scmp.ne.s32.totalorder %s99, %s100
      %p111 = scmp.eq.s32.totalorder %s53, 0
      %p112 = por %p110, %p111
      %p113 = scmp.ne.s32.totalorder %s99, %s100
      %p114 = scmp.eq.s32.totalorder %s54, 3
      %p115 = por %p113, %p114
      %p117 = scmp.ne.s32.totalorder %s100, %s116
      %p118 = scmp.eq.s32.totalorder %s54, 0
      %p119 = por %p117, %p118
      %s120 = ssub.s32 %s56, %s63
      %p121 = scmp.eq.s32.totalorder %s120, 0
      %s123 = sadd.s32 %s122, 1
      %s124 = scalar_select %p121, %s122, %s123
      %p127 = pneg %p121
      %p128 = scmp.eq.s32.totalorder %s48, 3
      %p129 = por %p127, %p128
      %p130 = scmp.ne.s32.totalorder %s122, %s125
      %p131 = scmp.eq.s32.totalorder %s48, 0
      %p132 = por %p130, %p131
      %p133 = scmp.ne.s32.totalorder %s122, %s125
      %p134 = scmp.eq.s32.totalorder %s53, 3
      %p135 = por %p133, %p134
      %p136 = scmp.ne.s32.totalorder %s125, %s126
      %p137 = scmp.eq.s32.totalorder %s53, 0
      %p138 = por %p136, %p137
      %p139 = scmp.ne.s32.totalorder %s125, %s126
      %p140 = scmp.eq.s32.totalorder %s54, 3
      %p141 = por %p139, %p140
      %p143 = scmp.ne.s32.totalorder %s126, %s142
      %p144 = scmp.eq.s32.totalorder %s54, 0
      %p145 = por %p143, %p144
      %s146 = ssub.s32 %s56, %s63
      %p147 = scmp.eq.s32.totalorder %s146, 0
      %s149 = sadd.s32 %s148, 1
      %s150 = scalar_select %p147, %s148, %s149
      %p153 = pneg %p147
      %p154 = scmp.eq.s32.totalorder %s48, 3
      %p155 = por %p153, %p154
      %p156 = scmp.ne.s32.totalorder %s148, %s151
      %p157 = scmp.eq.s32.totalorder %s48, 0
      %p158 = por %p156, %p157
      %p159 = scmp.ne.s32.totalorder %s148, %s151
      %p160 = scmp.eq.s32.totalorder %s53, 3
      %p161 = por %p159, %p160
      %p162 = scmp.ne.s32.totalorder %s151, %s152
      %p163 = scmp.eq.s32.totalorder %s53, 0
      %p164 = por %p162, %p163
      %p165 = scmp.ne.s32.totalorder %s151, %s152
      %p166 = scmp.eq.s32.totalorder %s54, 3
      %p167 = por %p165, %p166
      %p169 = scmp.ne.s32.totalorder %s152, %s168
      %p170 = scmp.eq.s32.totalorder %s54, 0
      %p171 = por %p169, %p170
      %s172 = ssub.s32 %s56, %s63
      %p173 = scmp.eq.s32.totalorder %s172, 0
      %s175 = sadd.s32 %s174, 1
      %s176 = scalar_select %p173, %s174, %s175
      %p179 = pneg %p173
      %p180 = scmp.eq.s32.totalorder %s48, 3
      %p181 = por %p179, %p180
      %p182 = scmp.ne.s32.totalorder %s174, %s177
      %p183 = scmp.eq.s32.totalorder %s48, 0
      %p184 = por %p182, %p183
      %p185 = scmp.ne.s32.totalorder %s174, %s177
      %p186 = scmp.eq.s32.totalorder %s53, 3
      %p187 = por %p185, %p186
      %p188 = scmp.ne.s32.totalorder %s177, %s178
      %p189 = scmp.eq.s32.totalorder %s53, 0
      %p190 = por %p188, %p189
      %p191 = scmp.ne.s32.totalorder %s177, %s178
      %p192 = scmp.eq.s32.totalorder %s54, 3
      %p193 = por %p191, %p192
      %p195 = scmp.ne.s32.totalorder %s178, %s194
      %p196 = scmp.eq.s32.totalorder %s54, 0
      %p197 = por %p195, %p196
      %s198 = ssub.s32 %s56, %s63
      %p199 = scmp.eq.s32.totalorder %s198, 0
      %s201 = sadd.s32 %s200, 1
      %s202 = scalar_select %p199, %s200, %s201
      %p205 = pneg %p199
      %p206 = scmp.eq.s32.totalorder %s48, 3
      %p207 = por %p205, %p206
      %p208 = scmp.ne.s32.totalorder %s200, %s203
      %p209 = scmp.eq.s32.totalorder %s48, 0
      %p210 = por %p208, %p209
      %p211 = scmp.ne.s32.totalorder %s200, %s203
      %p212 = scmp.eq.s32.totalorder %s53, 3
      %p213 = por %p211, %p212
      %p214 = scmp.ne.s32.totalorder %s203, %s204
      %p215 = scmp.eq.s32.totalorder %s53, 0
      %p216 = por %p214, %p215
      %p217 = scmp.ne.s32.totalorder %s203, %s204
      %p218 = scmp.eq.s32.totalorder %s54, 3
      %p219 = por %p217, %p218
      %p221 = scmp.ne.s32.totalorder %s204, %s220
      %p222 = scmp.eq.s32.totalorder %s54, 0
      %p223 = por %p221, %p222
      %s224 = ssub.s32 %s56, %s63
      %p225 = scmp.eq.s32.totalorder %s224, 0
      %s227 = sadd.s32 %s226, 1
      %s228 = scalar_select %p225, %s226, %s227
      %p231 = pneg %p225
      %p232 = scmp.eq.s32.totalorder %s48, 3
      %p233 = por %p231, %p232
      %p234 = scmp.ne.s32.totalorder %s226, %s229
      %p235 = scmp.eq.s32.totalorder %s48, 0
      %p236 = por %p234, %p235
      %p237 = scmp.ne.s32.totalorder %s226, %s229
      %p238 = scmp.eq.s32.totalorder %s53, 3
      %p239 = por %p237, %p238
      %p240 = scmp.ne.s32.totalorder %s229, %s230
      %p241 = scmp.eq.s32.totalorder %s53, 0
      %p242 = por %p240, %p241
      %p243 = scmp.ne.s32.totalorder %s229, %s230
      %p244 = scmp.eq.s32.totalorder %s54, 3
      %p245 = por %p243, %p244
      %p247 = scmp.ne.s32.totalorder %s230, %s246
      %p248 = scmp.eq.s32.totalorder %s54, 0
      %p249 = por %p247, %p248
      %s250 = ssub.s32 %s56, %s63
      %p251 = scmp.eq.s32.totalorder %s250, 0
      %s253 = sadd.s32 %s252, 1
      %s254 = scalar_select %p251, %s252, %s253
      %p257 = pneg %p251
      %p258 = scmp.eq.s32.totalorder %s48, 3
      %p259 = por %p257, %p258
      %p260 = scmp.ne.s32.totalorder %s252, %s255
      %p261 = scmp.eq.s32.totalorder %s48, 0
      %p262 = por %p260, %p261
      %p263 = scmp.ne.s32.totalorder %s252, %s255
      %p264 = scmp.eq.s32.totalorder %s53, 3
      %p265 = por %p263, %p264
      %p266 = scmp.ne.s32.totalorder %s255, %s256
      %p267 = scmp.eq.s32.totalorder %s53, 0
      %p268 = por %p266, %p267
      %p269 = scmp.ne.s32.totalorder %s255, %s256
      %p270 = scmp.eq.s32.totalorder %s54, 3
      %p271 = por %p269, %p270
      %p273 = scmp.ne.s32.totalorder %s256, %s272
      %p274 = scmp.eq.s32.totalorder %s54, 0
      %p275 = por %p273, %p274
      %s276 = ssub.s32 %s56, %s63
      %p277 = scmp.eq.s32.totalorder %s276, 0
      %s279 = sadd.s32 %s278, 1
      %s280 = scalar_select %p277, %s278, %s279
      %p283 = pneg %p277
      %p284 = scmp.eq.s32.totalorder %s48, 3
      %p285 = por %p283, %p284
      %p286 = scmp.ne.s32.totalorder %s278, %s281
      %p287 = scmp.eq.s32.totalorder %s48, 0
      %p288 = por %p286, %p287
      %p289 = scmp.ne.s32.totalorder %s278, %s281
      %p290 = scmp.eq.s32.totalorder %s53, 3
      %p291 = por %p289, %p290
      %p292 = scmp.ne.s32.totalorder %s281, %s282
      %p293 = scmp.eq.s32.totalorder %s53, 0
      %p294 = por %p292, %p293
      %p295 = scmp.ne.s32.totalorder %s281, %s282
      %p296 = scmp.eq.s32.totalorder %s54, 3
      %p297 = por %p295, %p296
      %p299 = scmp.ne.s32.totalorder %s282, %s298
      %p300 = scmp.eq.s32.totalorder %s54, 0
      %p301 = por %p299, %p300
      %s302 = ssub.s32 %s56, %s63
      %p303 = scmp.eq.s32.totalorder %s302, 0
      %s305 = sadd.s32 %s304, 1
      %s306 = scalar_select %p303, %s304, %s305
      %p309 = pneg %p303
      %p310 = scmp.eq.s32.totalorder %s48, 3
      %p311 = por %p309, %p310
      %p312 = scmp.ne.s32.totalorder %s304, %s307
      %p313 = scmp.eq.s32.totalorder %s48, 0
      %p314 = por %p312, %p313
      %p315 = scmp.ne.s32.totalorder %s304, %s307
      %p316 = scmp.eq.s32.totalorder %s53, 3
      %p317 = por %p315, %p316
      %p318 = scmp.ne.s32.totalorder %s307, %s308
      %p319 = scmp.eq.s32.totalorder %s53, 0
      %p320 = por %p318, %p319
      %p321 = scmp.ne.s32.totalorder %s307, %s308
      %p322 = scmp.eq.s32.totalorder %s54, 3
      %p323 = por %p321, %p322
      %p325 = scmp.ne.s32.totalorder %s308, %s324
      %p326 = scmp.eq.s32.totalorder %s54, 0
      %p327 = por %p325, %p326
      %s328 = ssub.s32 %s56, %s63
      %p329 = scmp.eq.s32.totalorder %s328, 0
      %s331 = sadd.s32 %s330, 1
      %s332 = scalar_select %p329, %s330, %s331
      %p335 = pneg %p329
      %p336 = scmp.eq.s32.totalorder %s48, 3
      %p337 = por %p335, %p336
      %p338 = scmp.ne.s32.totalorder %s330, %s333
      %p339 = scmp.eq.s32.totalorder %s48, 0
      %p340 = por %p338, %p339
      %p341 = scmp.ne.s32.totalorder %s330, %s333
      %p342 = scmp.eq.s32.totalorder %s53, 3
      %p343 = por %p341, %p342
      %p344 = scmp.ne.s32.totalorder %s333, %s334
      %p345 = scmp.eq.s32.totalorder %s53, 0
      %p346 = por %p344, %p345
      %p347 = scmp.ne.s32.totalorder %s333, %s334
      %p348 = scmp.eq.s32.totalorder %s54, 3
      %p349 = por %p347, %p348
      %p351 = scmp.ne.s32.totalorder %s334, %s350
      %p352 = scmp.eq.s32.totalorder %s54, 0
      %p353 = por %p351, %p352
      %s354 = ssub.s32 %s56, %s63
      %p355 = scmp.eq.s32.totalorder %s354, 0
      %s357 = sadd.s32 %s356, 1
      %s358 = scalar_select %p355, %s356, %s357
      %p361 = pneg %p355
      %p362 = scmp.eq.s32.totalorder %s48, 3
      %p363 = por %p361, %p362
      %p364 = scmp.ne.s32.totalorder %s356, %s359
      %p365 = scmp.eq.s32.totalorder %s48, 0
      %p366 = por %p364, %p365
      %p367 = scmp.ne.s32.totalorder %s356, %s359
      %p368 = scmp.eq.s32.totalorder %s53, 3
      %p369 = por %p367, %p368
      %p370 = scmp.ne.s32.totalorder %s359, %s360
      %p371 = scmp.eq.s32.totalorder %s53, 0
      %p372 = por %p370, %p371
      %p373 = scmp.ne.s32.totalorder %s359, %s360
      %p374 = scmp.eq.s32.totalorder %s54, 3
      %p375 = por %p373, %p374
      %p377 = scmp.ne.s32.totalorder %s360, %s376
      %p378 = scmp.eq.s32.totalorder %s54, 0
      %p379 = por %p377, %p378
      %s380 = ssub.s32 %s56, %s63
      %p381 = scmp.eq.s32.totalorder %s380, 0
      %s383 = sadd.s32 %s382, 1
      %s384 = scalar_select %p381, %s382, %s383
      %p387 = pneg %p381
      %p388 = scmp.eq.s32.totalorder %s48, 3
      %p389 = por %p387, %p388
      %p390 = scmp.ne.s32.totalorder %s382, %s385
      %p391 = scmp.eq.s32.totalorder %s48, 0
      %p392 = por %p390, %p391
      %p393 = scmp.ne.s32.totalorder %s382, %s385
      %p394 = scmp.eq.s32.totalorder %s53, 3
      %p395 = por %p393, %p394
      %p396 = scmp.ne.s32.totalorder %s385, %s386
      %p397 = scmp.eq.s32.totalorder %s53, 0
      %p398 = por %p396, %p397
      %p399 = scmp.ne.s32.totalorder %s385, %s386
      %p400 = scmp.eq.s32.totalorder %s54, 3
      %p401 = por %p399, %p400
      %p403 = scmp.ne.s32.totalorder %s386, %s402
      %p404 = scmp.eq.s32.totalorder %s54, 0
      %p405 = por %p403, %p404
      %s407 = sadd.s32 %s406, 1
      %p410 = scmp.eq.s32.totalorder %s48, 3
      %p411 = scmp.ne.s32.totalorder %s406, %s408
      %p412 = scmp.eq.s32.totalorder %s48, 0
      %p413 = por %p411, %p412
      %p414 = scmp.ne.s32.totalorder %s406, %s408
      %p415 = scmp.eq.s32.totalorder %s53, 3
      %p416 = por %p414, %p415
      %p417 = scmp.ne.s32.totalorder %s408, %s409
      %p418 = scmp.eq.s32.totalorder %s53, 0
      %p419 = por %p417, %p418
      %p420 = scmp.ne.s32.totalorder %s408, %s409
      %p421 = scmp.eq.s32.totalorder %s54, 3
      %p422 = por %p420, %p421
      %p424 = scmp.ne.s32.totalorder %s409, %s423
      %p425 = scmp.eq.s32.totalorder %s54, 0
      %p426 = por %p424, %p425
      %s428 = sadd.s32 %s427, 1
      %p431 = scmp.eq.s32.totalorder %s48, 3
      %p432 = scmp.ne.s32.totalorder %s427, %s429
      %p433 = scmp.eq.s32.totalorder %s48, 0
      %p434 = por %p432, %p433
      %p435 = scmp.ne.s32.totalorder %s427, %s429
      %p436 = scmp.eq.s32.totalorder %s53, 3
      %p437 = por %p435, %p436
      %p438 = scmp.ne.s32.totalorder %s429, %s430
      %p439 = scmp.eq.s32.totalorder %s53, 0
      %p440 = por %p438, %p439
      %p441 = scmp.ne.s32.totalorder %s429, %s430
      %p442 = scmp.eq.s32.totalorder %s54, 3
      %p443 = por %p441, %p442
      %p445 = scmp.ne.s32.totalorder %s430, %s444
      %p446 = scmp.eq.s32.totalorder %s54, 0
      %p447 = por %p445, %p446
      %s449 = sadd.s32 %s448, 1
      %p452 = scmp.eq.s32.totalorder %s48, 3
      %p453 = scmp.ne.s32.totalorder %s448, %s450
      %p454 = scmp.eq.s32.totalorder %s48, 0
      %p455 = por %p453, %p454
      %p456 = scmp.ne.s32.totalorder %s448, %s450
      %p457 = scmp.eq.s32.totalorder %s53, 3
      %p458 = por %p456, %p457
      %p459 = scmp.ne.s32.totalorder %s450, %s451
      %p460 = scmp.eq.s32.totalorder %s53, 0
      %p461 = por %p459, %p460
      %p462 = scmp.ne.s32.totalorder %s450, %s451
      %p463 = scmp.eq.s32.totalorder %s54, 3
      %p464 = por %p462, %p463
      %p466 = scmp.ne.s32.totalorder %s451, %s465
      %p467 = scmp.eq.s32.totalorder %s54, 0
      %p468 = por %p466, %p467
      %s470 = sadd.s32 %s469, 1
      %p473 = scmp.eq.s32.totalorder %s48, 3
      %p474 = scmp.ne.s32.totalorder %s469, %s471
      %p475 = scmp.eq.s32.totalorder %s48, 0
      %p476 = por %p474, %p475
      %p477 = scmp.ne.s32.totalorder %s469, %s471
      %p478 = scmp.eq.s32.totalorder %s53, 3
      %p479 = por %p477, %p478
      %p480 = scmp.ne.s32.totalorder %s471, %s472
      %p481 = scmp.eq.s32.totalorder %s53, 0
      %p482 = por %p480, %p481
      %p483 = scmp.ne.s32.totalorder %s471, %s472
      %p484 = scmp.eq.s32.totalorder %s54, 3
      %p485 = por %p483, %p484
      %p487 = scmp.ne.s32.totalorder %s472, %s486
      %p488 = scmp.eq.s32.totalorder %s54, 0
      %p489 = por %p487, %p488
      %s491 = sadd.s32 %s490, 1
      %p494 = scmp.eq.s32.totalorder %s48, 3
      %p495 = scmp.ne.s32.totalorder %s490, %s492
      %p496 = scmp.eq.s32.totalorder %s48, 0
      %p497 = por %p495, %p496
      %p498 = scmp.ne.s32.totalorder %s490, %s492
      %p499 = scmp.eq.s32.totalorder %s53, 3
      %p500 = por %p498, %p499
      %p501 = scmp.ne.s32.totalorder %s492, %s493
      %p502 = scmp.eq.s32.totalorder %s53, 0
      %p503 = por %p501, %p502
      %p504 = scmp.ne.s32.totalorder %s492, %s493
      %p505 = scmp.eq.s32.totalorder %s54, 3
      %p506 = por %p504, %p505
      %p508 = scmp.ne.s32.totalorder %s493, %s507
      %p509 = scmp.eq.s32.totalorder %s54, 0
      %p510 = por %p508, %p509
      %s512 = sadd.s32 %s511, 1
      %p515 = scmp.eq.s32.totalorder %s48, 3
      %p516 = scmp.ne.s32.totalorder %s511, %s513
      %p517 = scmp.eq.s32.totalorder %s48, 0
      %p518 = por %p516, %p517
      %p519 = scmp.ne.s32.totalorder %s511, %s513
      %p520 = scmp.eq.s32.totalorder %s53, 3
      %p521 = por %p519, %p520
      %p522 = scmp.ne.s32.totalorder %s513, %s514
      %p523 = scmp.eq.s32.totalorder %s53, 0
      %p524 = por %p522, %p523
      %p525 = scmp.ne.s32.totalorder %s513, %s514
      %p526 = scmp.eq.s32.totalorder %s54, 3
      %p527 = por %p525, %p526
      %p529 = scmp.ne.s32.totalorder %s514, %s528
      %p530 = scmp.eq.s32.totalorder %s54, 0
      %p531 = por %p529, %p530
      %s533 = sadd.s32 %s532, 1
      %p536 = scmp.eq.s32.totalorder %s48, 3
      %p537 = scmp.ne.s32.totalorder %s532, %s534
      %p538 = scmp.eq.s32.totalorder %s48, 0
      %p539 = por %p537, %p538
      %p540 = scmp.ne.s32.totalorder %s532, %s534
      %p541 = scmp.eq.s32.totalorder %s53, 3
      %p542 = por %p540, %p541
      %p543 = scmp.ne.s32.totalorder %s534, %s535
      %p544 = scmp.eq.s32.totalorder %s53, 0
      %p545 = por %p543, %p544
      %p546 = scmp.ne.s32.totalorder %s534, %s535
      %p547 = scmp.eq.s32.totalorder %s54, 3
      %p548 = por %p546, %p547
      %p550 = scmp.ne.s32.totalorder %s535, %s549
      %p551 = scmp.eq.s32.totalorder %s54, 0
      %p552 = por %p550, %p551
      %s554 = sadd.s32 %s553, 1
      %p557 = scmp.eq.s32.totalorder %s48, 3
      %p558 = scmp.ne.s32.totalorder %s553, %s555
      %p559 = scmp.eq.s32.totalorder %s48, 0
      %p560 = por %p558, %p559
      %p561 = scmp.ne.s32.totalorder %s553, %s555
      %p562 = scmp.eq.s32.totalorder %s53, 3
      %p563 = por %p561, %p562
      %p564 = scmp.ne.s32.totalorder %s555, %s556
      %p565 = scmp.eq.s32.totalorder %s53, 0
      %p566 = por %p564, %p565
      %p567 = scmp.ne.s32.totalorder %s555, %s556
      %p568 = scmp.eq.s32.totalorder %s54, 3
      %p569 = por %p567, %p568
      %p571 = scmp.ne.s32.totalorder %s556, %s570
      %p572 = scmp.eq.s32.totalorder %s54, 0
      %p573 = por %p571, %p572
      %s575 = sadd.s32 %s574, 1
      %p578 = scmp.eq.s32.totalorder %s48, 3
      %p579 = scmp.ne.s32.totalorder %s574, %s576
      %p580 = scmp.eq.s32.totalorder %s48, 0
      %p581 = por %p579, %p580
      %p582 = scmp.ne.s32.totalorder %s574, %s576
      %p583 = scmp.eq.s32.totalorder %s53, 3
      %p584 = por %p582, %p583
      %p585 = scmp.ne.s32.totalorder %s576, %s577
      %p586 = scmp.eq.s32.totalorder %s53, 0
      %p587 = por %p585, %p586
      %p588 = scmp.ne.s32.totalorder %s576, %s577
      %p589 = scmp.eq.s32.totalorder %s54, 3
      %p590 = por %p588, %p589
      %p592 = scmp.ne.s32.totalorder %s577, %s591
      %p593 = scmp.eq.s32.totalorder %s54, 0
      %p594 = por %p592, %p593
      %s595 = ssub.s32 %s55, %s67
      %p596 = scmp.eq.s32.totalorder %s595, 0
      %s598 = sadd.s32 %s597, 1
      %s599 = scalar_select %p596, %s597, %s598
      %p602 = pneg %p596
      %p603 = scmp.eq.s32.totalorder %s48, 3
      %p604 = por %p602, %p603
      %p605 = scmp.ne.s32.totalorder %s597, %s600
      %p606 = scmp.eq.s32.totalorder %s48, 0
      %p607 = por %p605, %p606
      %p608 = scmp.ne.s32.totalorder %s597, %s600
      %p609 = scmp.eq.s32.totalorder %s53, 3
      %p610 = por %p608, %p609
      %p611 = scmp.ne.s32.totalorder %s600, %s601
      %p612 = scmp.eq.s32.totalorder %s53, 0
      %p613 = por %p611, %p612
      %p614 = scmp.ne.s32.totalorder %s600, %s601
      %p615 = scmp.eq.s32.totalorder %s54, 3
      %p616 = por %p614, %p615
      %p618 = scmp.ne.s32.totalorder %s601, %s617
      %p619 = scmp.eq.s32.totalorder %s54, 0
      %p620 = por %p618, %p619
      %p621 = scmp.le.s32.totalorder 1, %s48
      %p622 = scmp.lt.s32.totalorder %s48, 5
      %p623 = pnand %p621, %p622
      %p624 = pneg %p623
      // Predicated region
      $region9: #{tpu_custom_call.1} parent=5 // pred_check
        _
      $region10: #{tpu_custom_call.1} parent=5 // pred_check_branch
        %626 = sbr.rel (%p623) target = $region12
      $region11: #{tpu_custom_call.1} parent=5 // pred_region
        %s627 = ssub.s32 %s48, 1
        // Predicated region
        $region13: #{tpu_custom_call.1} parent=11 // pred_check
          %p628 = pneg %p419
        $region14: #{tpu_custom_call.1} parent=11 // pred_check_branch
          %630 = sbr.rel (%p628) target = $region16
        $region15: #{tpu_custom_call.1} parent=11 // pred_region
          %632 = vsyncadd [#allocation16], 0
          %s634 = sshll.u32 %s13, 4
          %s635 = int_to_ptr.hbm [resolvable:$true] %s634
          %s636 = sshll.u32 [#allocation17], 4
          %s637 = int_to_ptr.vmem [resolvable:$true] %s636
          %639 = dma.hbm_to_vmem [thread:$0]  %s635, 64, %s637, [#allocation16]
        $region16: #{tpu_custom_call.1} parent=11 // pred_fallthru
          _
        // Predicated region
        $region17: #{tpu_custom_call.1} parent=11 // pred_check
          %p640 = pneg %p440
        $region18: #{tpu_custom_call.1} parent=11 // pred_check_branch
          %642 = sbr.rel (%p640) target = $region20
        $region19: #{tpu_custom_call.1} parent=11 // pred_region
          _
        $region20: #{tpu_custom_call.1} parent=11 // pred_fallthru
          _
        // Predicated region
        $region21: #{tpu_custom_call.1} parent=11 // pred_check
          %p643 = pneg %p461
        $region22: #{tpu_custom_call.1} parent=11 // pred_check_branch
          %645 = sbr.rel (%p643) target = $region24
        $region23: #{tpu_custom_call.1} parent=11 // pred_region
          _
        $region24: #{tpu_custom_call.1} parent=11 // pred_fallthru
          _
        // Predicated region
        $region25: #{tpu_custom_call.1} parent=11 // pred_check
          %p646 = pneg %p482
        $region26: #{tpu_custom_call.1} parent=11 // pred_check_branch
          %648 = sbr.rel (%p646) target = $region28
        $region27: #{tpu_custom_call.1} parent=11 // pred_region
          %650 = vsyncadd [#allocation19], 0
          %s651 = sshll.u32 %s16, 4
          %s652 = int_to_ptr.hbm [resolvable:$true] %s651
          %s653 = sshll.u32 [#allocation18], 4
          %s654 = int_to_ptr.vmem [resolvable:$true] %s653
          %659 = dma.hbm_to_vmem [thread:$0]  %s652, 256, %s654, [#allocation19], 64, 64, 4
        $region28: #{tpu_custom_call.1} parent=11 // pred_fallthru
          _
        // Predicated region
        $region29: #{tpu_custom_call.1} parent=11 // pred_check
          %p660 = pneg %p503
        $region30: #{tpu_custom_call.1} parent=11 // pred_check_branch
          %662 = sbr.rel (%p660) target = $region32
        $region31: #{tpu_custom_call.1} parent=11 // pred_region
          %664 = vsyncadd [#allocation19], 0
          %s666 = sshll.u32 %s17, 4
          %s667 = int_to_ptr.hbm [resolvable:$true] %s666
          %s668 = sshll.u32 [#allocation20], 4
          %s669 = int_to_ptr.vmem [resolvable:$true] %s668
          %671 = dma.hbm_to_vmem [thread:$0]  %s667, 16, %s669, [#allocation19]
        $region32: #{tpu_custom_call.1} parent=11 // pred_fallthru
          _
        // Predicated region
        $region33: #{tpu_custom_call.1} parent=11 // pred_check
          %p672 = pneg %p524
        $region34: #{tpu_custom_call.1} parent=11 // pred_check_branch
          %674 = sbr.rel (%p672) target = $region36
        $region35: #{tpu_custom_call.1} parent=11 // pred_region
          _
        $region36: #{tpu_custom_call.1} parent=11 // pred_fallthru
          _
        // Predicated region
        $region37: #{tpu_custom_call.1} parent=11 // pred_check
          %p675 = pneg %p545
        $region38: #{tpu_custom_call.1} parent=11 // pred_check_branch
          %677 = sbr.rel (%p675) target = $region40
        $region39: #{tpu_custom_call.1} parent=11 // pred_region
          %679 = vsyncadd [#allocation22], 0
          %s681 = sshll.u32 %s19, 4
          %s682 = int_to_ptr.hbm [resolvable:$true] %s681
          %s683 = sshll.u32 [#allocation21], 4
          %s684 = int_to_ptr.vmem [resolvable:$true] %s683
          %686 = dma.hbm_to_vmem [thread:$0]  %s682, 16, %s684, [#allocation22]
        $region40: #{tpu_custom_call.1} parent=11 // pred_fallthru
          _
        // Predicated region
        $region41: #{tpu_custom_call.1} parent=11 // pred_check
          %p687 = pneg %p566
        $region42: #{tpu_custom_call.1} parent=11 // pred_check_branch
          %689 = sbr.rel (%p687) target = $region44
        $region43: #{tpu_custom_call.1} parent=11 // pred_region
          %691 = vsyncadd [#allocation22], 0
          %s692 = sshll.u32 %s20, 4
          %s693 = int_to_ptr.hbm [resolvable:$true] %s692
          %s694 = sshll.u32 [#allocation23], 4
          %s695 = int_to_ptr.vmem [resolvable:$true] %s694
          %700 = dma.hbm_to_vmem [thread:$0]  %s693, 256, %s695, [#allocation22], 64, 64, 4
        $region44: #{tpu_custom_call.1} parent=11 // pred_fallthru
          _
        // Predicated region
        $region45: #{tpu_custom_call.1} parent=11 // pred_check
          %p701 = pneg %p587
        $region46: #{tpu_custom_call.1} parent=11 // pred_check_branch
          %703 = sbr.rel (%p701) target = $region48
        $region47: #{tpu_custom_call.1} parent=11 // pred_region
          _
        $region48: #{tpu_custom_call.1} parent=11 // pred_fallthru
          _
      $region12: #{tpu_custom_call.1} parent=5 // pred_fallthru
        _
      %p704 = scmp.lt.s32.totalorder %s48, 4
      // Predicated region
      $region49: #{tpu_custom_call.1} parent=5 // pred_check
        %p705 = pneg %p704
      $region50: #{tpu_custom_call.1} parent=5 // pred_check_branch
        %707 = sbr.rel (%p705) target = $region52
      $region51: #{tpu_custom_call.1} parent=5 // pred_region
        // Predicated region
        $region53: #{tpu_custom_call.1} parent=51 // pred_check
          %p708 = pneg %p80
        $region54: #{tpu_custom_call.1} parent=51 // pred_check_branch
          %710 = sbr.rel (%p708) target = $region56
        $region55: #{tpu_custom_call.1} parent=51 // pred_region
          %p711 = scmp.lt.s32.totalorder %s55, 1
          %s712 = scalar_select %p711, %s55, 1
          %s713 = smul.addr %s712, 8
          %s714 = scalar_lea.vmem %s0, %s713
        $region56: #{tpu_custom_call.1} parent=51 // pred_fallthru
          _
        // Predicated region
        $region57: #{tpu_custom_call.1} parent=51 // pred_check
          %p715 = pneg %p106
        $region58: #{tpu_custom_call.1} parent=51 // pred_check_branch
          %717 = sbr.rel (%p715) target = $region60
        $region59: #{tpu_custom_call.1} parent=51 // pred_region
          %s718 = sand.u32 %s96, 1
          %s719 = scalar_lea.sflag [#allocation4], %s718
          %s720 = sand.u32 %s96, 1
          %s721 = scalar_lea.vmem [#allocation3], %s720
          %723 = vsyncadd %s719, 0
          %s724 = scalar_lea.hbm %s1, %s56
          %s726 = sshll.u32 %s724, 4
          %s727 = int_to_ptr.hbm [resolvable:$true] %s726
          %s728 = sshll.u32 %s721, 4
          %s729 = int_to_ptr.vmem [resolvable:$true] %s728
          %731 = dma.hbm_to_vmem [thread:$0]  %s727, 16, %s729, %s719
        $region60: #{tpu_custom_call.1} parent=51 // pred_fallthru
          _
        // Predicated region
        $region61: #{tpu_custom_call.1} parent=51 // pred_check
          %p732 = pneg %p132
        $region62: #{tpu_custom_call.1} parent=51 // pred_check_branch
          %734 = sbr.rel (%p732) target = $region64
        $region63: #{tpu_custom_call.1} parent=51 // pred_region
          %s735 = sand.u32 %s48, 1
          %s736 = scalar_lea.sflag [#allocation7], %s735
          %s737 = sand.u32 %s122, 1
          %s738 = scalar_lea.vmem [#allocation6], %s737
          %740 = vsyncadd %s736, 0
          %s741 = scalar_lea.hbm %s2, %s56
          %s743 = sshll.u32 %s741, 4
          %s744 = int_to_ptr.hbm [resolvable:$true] %s743
          %s745 = sshll.u32 %s738, 4
          %s746 = int_to_ptr.vmem [resolvable:$true] %s745
          %748 = dma.hbm_to_vmem [thread:$0]  %s744, 16, %s746, %s736
        $region64: #{tpu_custom_call.1} parent=51 // pred_fallthru
          _
        // Predicated region
        $region65: #{tpu_custom_call.1} parent=51 // pred_check
          %p749 = pneg %p158
        $region66: #{tpu_custom_call.1} parent=51 // pred_check_branch
          %751 = sbr.rel (%p749) target = $region68
        $region67: #{tpu_custom_call.1} parent=51 // pred_region
          %p752 = scmp.lt.s32.totalorder %s56, 1
          %s753 = scalar_select %p752, %s56, 1
          %s754 = smul.addr %s753, 4
          %s755 = smul.addr %s754, 4
          %s756 = scalar_lea.vmem %s3, %s755
        $region68: #{tpu_custom_call.1} parent=51 // pred_fallthru
          _
        // Predicated region
        $region69: #{tpu_custom_call.1} parent=51 // pred_check
          %p757 = pneg %p184
        $region70: #{tpu_custom_call.1} parent=51 // pred_check_branch
          %759 = sbr.rel (%p757) target = $region72
        $region71: #{tpu_custom_call.1} parent=51 // pred_region
          %s760 = sand.u32 %s48, 1
          %s761 = scalar_lea.sflag [#allocation7], %s760
          %s762 = sand.u32 %s174, 1
          %s763 = scalar_lea.vmem [#allocation8], %s762
          %765 = vsyncadd %s761, 0
          %s766 = scalar_lea.hbm %s4, %s56
          %s768 = sshll.u32 %s766, 4
          %s769 = int_to_ptr.hbm [resolvable:$true] %s768
          %s770 = sshll.u32 %s763, 4
          %s771 = int_to_ptr.vmem [resolvable:$true] %s770
          %773 = dma.hbm_to_vmem [thread:$0]  %s769, 16, %s771, %s761
        $region72: #{tpu_custom_call.1} parent=51 // pred_fallthru
          _
        // Predicated region
        $region73: #{tpu_custom_call.1} parent=51 // pred_check
          %p774 = pneg %p210
        $region74: #{tpu_custom_call.1} parent=51 // pred_check_branch
          %776 = sbr.rel (%p774) target = $region76
        $region75: #{tpu_custom_call.1} parent=51 // pred_region
          %p777 = scmp.lt.s32.totalorder %s56, 1
          %s778 = scalar_select %p777, %s56, 1
          %s779 = smul.addr %s778, 4
          %s780 = smul.addr %s779, 4
          %s781 = scalar_lea.vmem %s5, %s780
        $region76: #{tpu_custom_call.1} parent=51 // pred_fallthru
          _
        // Predicated region
        $region77: #{tpu_custom_call.1} parent=51 // pred_check
          %p782 = pneg %p236
        $region78: #{tpu_custom_call.1} parent=51 // pred_check_branch
          %784 = sbr.rel (%p782) target = $region80
        $region79: #{tpu_custom_call.1} parent=51 // pred_region
          %s785 = sand.u32 %s48, 1
          %s786 = scalar_lea.sflag [#allocation10], %s785
          %s787 = sand.u32 %s226, 1
          %s788 = scalar_lea.vmem [#allocation9], %s787
          %790 = vsyncadd %s786, 0
          %s791 = scalar_lea.hbm %s6, %s56
          %s793 = sshll.u32 %s791, 4
          %s794 = int_to_ptr.hbm [resolvable:$true] %s793
          %s795 = sshll.u32 %s788, 4
          %s796 = int_to_ptr.vmem [resolvable:$true] %s795
          %798 = dma.hbm_to_vmem [thread:$0]  %s794, 16, %s796, %s786
        $region80: #{tpu_custom_call.1} parent=51 // pred_fallthru
          _
        // Predicated region
        $region81: #{tpu_custom_call.1} parent=51 // pred_check
          %p799 = pneg %p262
        $region82: #{tpu_custom_call.1} parent=51 // pred_check_branch
          %801 = sbr.rel (%p799) target = $region84
        $region83: #{tpu_custom_call.1} parent=51 // pred_region
          %s802 = sand.u32 %s48, 1
          %s803 = scalar_lea.sflag [#allocation10], %s802
          %s804 = sand.u32 %s252, 1
          %s805 = scalar_lea.vmem [#allocation11], %s804
          %807 = vsyncadd %s803, 0
          %s808 = scalar_lea.hbm %s7, %s56
          %s810 = sshll.u32 %s808, 4
          %s811 = int_to_ptr.hbm [resolvable:$true] %s810
          %s812 = sshll.u32 %s805, 4
          %s813 = int_to_ptr.vmem [resolvable:$true] %s812
          %815 = dma.hbm_to_vmem [thread:$0]  %s811, 16, %s813, %s803
        $region84: #{tpu_custom_call.1} parent=51 // pred_fallthru
          _
        // Predicated region
        $region85: #{tpu_custom_call.1} parent=51 // pred_check
          %p816 = pneg %p288
        $region86: #{tpu_custom_call.1} parent=51 // pred_check_branch
          %818 = sbr.rel (%p816) target = $region88
        $region87: #{tpu_custom_call.1} parent=51 // pred_region
          %s819 = sand.u32 %s48, 1
          %s820 = scalar_lea.sflag [#allocation13], %s819
          %s821 = sand.u32 %s278, 1
          %s822 = scalar_lea.vmem [#allocation12], %s821
          %824 = vsyncadd %s820, 0
          %s825 = scalar_lea.hbm %s8, %s56
          %s827 = sshll.u32 %s825, 4
          %s828 = int_to_ptr.hbm [resolvable:$true] %s827
          %s829 = sshll.u32 %s822, 4
          %s830 = int_to_ptr.vmem [resolvable:$true] %s829
          %832 = dma.hbm_to_vmem [thread:$0]  %s828, 16, %s830, %s820
        $region88: #{tpu_custom_call.1} parent=51 // pred_fallthru
          _
        // Predicated region
        $region89: #{tpu_custom_call.1} parent=51 // pred_check
          %p833 = pneg %p314
        $region90: #{tpu_custom_call.1} parent=51 // pred_check_branch
          %835 = sbr.rel (%p833) target = $region92
        $region91: #{tpu_custom_call.1} parent=51 // pred_region
          %p836 = scmp.lt.s32.totalorder %s56, 1
          %s837 = scalar_select %p836, %s56, 1
          %s838 = smul.addr %s837, 8
          %s839 = smul.addr %s838, 4
          %s840 = scalar_lea.vmem %s9, %s839
        $region92: #{tpu_custom_call.1} parent=51 // pred_fallthru
          _
        // Predicated region
        $region93: #{tpu_custom_call.1} parent=51 // pred_check
          %p841 = pneg %p340
        $region94: #{tpu_custom_call.1} parent=51 // pred_check_branch
          %843 = sbr.rel (%p841) target = $region96
        $region95: #{tpu_custom_call.1} parent=51 // pred_region
          %s844 = sand.u32 %s48, 1
          %s845 = scalar_lea.sflag [#allocation13], %s844
          %s846 = sand.u32 %s330, 1
          %s847 = smul.addr %s846, 2
          %s848 = scalar_lea.vmem [#allocation14], %s847
          %850 = vsyncadd %s845, 0
          %s851 = smul.addr %s56, 2
          %s852 = scalar_lea.hbm %s10, %s851
          %s854 = sshll.u32 %s852, 4
          %s855 = int_to_ptr.hbm [resolvable:$true] %s854
          %s856 = sshll.u32 %s848, 4
          %s857 = int_to_ptr.vmem [resolvable:$true] %s856
          %859 = dma.hbm_to_vmem [thread:$0]  %s855, 32, %s857, %s845
        $region96: #{tpu_custom_call.1} parent=51 // pred_fallthru
          _
        // Predicated region
        $region97: #{tpu_custom_call.1} parent=51 // pred_check
          %p860 = pneg %p366
        $region98: #{tpu_custom_call.1} parent=51 // pred_check_branch
          %862 = sbr.rel (%p860) target = $region100
        $region99: #{tpu_custom_call.1} parent=51 // pred_region
          %p863 = scmp.lt.s32.totalorder %s56, 1
          %s864 = scalar_select %p863, %s56, 1
          %s865 = smul.addr %s864, 16
          %s866 = smul.addr %s865, 4
          %s867 = scalar_lea.vmem %s11, %s866
        $region100: #{tpu_custom_call.1} parent=51 // pred_fallthru
          _
        // Predicated region
        $region101: #{tpu_custom_call.1} parent=51 // pred_check
          %p868 = pneg %p392
        $region102: #{tpu_custom_call.1} parent=51 // pred_check_branch
          %870 = sbr.rel (%p868) target = $region104
        $region103: #{tpu_custom_call.1} parent=51 // pred_region
          %s871 = sand.u32 %s48, 1
          %s872 = scalar_lea.sflag [#allocation16], %s871
          %s873 = sand.u32 %s382, 1
          %s874 = scalar_lea.vmem [#allocation15], %s873
          %876 = vsyncadd %s872, 0
          %s877 = scalar_lea.hbm %s12, %s56
          %s879 = sshll.u32 %s877, 4
          %s880 = int_to_ptr.hbm [resolvable:$true] %s879
          %s881 = sshll.u32 %s874, 4
          %s882 = int_to_ptr.vmem [resolvable:$true] %s881
          %884 = dma.hbm_to_vmem [thread:$0]  %s880, 16, %s882, %s872
        $region104: #{tpu_custom_call.1} parent=51 // pred_fallthru
          _
      $region52: #{tpu_custom_call.1} parent=5 // pred_fallthru
        _
      %p885 = scmp.le.s32.totalorder 1, %s48
      %p886 = scmp.lt.s32.totalorder %s48, 5
      %p887 = pnand %p885, %p886
      %p888 = pneg %p887
      // Predicated region
      $region105: #{tpu_custom_call.1} parent=5 // pred_check
        _
      $region106: #{tpu_custom_call.1} parent=5 // pred_check_branch
        %890 = sbr.rel (%p887) target = $region108
      $region107: #{tpu_custom_call.1} parent=5 // pred_region
        %s891 = ssub.s32 %s48, 1
        %s892 = sand.u32 %s99, 1
        %s893 = scalar_lea.sflag [#allocation4], %s892
        %s894 = sand.u32 %s99, 1
        %s895 = scalar_lea.vmem [#allocation3], %s894
        // Predicated region
        $region109: #{tpu_custom_call.1} parent=107 // pred_check
          %p896 = pneg %p112
        $region110: #{tpu_custom_call.1} parent=107 // pred_check_branch
          %898 = sbr.rel (%p896) target = $region112
        $region111: #{tpu_custom_call.1} parent=107 // pred_region
          %900 = dma.done %s893, 16
        $region112: #{tpu_custom_call.1} parent=107 // pred_fallthru
          _
        %s901 = sand.u32 %s53, 1
        %s902 = scalar_lea.sflag [#allocation7], %s901
        %s903 = sand.u32 %s125, 1
        %s904 = scalar_lea.vmem [#allocation6], %s903
        // Predicated region
        $region113: #{tpu_custom_call.1} parent=107 // pred_check
          %p905 = pneg %p138
        $region114: #{tpu_custom_call.1} parent=107 // pred_check_branch
          %907 = sbr.rel (%p905) target = $region116
        $region115: #{tpu_custom_call.1} parent=107 // pred_region
          %909 = dma.done %s902, 16
        $region116: #{tpu_custom_call.1} parent=107 // pred_fallthru
          _
        %s910 = sand.u32 %s53, 1
        %s911 = scalar_lea.sflag [#allocation7], %s910
        %s912 = sand.u32 %s177, 1
        %s913 = scalar_lea.vmem [#allocation8], %s912
        // Predicated region
        $region117: #{tpu_custom_call.1} parent=107 // pred_check
          %p914 = pneg %p190
        $region118: #{tpu_custom_call.1} parent=107 // pred_check_branch
          %916 = sbr.rel (%p914) target = $region120
        $region119: #{tpu_custom_call.1} parent=107 // pred_region
          %918 = dma.done %s911, 16
        $region120: #{tpu_custom_call.1} parent=107 // pred_fallthru
          _
        %s919 = sand.u32 %s53, 1
        %s920 = scalar_lea.sflag [#allocation10], %s919
        %s921 = sand.u32 %s229, 1
        %s922 = scalar_lea.vmem [#allocation9], %s921
        // Predicated region
        $region121: #{tpu_custom_call.1} parent=107 // pred_check
          %p923 = pneg %p242
        $region122: #{tpu_custom_call.1} parent=107 // pred_check_branch
          %925 = sbr.rel (%p923) target = $region124
        $region123: #{tpu_custom_call.1} parent=107 // pred_region
          %927 = dma.done %s920, 16
        $region124: #{tpu_custom_call.1} parent=107 // pred_fallthru
          _
        %s928 = sand.u32 %s53, 1
        %s929 = scalar_lea.sflag [#allocation10], %s928
        %s930 = sand.u32 %s255, 1
        %s931 = scalar_lea.vmem [#allocation11], %s930
        // Predicated region
        $region125: #{tpu_custom_call.1} parent=107 // pred_check
          %p932 = pneg %p268
        $region126: #{tpu_custom_call.1} parent=107 // pred_check_branch
          %934 = sbr.rel (%p932) target = $region128
        $region127: #{tpu_custom_call.1} parent=107 // pred_region
          %936 = dma.done %s929, 16
        $region128: #{tpu_custom_call.1} parent=107 // pred_fallthru
          _
        %s937 = sand.u32 %s53, 1
        %s938 = scalar_lea.sflag [#allocation13], %s937
        %s939 = sand.u32 %s281, 1
        %s940 = scalar_lea.vmem [#allocation12], %s939
        // Predicated region
        $region129: #{tpu_custom_call.1} parent=107 // pred_check
          %p941 = pneg %p294
        $region130: #{tpu_custom_call.1} parent=107 // pred_check_branch
          %943 = sbr.rel (%p941) target = $region132
        $region131: #{tpu_custom_call.1} parent=107 // pred_region
          %945 = dma.done %s938, 16
        $region132: #{tpu_custom_call.1} parent=107 // pred_fallthru
          _
        %s946 = sand.u32 %s53, 1
        %s947 = scalar_lea.sflag [#allocation13], %s946
        %s948 = sand.u32 %s333, 1
        %s949 = smul.addr %s948, 2
        %s950 = scalar_lea.vmem [#allocation14], %s949
        // Predicated region
        $region133: #{tpu_custom_call.1} parent=107 // pred_check
          %p951 = pneg %p346
        $region134: #{tpu_custom_call.1} parent=107 // pred_check_branch
          %953 = sbr.rel (%p951) target = $region136
        $region135: #{tpu_custom_call.1} parent=107 // pred_region
          %955 = dma.done %s947, 32
        $region136: #{tpu_custom_call.1} parent=107 // pred_fallthru
          _
        %s956 = sand.u32 %s53, 1
        %s957 = scalar_lea.sflag [#allocation16], %s956
        %s958 = sand.u32 %s385, 1
        %s959 = scalar_lea.vmem [#allocation15], %s958
        // Predicated region
        $region137: #{tpu_custom_call.1} parent=107 // pred_check
          %p960 = pneg %p398
        $region138: #{tpu_custom_call.1} parent=107 // pred_check_branch
          %962 = sbr.rel (%p960) target = $region140
        $region139: #{tpu_custom_call.1} parent=107 // pred_region
          %964 = dma.done %s957, 16
        $region140: #{tpu_custom_call.1} parent=107 // pred_fallthru
          _
        // Predicated region
        $region141: #{tpu_custom_call.1} parent=107 // pred_check
          %p965 = pneg %p419
        $region142: #{tpu_custom_call.1} parent=107 // pred_check_branch
          %967 = sbr.rel (%p965) target = $region144
        $region143: #{tpu_custom_call.1} parent=107 // pred_region
          %969 = dma.done [#allocation16], 64
        $region144: #{tpu_custom_call.1} parent=107 // pred_fallthru
          _
        // Predicated region
        $region145: #{tpu_custom_call.1} parent=107 // pred_check
          %p970 = pneg %p482
        $region146: #{tpu_custom_call.1} parent=107 // pred_check_branch
          %972 = sbr.rel (%p970) target = $region148
        $region147: #{tpu_custom_call.1} parent=107 // pred_region
          %974 = dma.done [#allocation19], 256
        $region148: #{tpu_custom_call.1} parent=107 // pred_fallthru
          _
        // Predicated region
        $region149: #{tpu_custom_call.1} parent=107 // pred_check
          %p975 = pneg %p503
        $region150: #{tpu_custom_call.1} parent=107 // pred_check_branch
          %977 = sbr.rel (%p975) target = $region152
        $region151: #{tpu_custom_call.1} parent=107 // pred_region
          %979 = dma.done [#allocation19], 16
        $region152: #{tpu_custom_call.1} parent=107 // pred_fallthru
          _
        // Predicated region
        $region153: #{tpu_custom_call.1} parent=107 // pred_check
          %p980 = pneg %p545
        $region154: #{tpu_custom_call.1} parent=107 // pred_check_branch
          %982 = sbr.rel (%p980) target = $region156
        $region155: #{tpu_custom_call.1} parent=107 // pred_region
          %984 = dma.done [#allocation22], 16
        $region156: #{tpu_custom_call.1} parent=107 // pred_fallthru
          _
        // Predicated region
        $region157: #{tpu_custom_call.1} parent=107 // pred_check
          %p985 = pneg %p566
        $region158: #{tpu_custom_call.1} parent=107 // pred_check_branch
          %987 = sbr.rel (%p985) target = $region160
        $region159: #{tpu_custom_call.1} parent=107 // pred_region
          %989 = dma.done [#allocation22], 256
        $region160: #{tpu_custom_call.1} parent=107 // pred_fallthru
          _
        %p990 = scmp.lt.s32.totalorder %s57, 1
        %s991 = scalar_select %p990, %s57, 1
        %s992 = smul.addr %s991, 8
        %s993 = scalar_lea.vmem %s0, %s992
        %p994 = pneg %p86
        %p995 = pneg %p83
        %s996 = sand.u32 %s99, 1
        %s997 = scalar_lea.sflag [#allocation4], %s996
        %s998 = sand.u32 %s99, 1
        %s999 = scalar_lea.vmem [#allocation3], %s998
        %p1000 = pneg %p112
        %p1001 = pneg %p109
        %s1002 = sand.u32 %s53, 1
        %s1003 = scalar_lea.sflag [#allocation7], %s1002
        %s1004 = sand.u32 %s125, 1
        %s1005 = scalar_lea.vmem [#allocation6], %s1004
        %p1006 = pneg %p138
        %p1007 = pneg %p135
        %p1008 = scmp.lt.s32.totalorder %s58, 1
        %s1009 = scalar_select %p1008, %s58, 1
        %s1010 = smul.addr %s1009, 4
        %s1011 = smul.addr %s1010, 4
        %s1012 = scalar_lea.vmem %s3, %s1011
        %p1013 = pneg %p164
        %p1014 = pneg %p161
        %s1015 = sand.u32 %s53, 1
        %s1016 = scalar_lea.sflag [#allocation7], %s1015
        %s1017 = sand.u32 %s177, 1
        %s1018 = scalar_lea.vmem [#allocation8], %s1017
        %p1019 = pneg %p190
        %p1020 = pneg %p187
        %p1021 = scmp.lt.s32.totalorder %s58, 1
        %s1022 = scalar_select %p1021, %s58, 1
        %s1023 = smul.addr %s1022, 4
        %s1024 = smul.addr %s1023, 4
        %s1025 = scalar_lea.vmem %s5, %s1024
        %p1026 = pneg %p216
        %p1027 = pneg %p213
        %s1028 = sand.u32 %s53, 1
        %s1029 = scalar_lea.sflag [#allocation10], %s1028
        %s1030 = sand.u32 %s229, 1
        %s1031 = scalar_lea.vmem [#allocation9], %s1030
        %p1032 = pneg %p242
        %p1033 = pneg %p239
        %s1034 = sand.u32 %s53, 1
        %s1035 = scalar_lea.sflag [#allocation10], %s1034
        %s1036 = sand.u32 %s255, 1
        %s1037 = scalar_lea.vmem [#allocation11], %s1036
        %p1038 = pneg %p268
        %p1039 = pneg %p265
        %s1040 = sand.u32 %s53, 1
        %s1041 = scalar_lea.sflag [#allocation13], %s1040
        %s1042 = sand.u32 %s281, 1
        %s1043 = scalar_lea.vmem [#allocation12], %s1042
        %p1044 = pneg %p294
        %p1045 = pneg %p291
        %p1046 = scmp.lt.s32.totalorder %s58, 1
        %s1047 = scalar_select %p1046, %s58, 1
        %s1048 = smul.addr %s1047, 8
        %s1049 = smul.addr %s1048, 4
        %s1050 = scalar_lea.vmem %s9, %s1049
        %p1051 = pneg %p320
        %p1052 = pneg %p317
        %s1053 = sand.u32 %s53, 1
        %s1054 = scalar_lea.sflag [#allocation13], %s1053
        %s1055 = sand.u32 %s333, 1
        %s1056 = smul.addr %s1055, 2
        %s1057 = scalar_lea.vmem [#allocation14], %s1056
        %p1058 = pneg %p346
        %p1059 = pneg %p343
        %p1060 = scmp.lt.s32.totalorder %s58, 1
        %s1061 = scalar_select %p1060, %s58, 1
        %s1062 = smul.addr %s1061, 16
        %s1063 = smul.addr %s1062, 4
        %s1064 = scalar_lea.vmem %s11, %s1063
        %p1065 = pneg %p372
        %p1066 = pneg %p369
        %s1067 = sand.u32 %s53, 1
        %s1068 = scalar_lea.sflag [#allocation16], %s1067
        %s1069 = sand.u32 %s385, 1
        %s1070 = scalar_lea.vmem [#allocation15], %s1069
        %p1071 = pneg %p398
        %p1072 = pneg %p395
        %p1073 = pneg %p419
        %p1074 = pneg %p416
        %p1075 = pneg %p440
        %p1076 = pneg %p437
        %p1077 = pneg %p461
        %p1078 = pneg %p458
        %p1079 = pneg %p482
        %p1080 = pneg %p479
        %p1081 = pneg %p503
        %p1082 = pneg %p500
        %p1083 = pneg %p524
        %p1084 = pneg %p521
        %p1085 = pneg %p545
        %p1086 = pneg %p542
        %p1087 = pneg %p566
        %p1088 = pneg %p563
        %p1089 = pneg %p587
        %p1090 = pneg %p584
        %p1091 = pneg %p613
        %p1092 = pneg %p610
        %s1093 = sand.u32 %s600, 1
        %s1094 = scalar_lea.sflag [#allocation5], %s1093
        %s1095 = sand.u32 %s600, 1
        %s1096 = smul.addr %s1095, 4
        %s1097 = scalar_lea.vmem [#allocation24], %s1096
        %p1098 = scmp.lt.s32.totalorder %s57, 1
        %s1099 = scalar_select %p1098, %s57, 1
        %s1100 = smul.addr %s1099, 8
        %s1101 = scalar_lea.vmem %s0, %s1100
        %p1102 = scmp.lt.s32.totalorder %s58, 1
        %s1103 = scalar_select %p1102, %s58, 1
        %s1104 = smul.addr %s1103, 4
        %s1105 = smul.addr %s1104, 4
        %s1106 = scalar_lea.vmem %s3, %s1105
        %p1107 = scmp.lt.s32.totalorder %s58, 1
        %s1108 = scalar_select %p1107, %s58, 1
        %s1109 = smul.addr %s1108, 4
        %s1110 = smul.addr %s1109, 4
        %s1111 = scalar_lea.vmem %s5, %s1110
        %p1112 = scmp.lt.s32.totalorder %s58, 1
        %s1113 = scalar_select %p1112, %s58, 1
        %s1114 = smul.addr %s1113, 8
        %s1115 = smul.addr %s1114, 4
        %s1116 = scalar_lea.vmem %s9, %s1115
        %p1117 = scmp.lt.s32.totalorder %s58, 1
        %s1118 = scalar_select %p1117, %s58, 1
        %s1119 = smul.addr %s1118, 16
        %s1120 = smul.addr %s1119, 4
        %s1121 = scalar_lea.vmem %s11, %s1120
        %p1123 = scmp.eq.s32.totalorder %s58, 0
        // Predicated region
        $region161: #{tpu_custom_call.1} parent=107 // pred_check
          %p1124 = pneg %p1123
        $region162: #{tpu_custom_call.1} parent=107 // pred_check_branch
          %1126 = sbr.rel (%p1124) target = $region164
        $region163: #{tpu_custom_call.1} parent=107 // pred_region
          %v1127 = vld [vmem:[%s1101] sm:$0xff]
          %vm1128 = vcmask 261120
          %1129 = vst.msk [vmem:[#allocation2] sm:$0xff] %vm1128, %v1127
        $region164: #{tpu_custom_call.1} parent=107 // pred_fallthru
          _
        %v1130 = vld [vmem:[#allocation2] sm:$0xff]
        %v1131 = vld [vmem:[%s895] sm:$0x1]
        %v1132 = vld [vmem:[%s904] sm:$0x1]
        %vm1133 = vcmask 261120
        %v1134 = vsel %vm1133, %v1130, 0.0
        %1135 = vadd.xlane.f32.xlu0 %v1134
        %v1136 = vpop.xlane.xlu0 %1135
        %v1137 = vrcp.pop 32.0
        %v1138 = vmul.f32 32.0, %v1137
        %v1139 = vsub.f32 1.0, %v1138
        %v1140 = vmul.f32 %v1137, %v1139
        %v1141 = vadd.f32 %v1137, %v1140
        %vm1142 = vweird.f32 %v1137
        %v1143 = vsel %vm1142, %v1137, %v1141
        %v1144 = vmul.f32 %v1136, %v1143
        %v1145 = vsub.f32 %v1130, %v1144
        %v1146 = vmul.f32 %v1145, %v1145
        %v1147 = vsel %vm1133, %v1146, 0.0
        %1148 = vadd.xlane.f32.xlu0 %v1147
        %v1149 = vpop.xlane.xlu0 %1148
        %v1150 = vmul.f32 %v1149, %v1143
        %v1151 = vadd.f32 %v1150, 1e-05
        %v1152 = vrsqrt.pop %v1151
        %v1153 = vmul.f32 %v1152, %v1151
        %v1154 = vmul.f32 %v1153, %v1152
        %v1155 = vmul.f32 0.5, %v1154
        %v1156 = vsub.f32 1.5, %v1155
        %v1157 = vmul.f32 %v1152, %v1156
        %vm1158 = vweird.f32 %v1151
        %vm1159 = vweird.f32 %v1152
        %vm1160 = vmor %vm1158, %vm1159
        %v1161 = vsel %vm1160, %v1152, %v1157
        %v1162 = vmul.f32 %v1145, %v1161
        %v1164 = vperm.slane %v1131, 0
        %v1166 = vmul.f32 %v1162, %v1164
        %v1168 = vperm.slane %v1132, 0
        %v1170 = vadd.f32 %v1166, %v1168
        %v1171 = vpack.c.bf16 %v1170, %v1170
        %v1172 = vld [vmem:[%s1106] sm:$0xf]
        %v1173 = vld [vmem:[%s1106 + $0x4] sm:$0xf]
        %v1174 = vld [vmem:[%s1106 + $0x8] sm:$0xf]
        %v1175 = vld [vmem:[%s1106 + $0xc] sm:$0xf]
        %v1176 = vld [vmem:[%s913] sm:$0x1]
        %v1178 = vperm.slane %v1176, 0
        %v1184 = vunpack.c.l.b16 %v1172
        %v1185 = vunpack.c.l.b16 %v1173
        %v1186 = vunpack.c.l.b16 %v1174
        %v1187 = vunpack.c.l.b16 %v1175
        %v1188 = vpack.c.b16 %v1185, %v1184
        %v1189 = vpack.c.b16 %v1187, %v1186
        %v1193 = vsel %vm1133, %v1171, 0
        %1195 = vmatpush.bf16.msra.mxu0 0
        %1196 = vmatpush.bf16.msra.mxu0 0
        %1197 = vmatpush.bf16.msra.mxu0 0
        %1198 = vmatpush.bf16.msra.mxu0 0
        %1199 = vmatpush.bf16.msra.mxu0 0
        %1200 = vmatpush.bf16.msra.mxu0 0
        %1201 = vmatpush.bf16.msra.mxu0 %v1189
        %1202 = vmatpush.bf16.msra.mxu0 %v1188
        %1203 = vmatmul.bf16.gmra.mxu0 %v1193
        %v1204 = vpop.f32.mrf.mxu0
        %v1205 = vadd.f32 %v1178, %v1204
        %v1206 = vpop.f32.mrf.mxu0
        %1207 = vdwg.mxu0
        %1209 = vrot.lane.b32.xlu0 %v1205, 120
        %v1210 = vpop.permute.xlu0 %1209
        %1212 = vrot.lane.b32.xlu0 %v1205, 112
        %v1213 = vpop.permute.xlu0 %1212
        %1215 = vrot.lane.b32.xlu0 %v1205, 104
        %v1216 = vpop.permute.xlu0 %1215
        %v1218 = vrot.slane %v1213, 4
        %vm1219 = vcmask 1047556
        %v1220 = vsel %vm1219, %v1218, %v1205
        %v1221 = vrot.slane %v1205, 4
        %v1222 = vsel %vm1219, %v1213, %v1221
        %v1224 = vunpack.c.l.s4 1983009808
        %v1225 = vunpack.c.0.s8 %v1224
        %v1226 = vperm.slane %v1220, %v1225
        %v1228 = vunpack.c.l.s4 1983009808
        %v1229 = vunpack.c.0.s8 %v1228
        %v1230 = vperm.slane %v1222, %v1229
        %v1231 = vrot.slane %v1216, 4
        %v1232 = vsel %vm1219, %v1231, %v1210
        %v1233 = vrot.slane %v1210, 4
        %v1234 = vsel %vm1219, %v1216, %v1233
        %v1236 = vunpack.c.l.s4 1983009808
        %v1237 = vunpack.c.0.s8 %v1236
        %v1238 = vperm.slane %v1232, %v1237
        %v1240 = vunpack.c.l.s4 1983009808
        %v1241 = vunpack.c.0.s8 %v1240
        %v1242 = vperm.slane %v1234, %v1241
        %v1243 = vrot.slane %v1238, 4
        %v1244 = vsel %vm1219, %v1243, %v1226
        %v1245 = vrot.slane %v1226, 4
        %v1246 = vsel %vm1219, %v1238, %v1245
        %v1248 = vunpack.c.l.s4 1934713408
        %v1249 = vunpack.c.0.s8 %v1248
        %v1250 = vperm.slane %v1244, %v1249
        %v1252 = vunpack.c.l.s4 1934713408
        %v1253 = vunpack.c.0.s8 %v1252
        %v1254 = vperm.slane %v1246, %v1253
        %v1255 = vrot.slane %v1242, 4
        %v1256 = vsel %vm1219, %v1255, %v1230
        %v1257 = vrot.slane %v1230, 4
        %v1258 = vsel %vm1219, %v1242, %v1257
        %v1260 = vunpack.c.l.s4 1934713408
        %v1261 = vunpack.c.0.s8 %v1260
        %v1262 = vperm.slane %v1256, %v1261
        %v1264 = vunpack.c.l.s4 1934713408
        %v1265 = vunpack.c.0.s8 %v1264
        %v1266 = vperm.slane %v1258, %v1265
        %v1267 = vrot.slane %v1250, 4
        %v1268 = vsel %vm1219, 0.0, %v1267
        %v1269 = vrot.slane %v1254, 4
        %v1270 = vsel %vm1219, 0.0, %v1269
        %v1271 = vrot.slane %v1262, 4
        %v1272 = vsel %vm1219, 0.0, %v1271
        %v1273 = vrot.slane %v1266, 4
        %v1274 = vsel %vm1219, 0.0, %v1273
        %v1275 = vsel %vm1219, %v1269, %v1250
        %v1277 = vunpack.c.l.s4 1983009808
        %v1278 = vunpack.c.0.s8 %v1277
        %v1279 = vperm.slane %v1275, %v1278
        %v1280 = vrot.slane %v1270, 4
        %v1281 = vsel %vm1219, %v1280, %v1268
        %v1283 = vunpack.c.l.s4 1983009808
        %v1284 = vunpack.c.0.s8 %v1283
        %v1285 = vperm.slane %v1281, %v1284
        %v1286 = vsel %vm1219, %v1273, %v1262
        %v1288 = vunpack.c.l.s4 1983009808
        %v1289 = vunpack.c.0.s8 %v1288
        %v1290 = vperm.slane %v1286, %v1289
        %v1291 = vrot.slane %v1274, 4
        %v1292 = vsel %vm1219, %v1291, %v1272
        %v1294 = vunpack.c.l.s4 1983009808
        %v1295 = vunpack.c.0.s8 %v1294
        %v1296 = vperm.slane %v1292, %v1295
        %v1297 = vrot.slane %v1285, 4
        %v1298 = vsel %vm1219, %v1297, %v1279
        %v1299 = vrot.slane %v1279, 4
        %v1300 = vsel %vm1219, %v1285, %v1299
        %v1302 = vunpack.c.l.s4 1934713408
        %v1303 = vunpack.c.0.s8 %v1302
        %v1304 = vperm.slane %v1298, %v1303
        %v1306 = vunpack.c.l.s4 1934713408
        %v1307 = vunpack.c.0.s8 %v1306
        %v1308 = vperm.slane %v1300, %v1307
        %v1309 = vrot.slane %v1296, 4
        %v1310 = vsel %vm1219, %v1309, %v1290
        %v1311 = vrot.slane %v1290, 4
        %v1312 = vsel %vm1219, %v1296, %v1311
        %v1314 = vunpack.c.l.s4 1934713408
        %v1315 = vunpack.c.0.s8 %v1314
        %v1316 = vperm.slane %v1310, %v1315
        %v1318 = vunpack.c.l.s4 1934713408
        %v1319 = vunpack.c.0.s8 %v1318
        %v1320 = vperm.slane %v1312, %v1319
        %v1321 = vrot.slane %v1316, 4
        %v1322 = vsel %vm1219, %v1321, %v1304
        %v1323 = vrot.slane %v1304, 4
        %v1324 = vsel %vm1219, %v1316, %v1323
        %v1325 = vrot.slane %v1320, 4
        %v1326 = vsel %vm1219, %v1325, %v1308
        %v1327 = vrot.slane %v1308, 4
        %v1328 = vsel %vm1219, %v1320, %v1327
        %v1329 = vpack.c.bf16 %v1322, %v1322
        %v1330 = vpack.c.bf16 %v1324, %v1324
        %v1331 = vpack.c.bf16 %v1326, %v1326
        %v1332 = vpack.c.bf16 %v1328, %v1328
        %1333 = vrot.lane.b32.xlu0 %v1205, 96
        %v1334 = vpop.permute.xlu0 %1333
        %1335 = vrot.lane.b32.xlu0 %v1210, 96
        %v1336 = vpop.permute.xlu0 %1335
        %1337 = vrot.lane.b32.xlu0 %v1213, 96
        %v1338 = vpop.permute.xlu0 %1337
        %1339 = vrot.lane.b32.xlu0 %v1216, 96
        %v1340 = vpop.permute.xlu0 %1339
        %v1345 = vrot.slane %v1338, 4
        %v1346 = vsel %vm1219, %v1345, %v1334
        %v1347 = vrot.slane %v1334, 4
        %v1348 = vsel %vm1219, %v1338, %v1347
        %v1350 = vunpack.c.l.s4 1983009808
        %v1351 = vunpack.c.0.s8 %v1350
        %v1352 = vperm.slane %v1346, %v1351
        %v1354 = vunpack.c.l.s4 1983009808
        %v1355 = vunpack.c.0.s8 %v1354
        %v1356 = vperm.slane %v1348, %v1355
        %v1357 = vrot.slane %v1340, 4
        %v1358 = vsel %vm1219, %v1357, %v1336
        %v1359 = vrot.slane %v1336, 4
        %v1360 = vsel %vm1219, %v1340, %v1359
        %v1362 = vunpack.c.l.s4 1983009808
        %v1363 = vunpack.c.0.s8 %v1362
        %v1364 = vperm.slane %v1358, %v1363
        %v1366 = vunpack.c.l.s4 1983009808
        %v1367 = vunpack.c.0.s8 %v1366
        %v1368 = vperm.slane %v1360, %v1367
        %v1369 = vrot.slane %v1364, 4
        %v1370 = vsel %vm1219, %v1369, %v1352
        %v1371 = vrot.slane %v1352, 4
        %v1372 = vsel %vm1219, %v1364, %v1371
        %v1374 = vunpack.c.l.s4 1934713408
        %v1375 = vunpack.c.0.s8 %v1374
        %v1376 = vperm.slane %v1370, %v1375
        %v1378 = vunpack.c.l.s4 1934713408
        %v1379 = vunpack.c.0.s8 %v1378
        %v1380 = vperm.slane %v1372, %v1379
        %v1381 = vrot.slane %v1368, 4
        %v1382 = vsel %vm1219, %v1381, %v1356
        %v1383 = vrot.slane %v1356, 4
        %v1384 = vsel %vm1219, %v1368, %v1383
        %v1386 = vunpack.c.l.s4 1934713408
        %v1387 = vunpack.c.0.s8 %v1386
        %v1388 = vperm.slane %v1382, %v1387
        %v1390 = vunpack.c.l.s4 1934713408
        %v1391 = vunpack.c.0.s8 %v1390
        %v1392 = vperm.slane %v1384, %v1391
        %v1393 = vrot.slane %v1376, 4
        %v1394 = vsel %vm1219, 0.0, %v1393
        %v1395 = vrot.slane %v1380, 4
        %v1396 = vsel %vm1219, 0.0, %v1395
        %v1397 = vrot.slane %v1388, 4
        %v1398 = vsel %vm1219, 0.0, %v1397
        %v1399 = vrot.slane %v1392, 4
        %v1400 = vsel %vm1219, 0.0, %v1399
        %v1401 = vsel %vm1219, %v1395, %v1376
        %v1403 = vunpack.c.l.s4 1983009808
        %v1404 = vunpack.c.0.s8 %v1403
        %v1405 = vperm.slane %v1401, %v1404
        %v1406 = vrot.slane %v1396, 4
        %v1407 = vsel %vm1219, %v1406, %v1394
        %v1409 = vunpack.c.l.s4 1983009808
        %v1410 = vunpack.c.0.s8 %v1409
        %v1411 = vperm.slane %v1407, %v1410
        %v1412 = vsel %vm1219, %v1399, %v1388
        %v1414 = vunpack.c.l.s4 1983009808
        %v1415 = vunpack.c.0.s8 %v1414
        %v1416 = vperm.slane %v1412, %v1415
        %v1417 = vrot.slane %v1400, 4
        %v1418 = vsel %vm1219, %v1417, %v1398
        %v1420 = vunpack.c.l.s4 1983009808
        %v1421 = vunpack.c.0.s8 %v1420
        %v1422 = vperm.slane %v1418, %v1421
        %v1423 = vrot.slane %v1411, 4
        %v1424 = vsel %vm1219, %v1423, %v1405
        %v1425 = vrot.slane %v1405, 4
        %v1426 = vsel %vm1219, %v1411, %v1425
        %v1428 = vunpack.c.l.s4 1934713408
        %v1429 = vunpack.c.0.s8 %v1428
        %v1430 = vperm.slane %v1424, %v1429
        %v1432 = vunpack.c.l.s4 1934713408
        %v1433 = vunpack.c.0.s8 %v1432
        %v1434 = vperm.slane %v1426, %v1433
        %v1435 = vrot.slane %v1422, 4
        %v1436 = vsel %vm1219, %v1435, %v1416
        %v1437 = vrot.slane %v1416, 4
        %v1438 = vsel %vm1219, %v1422, %v1437
        %v1440 = vunpack.c.l.s4 1934713408
        %v1441 = vunpack.c.0.s8 %v1440
        %v1442 = vperm.slane %v1436, %v1441
        %v1444 = vunpack.c.l.s4 1934713408
        %v1445 = vunpack.c.0.s8 %v1444
        %v1446 = vperm.slane %v1438, %v1445
        %v1447 = vrot.slane %v1442, 4
        %v1448 = vsel %vm1219, %v1447, %v1430
        %v1449 = vrot.slane %v1430, 4
        %v1450 = vsel %vm1219, %v1442, %v1449
        %v1451 = vrot.slane %v1446, 4
        %v1452 = vsel %vm1219, %v1451, %v1434
        %v1453 = vrot.slane %v1434, 4
        %v1454 = vsel %vm1219, %v1446, %v1453
        %v1455 = vpack.c.bf16 %v1448, %v1448
        %v1456 = vpack.c.bf16 %v1450, %v1450
        %v1457 = vpack.c.bf16 %v1452, %v1452
        %v1458 = vpack.c.bf16 %v1454, %v1454
        %1459 = vrot.lane.b32.xlu0 %v1205, 64
        %v1460 = vpop.permute.xlu0 %1459
        %1461 = vrot.lane.b32.xlu0 %v1210, 64
        %v1462 = vpop.permute.xlu0 %1461
        %1463 = vrot.lane.b32.xlu0 %v1213, 64
        %v1464 = vpop.permute.xlu0 %1463
        %1465 = vrot.lane.b32.xlu0 %v1216, 64
        %v1466 = vpop.permute.xlu0 %1465
        %v1471 = vrot.slane %v1464, 4
        %v1472 = vsel %vm1219, %v1471, %v1460
        %v1473 = vrot.slane %v1460, 4
        %v1474 = vsel %vm1219, %v1464, %v1473
        %v1476 = vunpack.c.l.s4 1983009808
        %v1477 = vunpack.c.0.s8 %v1476
        %v1478 = vperm.slane %v1472, %v1477
        %v1480 = vunpack.c.l.s4 1983009808
        %v1481 = vunpack.c.0.s8 %v1480
        %v1482 = vperm.slane %v1474, %v1481
        %v1483 = vrot.slane %v1466, 4
        %v1484 = vsel %vm1219, %v1483, %v1462
        %v1485 = vrot.slane %v1462, 4
        %v1486 = vsel %vm1219, %v1466, %v1485
        %v1488 = vunpack.c.l.s4 1983009808
        %v1489 = vunpack.c.0.s8 %v1488
        %v1490 = vperm.slane %v1484, %v1489
        %v1492 = vunpack.c.l.s4 1983009808
        %v1493 = vunpack.c.0.s8 %v1492
        %v1494 = vperm.slane %v1486, %v1493
        %v1495 = vrot.slane %v1490, 4
        %v1496 = vsel %vm1219, %v1495, %v1478
        %v1497 = vrot.slane %v1478, 4
        %v1498 = vsel %vm1219, %v1490, %v1497
        %v1500 = vunpack.c.l.s4 1934713408
        %v1501 = vunpack.c.0.s8 %v1500
        %v1502 = vperm.slane %v1496, %v1501
        %v1504 = vunpack.c.l.s4 1934713408
        %v1505 = vunpack.c.0.s8 %v1504
        %v1506 = vperm.slane %v1498, %v1505
        %v1507 = vrot.slane %v1494, 4
        %v1508 = vsel %vm1219, %v1507, %v1482
        %v1509 = vrot.slane %v1482, 4
        %v1510 = vsel %vm1219, %v1494, %v1509
        %v1512 = vunpack.c.l.s4 1934713408
        %v1513 = vunpack.c.0.s8 %v1512
        %v1514 = vperm.slane %v1508, %v1513
        %v1516 = vunpack.c.l.s4 1934713408
        %v1517 = vunpack.c.0.s8 %v1516
        %v1518 = vperm.slane %v1510, %v1517
        %v1519 = vrot.slane %v1502, 4
        %v1520 = vsel %vm1219, 0.0, %v1519
        %v1521 = vrot.slane %v1506, 4
        %v1522 = vsel %vm1219, 0.0, %v1521
        %v1523 = vrot.slane %v1514, 4
        %v1524 = vsel %vm1219, 0.0, %v1523
        %v1525 = vrot.slane %v1518, 4
        %v1526 = vsel %vm1219, 0.0, %v1525
        %v1527 = vsel %vm1219, %v1521, %v1502
        %v1529 = vunpack.c.l.s4 1983009808
        %v1530 = vunpack.c.0.s8 %v1529
        %v1531 = vperm.slane %v1527, %v1530
        %v1532 = vrot.slane %v1522, 4
        %v1533 = vsel %vm1219, %v1532, %v1520
        %v1535 = vunpack.c.l.s4 1983009808
        %v1536 = vunpack.c.0.s8 %v1535
        %v1537 = vperm.slane %v1533, %v1536
        %v1538 = vsel %vm1219, %v1525, %v1514
        %v1540 = vunpack.c.l.s4 1983009808
        %v1541 = vunpack.c.0.s8 %v1540
        %v1542 = vperm.slane %v1538, %v1541
        %v1543 = vrot.slane %v1526, 4
        %v1544 = vsel %vm1219, %v1543, %v1524
        %v1546 = vunpack.c.l.s4 1983009808
        %v1547 = vunpack.c.0.s8 %v1546
        %v1548 = vperm.slane %v1544, %v1547
        %v1549 = vrot.slane %v1537, 4
        %v1550 = vsel %vm1219, %v1549, %v1531
        %v1551 = vrot.slane %v1531, 4
        %v1552 = vsel %vm1219, %v1537, %v1551
        %v1554 = vunpack.c.l.s4 1934713408
        %v1555 = vunpack.c.0.s8 %v1554
        %v1556 = vperm.slane %v1550, %v1555
        %v1558 = vunpack.c.l.s4 1934713408
        %v1559 = vunpack.c.0.s8 %v1558
        %v1560 = vperm.slane %v1552, %v1559
        %v1561 = vrot.slane %v1548, 4
        %v1562 = vsel %vm1219, %v1561, %v1542
        %v1563 = vrot.slane %v1542, 4
        %v1564 = vsel %vm1219, %v1548, %v1563
        %v1566 = vunpack.c.l.s4 1934713408
        %v1567 = vunpack.c.0.s8 %v1566
        %v1568 = vperm.slane %v1562, %v1567
        %v1570 = vunpack.c.l.s4 1934713408
        %v1571 = vunpack.c.0.s8 %v1570
        %v1572 = vperm.slane %v1564, %v1571
        %v1573 = vrot.slane %v1568, 4
        %v1574 = vsel %vm1219, %v1573, %v1556
        %v1575 = vrot.slane %v1556, 4
        %v1576 = vsel %vm1219, %v1568, %v1575
        %v1577 = vrot.slane %v1572, 4
        %v1578 = vsel %vm1219, %v1577, %v1560
        %v1579 = vrot.slane %v1560, 4
        %v1580 = vsel %vm1219, %v1572, %v1579
        %v1581 = vpack.c.bf16 %v1574, %v1574
        %v1582 = vpack.c.bf16 %v1576, %v1576
        %v1583 = vpack.c.bf16 %v1578, %v1578
        %v1584 = vpack.c.bf16 %v1580, %v1580
        %vm1585 = vcmask 64512
        %v1587 = vsel %vm1585, %v1329, 0
        %v1590 = vsel %vm1585, %v1455, 0
        %1592 = vmatpush.bf16.xpose.msra.mxu0 0
        %1593 = vmatpush.bf16.xpose.msra.mxu0 0
        %1594 = vmatpush.bf16.xpose.msra.mxu0 0
        %1595 = vmatpush.bf16.xpose.msra.mxu0 0
        %1596 = vmatpush.bf16.xpose.msra.mxu0 0
        %1597 = vmatpush.bf16.xpose.msra.mxu0 0
        %1598 = vmatpush.bf16.xpose.msra.mxu0 0
        %1599 = vmatpush.bf16.xpose.msra.mxu0 %v1590
        %1600 = vmatmul.bf16.gmra.mxu0 %v1587
        %v1601 = vpop.f32.mrf.mxu0
        %v1602 = vadd.f32 0.0, %v1601
        %v1603 = vpop.f32.mrf.mxu0
        %1604 = vdwg.mxu0
        %v1606 = vsel %vm1585, %v1330, 0
        %v1609 = vsel %vm1585, %v1456, 0
        %1611 = vmatpush.bf16.xpose.msra.mxu0 0
        %1612 = vmatpush.bf16.xpose.msra.mxu0 0
        %1613 = vmatpush.bf16.xpose.msra.mxu0 0
        %1614 = vmatpush.bf16.xpose.msra.mxu0 0
        %1615 = vmatpush.bf16.xpose.msra.mxu0 0
        %1616 = vmatpush.bf16.xpose.msra.mxu0 0
        %1617 = vmatpush.bf16.xpose.msra.mxu0 0
        %1618 = vmatpush.bf16.xpose.msra.mxu0 %v1609
        %1619 = vmatmul.bf16.gmra.mxu0 %v1606
        %v1620 = vpop.f32.mrf.mxu0
        %v1621 = vadd.f32 0.0, %v1620
        %v1622 = vpop.f32.mrf.mxu0
        %1623 = vdwg.mxu0
        %v1625 = vsel %vm1585, %v1331, 0
        %v1628 = vsel %vm1585, %v1457, 0
        %1630 = vmatpush.bf16.xpose.msra.mxu0 0
        %1631 = vmatpush.bf16.xpose.msra.mxu0 0
        %1632 = vmatpush.bf16.xpose.msra.mxu0 0
        %1633 = vmatpush.bf16.xpose.msra.mxu0 0
        %1634 = vmatpush.bf16.xpose.msra.mxu0 0
        %1635 = vmatpush.bf16.xpose.msra.mxu0 0
        %1636 = vmatpush.bf16.xpose.msra.mxu0 0
        %1637 = vmatpush.bf16.xpose.msra.mxu0 %v1628
        %1638 = vmatmul.bf16.gmra.mxu0 %v1625
        %v1639 = vpop.f32.mrf.mxu0
        %v1640 = vadd.f32 0.0, %v1639
        %v1641 = vpop.f32.mrf.mxu0
        %1642 = vdwg.mxu0
        %v1644 = vsel %vm1585, %v1332, 0
        %v1647 = vsel %vm1585, %v1458, 0
        %1649 = vmatpush.bf16.xpose.msra.mxu0 0
        %1650 = vmatpush.bf16.xpose.msra.mxu0 0
        %1651 = vmatpush.bf16.xpose.msra.mxu0 0
        %1652 = vmatpush.bf16.xpose.msra.mxu0 0
        %1653 = vmatpush.bf16.xpose.msra.mxu0 0
        %1654 = vmatpush.bf16.xpose.msra.mxu0 0
        %1655 = vmatpush.bf16.xpose.msra.mxu0 0
        %1656 = vmatpush.bf16.xpose.msra.mxu0 %v1647
        %1657 = vmatmul.bf16.gmra.mxu0 %v1644
        %v1658 = vpop.f32.mrf.mxu0
        %v1659 = vadd.f32 0.0, %v1658
        %v1660 = vpop.f32.mrf.mxu0
        %1661 = vdwg.mxu0
        %v1662 = vmul.f32 %v1602, 0.35355338
        %v1663 = vmul.f32 %v1621, 0.35355338
        %v1664 = vmul.f32 %v1640, 0.35355338
        %v1665 = vmul.f32 %v1659, 0.35355338
        %v1666 = vsel %vm1585, %v1662, -inf
        %1667 = vmax.xlane.f32.xlu0 %v1666
        %v1668 = vpop.xlane.xlu0 %1667
        %v1669 = vsel %vm1585, %v1663, -inf
        %1670 = vmax.xlane.f32.xlu0 %v1669
        %v1671 = vpop.xlane.xlu0 %1670
        %v1672 = vsel %vm1585, %v1664, -inf
        %1673 = vmax.xlane.f32.xlu0 %v1672
        %v1674 = vpop.xlane.xlu0 %1673
        %v1675 = vsel %vm1585, %v1665, -inf
        %1676 = vmax.xlane.f32.xlu0 %v1675
        %v1677 = vpop.xlane.xlu0 %1676
        %v1678 = vsub.f32 %v1662, %v1668
        %v1679 = vsub.f32 %v1663, %v1671
        %v1680 = vsub.f32 %v1664, %v1674
        %v1681 = vsub.f32 %v1665, %v1677
        %v1682 = vmul.f32 %v1678, 1.442695
        %v1683 = vpow.pop %v1682
        %v1684 = vmul.f32 %v1679, 1.442695
        %v1685 = vpow.pop %v1684
        %v1686 = vmul.f32 %v1680, 1.442695
        %v1687 = vpow.pop %v1686
        %v1688 = vmul.f32 %v1681, 1.442695
        %v1689 = vpow.pop %v1688
        %v1690 = vsel %vm1585, %v1683, 0.0
        %1691 = vadd.xlane.f32.xlu0 %v1690
        %v1692 = vpop.xlane.xlu0 %1691
        %v1693 = vsel %vm1585, %v1685, 0.0
        %1694 = vadd.xlane.f32.xlu0 %v1693
        %v1695 = vpop.xlane.xlu0 %1694
        %v1696 = vsel %vm1585, %v1687, 0.0
        %1697 = vadd.xlane.f32.xlu0 %v1696
        %v1698 = vpop.xlane.xlu0 %1697
        %v1699 = vsel %vm1585, %v1689, 0.0
        %1700 = vadd.xlane.f32.xlu0 %v1699
        %v1701 = vpop.xlane.xlu0 %1700
        %v1702 = vrcp.pop %v1692
        %v1703 = vrcp.pop %v1695
        %v1704 = vrcp.pop %v1698
        %v1705 = vrcp.pop %v1701
        %v1706 = vmul.f32 %v1683, %v1702
        %v1707 = vmul.f32 %v1685, %v1703
        %v1708 = vmul.f32 %v1687, %v1704
        %v1709 = vmul.f32 %v1689, %v1705
        %v1710 = vpack.c.bf16 %v1706, %v1706
        %v1711 = vpack.c.bf16 %v1707, %v1707
        %v1712 = vpack.c.bf16 %v1708, %v1708
        %v1713 = vpack.c.bf16 %v1709, %v1709
        %v1715 = vsel %vm1585, %v1710, 0
        %vm1717 = vcmask 1043456
        %v1719 = vsel %vm1717, %v1581, 0
        %1721 = vmatpush.bf16.msra.mxu0 0
        %1722 = vmatpush.bf16.msra.mxu0 0
        %1723 = vmatpush.bf16.msra.mxu0 0
        %1724 = vmatpush.bf16.msra.mxu0 0
        %1725 = vmatpush.bf16.msra.mxu0 0
        %1726 = vmatpush.bf16.msra.mxu0 0
        %1727 = vmatpush.bf16.msra.mxu0 0
        %1728 = vmatpush.bf16.msra.mxu0 %v1719
        %1729 = vmatmul.bf16.gmra.mxu0 %v1715
        %v1730 = vpop.f32.mrf.mxu0
        %v1731 = vadd.f32 0.0, %v1730
        %v1732 = vpop.f32.mrf.mxu0
        %1733 = vdwg.mxu0
        %v1735 = vsel %vm1585, %v1711, 0
        %v1738 = vsel %vm1717, %v1582, 0
        %1740 = vmatpush.bf16.msra.mxu0 0
        %1741 = vmatpush.bf16.msra.mxu0 0
        %1742 = vmatpush.bf16.msra.mxu0 0
        %1743 = vmatpush.bf16.msra.mxu0 0
        %1744 = vmatpush.bf16.msra.mxu0 0
        %1745 = vmatpush.bf16.msra.mxu0 0
        %1746 = vmatpush.bf16.msra.mxu0 0
        %1747 = vmatpush.bf16.msra.mxu0 %v1738
        %1748 = vmatmul.bf16.gmra.mxu0 %v1735
        %v1749 = vpop.f32.mrf.mxu0
        %v1750 = vadd.f32 0.0, %v1749
        %v1751 = vpop.f32.mrf.mxu0
        %1752 = vdwg.mxu0
        %v1754 = vsel %vm1585, %v1712, 0
        %v1757 = vsel %vm1717, %v1583, 0
        %1759 = vmatpush.bf16.msra.mxu0 0
        %1760 = vmatpush.bf16.msra.mxu0 0
        %1761 = vmatpush.bf16.msra.mxu0 0
        %1762 = vmatpush.bf16.msra.mxu0 0
        %1763 = vmatpush.bf16.msra.mxu0 0
        %1764 = vmatpush.bf16.msra.mxu0 0
        %1765 = vmatpush.bf16.msra.mxu0 0
        %1766 = vmatpush.bf16.msra.mxu0 %v1757
        %1767 = vmatmul.bf16.gmra.mxu0 %v1754
        %v1768 = vpop.f32.mrf.mxu0
        %v1769 = vadd.f32 0.0, %v1768
        %v1770 = vpop.f32.mrf.mxu0
        %1771 = vdwg.mxu0
        %v1773 = vsel %vm1585, %v1713, 0
        %v1776 = vsel %vm1717, %v1584, 0
        %1778 = vmatpush.bf16.msra.mxu0 0
        %1779 = vmatpush.bf16.msra.mxu0 0
        %1780 = vmatpush.bf16.msra.mxu0 0
        %1781 = vmatpush.bf16.msra.mxu0 0
        %1782 = vmatpush.bf16.msra.mxu0 0
        %1783 = vmatpush.bf16.msra.mxu0 0
        %1784 = vmatpush.bf16.msra.mxu0 0
        %1785 = vmatpush.bf16.msra.mxu0 %v1776
        %1786 = vmatmul.bf16.gmra.mxu0 %v1773
        %v1787 = vpop.f32.mrf.mxu0
        %v1788 = vadd.f32 0.0, %v1787
        %v1789 = vpop.f32.mrf.mxu0
        %1790 = vdwg.mxu0
        %v1791 = vrot.slane %v1769, 4
        %v1792 = vsel %vm1219, %v1791, %v1731
        %v1793 = vrot.slane %v1731, 4
        %v1794 = vsel %vm1219, %v1769, %v1793
        %v1796 = vunpack.c.l.s4 1983009808
        %v1797 = vunpack.c.0.s8 %v1796
        %v1798 = vperm.slane %v1792, %v1797
        %v1800 = vunpack.c.l.s4 1983009808
        %v1801 = vunpack.c.0.s8 %v1800
        %v1802 = vperm.slane %v1794, %v1801
        %v1803 = vrot.slane %v1788, 4
        %v1804 = vsel %vm1219, %v1803, %v1750
        %v1805 = vrot.slane %v1750, 4
        %v1806 = vsel %vm1219, %v1788, %v1805
        %v1808 = vunpack.c.l.s4 1983009808
        %v1809 = vunpack.c.0.s8 %v1808
        %v1810 = vperm.slane %v1804, %v1809
        %v1812 = vunpack.c.l.s4 1983009808
        %v1813 = vunpack.c.0.s8 %v1812
        %v1814 = vperm.slane %v1806, %v1813
        %v1815 = vrot.slane %v1810, 4
        %v1816 = vsel %vm1219, %v1815, %v1798
        %v1817 = vrot.slane %v1798, 4
        %v1818 = vsel %vm1219, %v1810, %v1817
        %v1820 = vunpack.c.l.s4 1934713408
        %v1821 = vunpack.c.0.s8 %v1820
        %v1822 = vperm.slane %v1816, %v1821
        %v1824 = vunpack.c.l.s4 1934713408
        %v1825 = vunpack.c.0.s8 %v1824
        %v1826 = vperm.slane %v1818, %v1825
        %v1827 = vrot.slane %v1814, 4
        %v1828 = vsel %vm1219, %v1827, %v1802
        %v1829 = vrot.slane %v1802, 4
        %v1830 = vsel %vm1219, %v1814, %v1829
        %v1832 = vunpack.c.l.s4 1934713408
        %v1833 = vunpack.c.0.s8 %v1832
        %v1834 = vperm.slane %v1828, %v1833
        %v1836 = vunpack.c.l.s4 1934713408
        %v1837 = vunpack.c.0.s8 %v1836
        %v1838 = vperm.slane %v1830, %v1837
        %v1839 = vrot.slane %v1822, 4
        %v1840 = vsel %vm1219, 0.0, %v1839
        %v1841 = vrot.slane %v1826, 4
        %v1842 = vsel %vm1219, 0.0, %v1841
        %v1843 = vrot.slane %v1834, 4
        %v1844 = vsel %vm1219, 0.0, %v1843
        %v1845 = vrot.slane %v1838, 4
        %v1846 = vsel %vm1219, 0.0, %v1845
        %v1847 = vsel %vm1219, %v1841, %v1822
        %v1849 = vunpack.c.l.s4 1983009808
        %v1850 = vunpack.c.0.s8 %v1849
        %v1851 = vperm.slane %v1847, %v1850
        %v1852 = vrot.slane %v1842, 4
        %v1853 = vsel %vm1219, %v1852, %v1840
        %v1855 = vunpack.c.l.s4 1983009808
        %v1856 = vunpack.c.0.s8 %v1855
        %v1857 = vperm.slane %v1853, %v1856
        %v1858 = vsel %vm1219, %v1845, %v1834
        %v1860 = vunpack.c.l.s4 1983009808
        %v1861 = vunpack.c.0.s8 %v1860
        %v1862 = vperm.slane %v1858, %v1861
        %v1863 = vrot.slane %v1846, 4
        %v1864 = vsel %vm1219, %v1863, %v1844
        %v1866 = vunpack.c.l.s4 1983009808
        %v1867 = vunpack.c.0.s8 %v1866
        %v1868 = vperm.slane %v1864, %v1867
        %v1869 = vrot.slane %v1857, 4
        %v1870 = vsel %vm1219, %v1869, %v1851
        %v1871 = vrot.slane %v1851, 4
        %v1872 = vsel %vm1219, %v1857, %v1871
        %v1874 = vunpack.c.l.s4 1934713408
        %v1875 = vunpack.c.0.s8 %v1874
        %v1876 = vperm.slane %v1870, %v1875
        %v1878 = vunpack.c.l.s4 1934713408
        %v1879 = vunpack.c.0.s8 %v1878
        %v1880 = vperm.slane %v1872, %v1879
        %v1881 = vrot.slane %v1868, 4
        %v1882 = vsel %vm1219, %v1881, %v1862
        %v1883 = vrot.slane %v1862, 4
        %v1884 = vsel %vm1219, %v1868, %v1883
        %v1886 = vunpack.c.l.s4 1934713408
        %v1887 = vunpack.c.0.s8 %v1886
        %v1888 = vperm.slane %v1882, %v1887
        %v1890 = vunpack.c.l.s4 1934713408
        %v1891 = vunpack.c.0.s8 %v1890
        %v1892 = vperm.slane %v1884, %v1891
        %v1893 = vrot.slane %v1888, 4
        %v1894 = vsel %vm1219, %v1893, %v1876
        %v1895 = vrot.slane %v1876, 4
        %v1896 = vsel %vm1219, %v1888, %v1895
        %v1897 = vrot.slane %v1892, 4
        %v1898 = vsel %vm1219, %v1897, %v1880
        %v1899 = vrot.slane %v1880, 4
        %v1900 = vsel %vm1219, %v1892, %v1899
        %1902 = vrot.lane.b32.xlu0 %v1896, 8
        %v1903 = vpop.permute.xlu0 %1902
        %1906 = vrot.lane.b32.xlu0 %v1898, 16
        %v1907 = vpop.permute.xlu0 %1906
        %1910 = vrot.lane.b32.xlu0 %v1900, 24
        %v1911 = vpop.permute.xlu0 %1910
        %v1913 = vsel %vm1585, %v1894, %v1903
        %vm1914 = vcmask 130048
        %v1915 = vsel %vm1914, %v1913, %v1907
        %vm1916 = vcmask 195584
        %v1917 = vsel %vm1916, %v1915, %v1911
        %v1918 = vpack.c.bf16 %v1917, %v1917
        %v1919 = vld [vmem:[%s1111] sm:$0xf]
        %v1920 = vld [vmem:[%s1111 + $0x4] sm:$0xf]
        %v1921 = vld [vmem:[%s1111 + $0x8] sm:$0xf]
        %v1922 = vld [vmem:[%s1111 + $0xc] sm:$0xf]
        %v1923 = vld [vmem:[%s922] sm:$0x1]
        %v1925 = vperm.slane %v1923, 0
        %v1931 = vunpack.c.l.b16 %v1919
        %v1932 = vunpack.c.l.b16 %v1920
        %v1933 = vunpack.c.l.b16 %v1921
        %v1934 = vunpack.c.l.b16 %v1922
        %v1935 = vpack.c.b16 %v1932, %v1931
        %v1936 = vpack.c.b16 %v1934, %v1933
        %v1940 = vsel %vm1133, %v1918, 0
        %1942 = vmatpush.bf16.msra.mxu0 0
        %1943 = vmatpush.bf16.msra.mxu0 0
        %1944 = vmatpush.bf16.msra.mxu0 0
        %1945 = vmatpush.bf16.msra.mxu0 0
        %1946 = vmatpush.bf16.msra.mxu0 0
        %1947 = vmatpush.bf16.msra.mxu0 0
        %1948 = vmatpush.bf16.msra.mxu0 %v1936
        %1949 = vmatpush.bf16.msra.mxu0 %v1935
        %1950 = vmatmul.bf16.gmra.mxu0 %v1940
        %v1951 = vpop.f32.mrf.mxu0
        %v1952 = vadd.f32 %v1925, %v1951
        %v1953 = vpop.f32.mrf.mxu0
        %1954 = vdwg.mxu0
        %v1955 = vadd.f32 %v1130, %v1952
        %v1956 = vld [vmem:[%s931] sm:$0x1]
        %v1957 = vld [vmem:[%s940] sm:$0x1]
        %v1958 = vsel %vm1133, %v1955, 0.0
        %1959 = vadd.xlane.f32.xlu0 %v1958
        %v1960 = vpop.xlane.xlu0 %1959
        %v1961 = vmul.f32 %v1960, %v1143
        %v1962 = vsub.f32 %v1955, %v1961
        %v1963 = vmul.f32 %v1962, %v1962
        %v1964 = vsel %vm1133, %v1963, 0.0
        %1965 = vadd.xlane.f32.xlu0 %v1964
        %v1966 = vpop.xlane.xlu0 %1965
        %v1967 = vmul.f32 %v1966, %v1143
        %v1968 = vadd.f32 %v1967, 1e-05
        %v1969 = vrsqrt.pop %v1968
        %v1970 = vmul.f32 %v1969, %v1968
        %v1971 = vmul.f32 %v1970, %v1969
        %v1972 = vmul.f32 0.5, %v1971
        %v1973 = vsub.f32 1.5, %v1972
        %v1974 = vmul.f32 %v1969, %v1973
        %vm1975 = vweird.f32 %v1968
        %vm1976 = vweird.f32 %v1969
        %vm1977 = vmor %vm1975, %vm1976
        %v1978 = vsel %vm1977, %v1969, %v1974
        %v1979 = vmul.f32 %v1962, %v1978
        %v1981 = vperm.slane %v1956, 0
        %v1983 = vmul.f32 %v1979, %v1981
        %v1985 = vperm.slane %v1957, 0
        %v1987 = vadd.f32 %v1983, %v1985
        %v1988 = vpack.c.bf16 %v1987, %v1987
        %v1989 = vld [vmem:[%s1116] sm:$0xff]
        %v1990 = vld [vmem:[%s1116 + $0x8] sm:$0xff]
        %v1991 = vld [vmem:[%s1116 + $0x10] sm:$0xff]
        %v1992 = vld [vmem:[%s1116 + $0x18] sm:$0xff]
        %v1993 = vld [vmem:[%s950] sm:$0x3]
        %v1995 = vperm.slane %v1993, 0
        %v1996 = vperm.slane %v1993, 1
        %v2003 = vunpack.c.l.b16 %v1989
        %v2004 = vunpack.c.h.b16 %v1989
        %v2005 = vunpack.c.l.b16 %v1990
        %v2006 = vunpack.c.h.b16 %v1990
        %v2007 = vunpack.c.l.b16 %v1991
        %v2008 = vunpack.c.h.b16 %v1991
        %v2009 = vunpack.c.l.b16 %v1992
        %v2010 = vunpack.c.h.b16 %v1992
        %v2011 = vpack.c.b16 %v2005, %v2003
        %v2012 = vpack.c.b16 %v2006, %v2004
        %v2013 = vpack.c.b16 %v2009, %v2007
        %v2014 = vpack.c.b16 %v2010, %v2008
        %v2020 = vsel %vm1133, %v1988, 0
        %2022 = vmatpush.bf16.msra.mxu0 0
        %2023 = vmatpush.bf16.msra.mxu0 0
        %2024 = vmatpush.bf16.msra.mxu0 0
        %2025 = vmatpush.bf16.msra.mxu0 0
        %2026 = vmatpush.bf16.msra.mxu0 0
        %2027 = vmatpush.bf16.msra.mxu0 0
        %2028 = vmatpush.bf16.msra.mxu0 %v2013
        %2029 = vmatpush.bf16.msra.mxu0 %v2011
        %2030 = vmatmul.bf16.gmra.mxu0 %v2020
        %v2031 = vpop.f32.mrf.mxu0
        %v2032 = vadd.f32 %v1995, %v2031
        %v2033 = vpop.f32.mrf.mxu0
        %2034 = vdwg.mxu0
        %2035 = vmatpush.bf16.msra.mxu0 0
        %2036 = vmatpush.bf16.msra.mxu0 0
        %2037 = vmatpush.bf16.msra.mxu0 0
        %2038 = vmatpush.bf16.msra.mxu0 0
        %2039 = vmatpush.bf16.msra.mxu0 0
        %2040 = vmatpush.bf16.msra.mxu0 0
        %2041 = vmatpush.bf16.msra.mxu0 %v2014
        %2042 = vmatpush.bf16.msra.mxu0 %v2012
        %2043 = vmatmul.bf16.gmra.mxu0 %v2020
        %v2044 = vpop.f32.mrf.mxu0
        %v2045 = vadd.f32 %v1996, %v2044
        %v2046 = vpop.f32.mrf.mxu0
        %2047 = vdwg.mxu0
        %v2048 = vmul.f32 %v2032, %v2045
        %v2049 = vpack.c.bf16 %v2048, %v2048
        %v2050 = vld [vmem:[%s1121] sm:$0xf]
        %v2051 = vld [vmem:[%s1121 + $0x4] sm:$0xf]
        %v2052 = vld [vmem:[%s1121 + $0x8] sm:$0xf]
        %v2053 = vld [vmem:[%s1121 + $0xc] sm:$0xf]
        %v2054 = vld [vmem:[%s1121 + $0x10] sm:$0xf]
        %v2055 = vld [vmem:[%s1121 + $0x14] sm:$0xf]
        %v2056 = vld [vmem:[%s1121 + $0x18] sm:$0xf]
        %v2057 = vld [vmem:[%s1121 + $0x1c] sm:$0xf]
        %v2058 = vld [vmem:[%s1121 + $0x20] sm:$0xf]
        %v2059 = vld [vmem:[%s1121 + $0x24] sm:$0xf]
        %v2060 = vld [vmem:[%s1121 + $0x28] sm:$0xf]
        %v2061 = vld [vmem:[%s1121 + $0x2c] sm:$0xf]
        %v2062 = vld [vmem:[%s1121 + $0x30] sm:$0xf]
        %v2063 = vld [vmem:[%s1121 + $0x34] sm:$0xf]
        %v2064 = vld [vmem:[%s1121 + $0x38] sm:$0xf]
        %v2065 = vld [vmem:[%s1121 + $0x3c] sm:$0xf]
        %v2066 = vld [vmem:[%s959] sm:$0x1]
        %v2068 = vperm.slane %v2066, 0
        %v2086 = vunpack.c.l.b16 %v2050
        %v2087 = vunpack.c.l.b16 %v2051
        %v2088 = vunpack.c.l.b16 %v2052
        %v2089 = vunpack.c.l.b16 %v2053
        %v2090 = vunpack.c.l.b16 %v2054
        %v2091 = vunpack.c.l.b16 %v2055
        %v2092 = vunpack.c.l.b16 %v2056
        %v2093 = vunpack.c.l.b16 %v2057
        %v2094 = vunpack.c.l.b16 %v2058
        %v2095 = vunpack.c.l.b16 %v2059
        %v2096 = vunpack.c.l.b16 %v2060
        %v2097 = vunpack.c.l.b16 %v2061
        %v2098 = vunpack.c.l.b16 %v2062
        %v2099 = vunpack.c.l.b16 %v2063
        %v2100 = vunpack.c.l.b16 %v2064
        %v2101 = vunpack.c.l.b16 %v2065
        %v2102 = vpack.c.b16 %v2087, %v2086
        %v2103 = vpack.c.b16 %v2089, %v2088
        %v2104 = vpack.c.b16 %v2091, %v2090
        %v2105 = vpack.c.b16 %v2093, %v2092
        %v2106 = vpack.c.b16 %v2095, %v2094
        %v2107 = vpack.c.b16 %v2097, %v2096
        %v2108 = vpack.c.b16 %v2099, %v2098
        %v2109 = vpack.c.b16 %v2101, %v2100
        %2118 = vmatpush.bf16.msra.mxu0 %v2109
        %2119 = vmatpush.bf16.msra.mxu0 %v2108
        %2120 = vmatpush.bf16.msra.mxu0 %v2107
        %2121 = vmatpush.bf16.msra.mxu0 %v2106
        %2122 = vmatpush.bf16.msra.mxu0 %v2105
        %2123 = vmatpush.bf16.msra.mxu0 %v2104
        %2124 = vmatpush.bf16.msra.mxu0 %v2103
        %2125 = vmatpush.bf16.msra.mxu0 %v2102
        %2126 = vmatmul.bf16.gmra.mxu0 %v2049
        %v2127 = vpop.f32.mrf.mxu0
        %v2128 = vadd.f32 %v2068, %v2127
        %v2129 = vpop.f32.mrf.mxu0
        %2130 = vdwg.mxu0
        %v2131 = vadd.f32 %v1955, %v2128
        %2132 = vst.msk [vmem:[#allocation2] sm:$0xff] %vm1133, %v2131
        %p2133 = scmp.eq.s32.totalorder %s58, 1
        // Predicated region
        $region165: #{tpu_custom_call.1} parent=107 // pred_check
          %p2134 = pneg %p2133
        $region166: #{tpu_custom_call.1} parent=107 // pred_check_branch
          %2136 = sbr.rel (%p2134) target = $region168
        $region167: #{tpu_custom_call.1} parent=107 // pred_region
          %v2137 = vld [vmem:[#allocation17] sm:$0xf]
          %v2138 = vpack.c.bf16 %v2131, %v2131
          %v2139 = vpack.c.bf16 %v2137, %v2137
          %v2140 = vld [vmem:[%s14] sm:$0xf]
          %v2141 = vld [vmem:[%s14 + $0x4] sm:$0xf]
          %v2142 = vld [vmem:[%s14 + $0x8] sm:$0xf]
          %v2143 = vld [vmem:[%s14 + $0xc] sm:$0xf]
          %v2144 = vld [vmem:[%s15] sm:$0x1]
          %v2146 = vperm.slane %v2144, 0
          %v2152 = vunpack.c.l.b16 %v2140
          %v2153 = vunpack.c.l.b16 %v2141
          %v2154 = vunpack.c.l.b16 %v2142
          %v2155 = vunpack.c.l.b16 %v2143
          %v2156 = vpack.c.b16 %v2153, %v2152
          %v2157 = vpack.c.b16 %v2155, %v2154
          %v2161 = vsel %vm1133, %v2139, 0
          %2163 = vmatpush.bf16.msra.mxu0 0
          %2164 = vmatpush.bf16.msra.mxu0 0
          %2165 = vmatpush.bf16.msra.mxu0 0
          %2166 = vmatpush.bf16.msra.mxu0 0
          %2167 = vmatpush.bf16.msra.mxu0 0
          %2168 = vmatpush.bf16.msra.mxu0 0
          %2169 = vmatpush.bf16.msra.mxu0 %v2157
          %2170 = vmatpush.bf16.msra.mxu0 %v2156
          %2171 = vmatmul.bf16.gmra.mxu0 %v2161
          %v2172 = vpop.f32.mrf.mxu0
          %v2173 = vadd.f32 %v2146, %v2172
          %v2174 = vpop.f32.mrf.mxu0
          %2175 = vdwg.mxu0
          %v2176 = vld [vmem:[#allocation18] sm:$0xf]
          %v2177 = vld [vmem:[#allocation18 + $0x4] sm:$0xf]
          %v2178 = vld [vmem:[#allocation18 + $0x8] sm:$0xf]
          %v2179 = vld [vmem:[#allocation18 + $0xc] sm:$0xf]
          %v2180 = vld [vmem:[#allocation20] sm:$0x1]
          %v2182 = vperm.slane %v2180, 0
          %v2188 = vunpack.c.l.b16 %v2176
          %v2189 = vunpack.c.l.b16 %v2177
          %v2190 = vunpack.c.l.b16 %v2178
          %v2191 = vunpack.c.l.b16 %v2179
          %v2192 = vpack.c.b16 %v2189, %v2188
          %v2193 = vpack.c.b16 %v2191, %v2190
          %v2197 = vsel %vm1133, %v2138, 0
          %2199 = vmatpush.bf16.msra.mxu0 0
          %2200 = vmatpush.bf16.msra.mxu0 0
          %2201 = vmatpush.bf16.msra.mxu0 0
          %2202 = vmatpush.bf16.msra.mxu0 0
          %2203 = vmatpush.bf16.msra.mxu0 0
          %2204 = vmatpush.bf16.msra.mxu0 0
          %2205 = vmatpush.bf16.msra.mxu0 %v2193
          %2206 = vmatpush.bf16.msra.mxu0 %v2192
          %2207 = vmatmul.bf16.gmra.mxu0 %v2197
          %v2208 = vpop.f32.mrf.mxu0
          %v2209 = vadd.f32 %v2182, %v2208
          %v2210 = vpop.f32.mrf.mxu0
          %2211 = vdwg.mxu0
          %v2212 = vld [vmem:[%s18] sm:$0xf]
          %v2213 = vld [vmem:[%s18 + $0x4] sm:$0xf]
          %v2214 = vld [vmem:[%s18 + $0x8] sm:$0xf]
          %v2215 = vld [vmem:[%s18 + $0xc] sm:$0xf]
          %v2216 = vld [vmem:[#allocation21] sm:$0x1]
          %v2218 = vperm.slane %v2216, 0
          %v2224 = vunpack.c.l.b16 %v2212
          %v2225 = vunpack.c.l.b16 %v2213
          %v2226 = vunpack.c.l.b16 %v2214
          %v2227 = vunpack.c.l.b16 %v2215
          %v2228 = vpack.c.b16 %v2225, %v2224
          %v2229 = vpack.c.b16 %v2227, %v2226
          %2232 = vmatpush.bf16.msra.mxu0 0
          %2233 = vmatpush.bf16.msra.mxu0 0
          %2234 = vmatpush.bf16.msra.mxu0 0
          %2235 = vmatpush.bf16.msra.mxu0 0
          %2236 = vmatpush.bf16.msra.mxu0 0
          %2237 = vmatpush.bf16.msra.mxu0 0
          %2238 = vmatpush.bf16.msra.mxu0 %v2229
          %2239 = vmatpush.bf16.msra.mxu0 %v2228
          %2240 = vmatmul.bf16.gmra.mxu0 %v2197
          %v2241 = vpop.f32.mrf.mxu0
          %v2242 = vadd.f32 %v2218, %v2241
          %v2243 = vpop.f32.mrf.mxu0
          %2244 = vdwg.mxu0
          %2246 = vrot.lane.b32.xlu0 %v2173, 120
          %v2247 = vpop.permute.xlu0 %2246
          %2249 = vrot.lane.b32.xlu0 %v2173, 112
          %v2250 = vpop.permute.xlu0 %2249
          %2252 = vrot.lane.b32.xlu0 %v2173, 104
          %v2253 = vpop.permute.xlu0 %2252
          %v2255 = vrot.slane %v2250, 4
          %v2256 = vsel %vm1219, %v2255, %v2173
          %v2258 = vunpack.c.l.s4 1983009808
          %v2259 = vunpack.c.0.s8 %v2258
          %v2260 = vperm.slane %v2256, %v2259
          %v2261 = vrot.slane %v2253, 4
          %v2262 = vsel %vm1219, %v2261, %v2247
          %v2264 = vunpack.c.l.s4 1983009808
          %v2265 = vunpack.c.0.s8 %v2264
          %v2266 = vperm.slane %v2262, %v2265
          %v2267 = vrot.slane %v2266, 4
          %v2268 = vsel %vm1219, %v2267, %v2260
          %v2269 = vrot.slane %v2260, 4
          %v2270 = vsel %vm1219, %v2266, %v2269
          %v2272 = vunpack.c.l.s4 1934713408
          %v2273 = vunpack.c.0.s8 %v2272
          %v2274 = vperm.slane %v2268, %v2273
          %v2276 = vunpack.c.l.s4 1934713408
          %v2277 = vunpack.c.0.s8 %v2276
          %v2278 = vperm.slane %v2270, %v2277
          %v2279 = vrot.slane %v2274, 4
          %v2280 = vsel %vm1219, 0.0, %v2279
          %v2281 = vrot.slane %v2278, 4
          %v2282 = vsel %vm1219, 0.0, %v2281
          %v2283 = vsel %vm1219, %v2281, %v2274
          %v2285 = vunpack.c.l.s4 1983009808
          %v2286 = vunpack.c.0.s8 %v2285
          %v2287 = vperm.slane %v2283, %v2286
          %v2288 = vrot.slane %v2282, 4
          %v2289 = vsel %vm1219, %v2288, %v2280
          %v2291 = vunpack.c.l.s4 1983009808
          %v2292 = vunpack.c.0.s8 %v2291
          %v2293 = vperm.slane %v2289, %v2292
          %v2294 = vrot.slane %v2293, 4
          %v2295 = vsel %vm1219, %v2294, %v2287
          %v2296 = vrot.slane %v2287, 4
          %v2297 = vsel %vm1219, %v2293, %v2296
          %v2299 = vunpack.c.l.s4 1934713408
          %v2300 = vunpack.c.0.s8 %v2299
          %v2301 = vperm.slane %v2295, %v2300
          %v2303 = vunpack.c.l.s4 1934713408
          %v2304 = vunpack.c.0.s8 %v2303
          %v2305 = vperm.slane %v2297, %v2304
          %v2306 = vrot.slane %v2301, 4
          %v2307 = vsel %vm1219, 0.0, %v2306
          %v2308 = vrot.slane %v2305, 4
          %v2309 = vsel %vm1219, 0.0, %v2308
          %v2310 = vpack.c.bf16 %v2301, %v2301
          %v2311 = vpack.c.bf16 %v2307, %v2307
          %v2312 = vpack.c.bf16 %v2305, %v2305
          %v2313 = vpack.c.bf16 %v2309, %v2309
          %2315 = vrot.lane.b32.xlu0 %v2209, 120
          %v2316 = vpop.permute.xlu0 %2315
          %2318 = vrot.lane.b32.xlu0 %v2209, 112
          %v2319 = vpop.permute.xlu0 %2318
          %2321 = vrot.lane.b32.xlu0 %v2209, 104
          %v2322 = vpop.permute.xlu0 %2321
          %v2324 = vrot.slane %v2319, 4
          %v2325 = vsel %vm1219, %v2324, %v2209
          %v2326 = vrot.slane %v2209, 4
          %v2327 = vsel %vm1219, %v2319, %v2326
          %v2329 = vunpack.c.l.s4 1983009808
          %v2330 = vunpack.c.0.s8 %v2329
          %v2331 = vperm.slane %v2325, %v2330
          %v2333 = vunpack.c.l.s4 1983009808
          %v2334 = vunpack.c.0.s8 %v2333
          %v2335 = vperm.slane %v2327, %v2334
          %v2336 = vrot.slane %v2322, 4
          %v2337 = vsel %vm1219, %v2336, %v2316
          %v2338 = vrot.slane %v2316, 4
          %v2339 = vsel %vm1219, %v2322, %v2338
          %v2341 = vunpack.c.l.s4 1983009808
          %v2342 = vunpack.c.0.s8 %v2341
          %v2343 = vperm.slane %v2337, %v2342
          %v2345 = vunpack.c.l.s4 1983009808
          %v2346 = vunpack.c.0.s8 %v2345
          %v2347 = vperm.slane %v2339, %v2346
          %v2348 = vrot.slane %v2343, 4
          %v2349 = vsel %vm1219, %v2348, %v2331
          %v2350 = vrot.slane %v2331, 4
          %v2351 = vsel %vm1219, %v2343, %v2350
          %v2353 = vunpack.c.l.s4 1934713408
          %v2354 = vunpack.c.0.s8 %v2353
          %v2355 = vperm.slane %v2349, %v2354
          %v2357 = vunpack.c.l.s4 1934713408
          %v2358 = vunpack.c.0.s8 %v2357
          %v2359 = vperm.slane %v2351, %v2358
          %v2360 = vrot.slane %v2347, 4
          %v2361 = vsel %vm1219, %v2360, %v2335
          %v2362 = vrot.slane %v2335, 4
          %v2363 = vsel %vm1219, %v2347, %v2362
          %v2365 = vunpack.c.l.s4 1934713408
          %v2366 = vunpack.c.0.s8 %v2365
          %v2367 = vperm.slane %v2361, %v2366
          %v2369 = vunpack.c.l.s4 1934713408
          %v2370 = vunpack.c.0.s8 %v2369
          %v2371 = vperm.slane %v2363, %v2370
          %v2372 = vrot.slane %v2355, 4
          %v2373 = vsel %vm1219, 0.0, %v2372
          %v2374 = vrot.slane %v2359, 4
          %v2375 = vsel %vm1219, 0.0, %v2374
          %v2376 = vrot.slane %v2367, 4
          %v2377 = vsel %vm1219, 0.0, %v2376
          %v2378 = vrot.slane %v2371, 4
          %v2379 = vsel %vm1219, 0.0, %v2378
          %v2380 = vsel %vm1219, %v2374, %v2355
          %v2382 = vunpack.c.l.s4 1983009808
          %v2383 = vunpack.c.0.s8 %v2382
          %v2384 = vperm.slane %v2380, %v2383
          %v2385 = vrot.slane %v2375, 4
          %v2386 = vsel %vm1219, %v2385, %v2373
          %v2388 = vunpack.c.l.s4 1983009808
          %v2389 = vunpack.c.0.s8 %v2388
          %v2390 = vperm.slane %v2386, %v2389
          %v2391 = vsel %vm1219, %v2378, %v2367
          %v2393 = vunpack.c.l.s4 1983009808
          %v2394 = vunpack.c.0.s8 %v2393
          %v2395 = vperm.slane %v2391, %v2394
          %v2396 = vrot.slane %v2379, 4
          %v2397 = vsel %vm1219, %v2396, %v2377
          %v2399 = vunpack.c.l.s4 1983009808
          %v2400 = vunpack.c.0.s8 %v2399
          %v2401 = vperm.slane %v2397, %v2400
          %v2402 = vrot.slane %v2390, 4
          %v2403 = vsel %vm1219, %v2402, %v2384
          %v2404 = vrot.slane %v2384, 4
          %v2405 = vsel %vm1219, %v2390, %v2404
          %v2407 = vunpack.c.l.s4 1934713408
          %v2408 = vunpack.c.0.s8 %v2407
          %v2409 = vperm.slane %v2403, %v2408
          %v2411 = vunpack.c.l.s4 1934713408
          %v2412 = vunpack.c.0.s8 %v2411
          %v2413 = vperm.slane %v2405, %v2412
          %v2414 = vrot.slane %v2401, 4
          %v2415 = vsel %vm1219, %v2414, %v2395
          %v2416 = vrot.slane %v2395, 4
          %v2417 = vsel %vm1219, %v2401, %v2416
          %v2419 = vunpack.c.l.s4 1934713408
          %v2420 = vunpack.c.0.s8 %v2419
          %v2421 = vperm.slane %v2415, %v2420
          %v2423 = vunpack.c.l.s4 1934713408
          %v2424 = vunpack.c.0.s8 %v2423
          %v2425 = vperm.slane %v2417, %v2424
          %v2426 = vrot.slane %v2421, 4
          %v2427 = vsel %vm1219, %v2426, %v2409
          %v2428 = vrot.slane %v2409, 4
          %v2429 = vsel %vm1219, %v2421, %v2428
          %v2430 = vrot.slane %v2425, 4
          %v2431 = vsel %vm1219, %v2430, %v2413
          %v2432 = vrot.slane %v2413, 4
          %v2433 = vsel %vm1219, %v2425, %v2432
          %v2434 = vpack.c.bf16 %v2427, %v2427
          %v2435 = vpack.c.bf16 %v2429, %v2429
          %v2436 = vpack.c.bf16 %v2431, %v2431
          %v2437 = vpack.c.bf16 %v2433, %v2433
          %2439 = vrot.lane.b32.xlu0 %v2242, 120
          %v2440 = vpop.permute.xlu0 %2439
          %2442 = vrot.lane.b32.xlu0 %v2242, 112
          %v2443 = vpop.permute.xlu0 %2442
          %2445 = vrot.lane.b32.xlu0 %v2242, 104
          %v2446 = vpop.permute.xlu0 %2445
          %v2448 = vrot.slane %v2443, 4
          %v2449 = vsel %vm1219, %v2448, %v2242
          %v2450 = vrot.slane %v2242, 4
          %v2451 = vsel %vm1219, %v2443, %v2450
          %v2453 = vunpack.c.l.s4 1983009808
          %v2454 = vunpack.c.0.s8 %v2453
          %v2455 = vperm.slane %v2449, %v2454
          %v2457 = vunpack.c.l.s4 1983009808
          %v2458 = vunpack.c.0.s8 %v2457
          %v2459 = vperm.slane %v2451, %v2458
          %v2460 = vrot.slane %v2446, 4
          %v2461 = vsel %vm1219, %v2460, %v2440
          %v2462 = vrot.slane %v2440, 4
          %v2463 = vsel %vm1219, %v2446, %v2462
          %v2465 = vunpack.c.l.s4 1983009808
          %v2466 = vunpack.c.0.s8 %v2465
          %v2467 = vperm.slane %v2461, %v2466
          %v2469 = vunpack.c.l.s4 1983009808
          %v2470 = vunpack.c.0.s8 %v2469
          %v2471 = vperm.slane %v2463, %v2470
          %v2472 = vrot.slane %v2467, 4
          %v2473 = vsel %vm1219, %v2472, %v2455
          %v2474 = vrot.slane %v2455, 4
          %v2475 = vsel %vm1219, %v2467, %v2474
          %v2477 = vunpack.c.l.s4 1934713408
          %v2478 = vunpack.c.0.s8 %v2477
          %v2479 = vperm.slane %v2473, %v2478
          %v2481 = vunpack.c.l.s4 1934713408
          %v2482 = vunpack.c.0.s8 %v2481
          %v2483 = vperm.slane %v2475, %v2482
          %v2484 = vrot.slane %v2471, 4
          %v2485 = vsel %vm1219, %v2484, %v2459
          %v2486 = vrot.slane %v2459, 4
          %v2487 = vsel %vm1219, %v2471, %v2486
          %v2489 = vunpack.c.l.s4 1934713408
          %v2490 = vunpack.c.0.s8 %v2489
          %v2491 = vperm.slane %v2485, %v2490
          %v2493 = vunpack.c.l.s4 1934713408
          %v2494 = vunpack.c.0.s8 %v2493
          %v2495 = vperm.slane %v2487, %v2494
          %v2496 = vrot.slane %v2479, 4
          %v2497 = vsel %vm1219, 0.0, %v2496
          %v2498 = vrot.slane %v2483, 4
          %v2499 = vsel %vm1219, 0.0, %v2498
          %v2500 = vrot.slane %v2491, 4
          %v2501 = vsel %vm1219, 0.0, %v2500
          %v2502 = vrot.slane %v2495, 4
          %v2503 = vsel %vm1219, 0.0, %v2502
          %v2504 = vsel %vm1219, %v2498, %v2479
          %v2506 = vunpack.c.l.s4 1983009808
          %v2507 = vunpack.c.0.s8 %v2506
          %v2508 = vperm.slane %v2504, %v2507
          %v2509 = vrot.slane %v2499, 4
          %v2510 = vsel %vm1219, %v2509, %v2497
          %v2512 = vunpack.c.l.s4 1983009808
          %v2513 = vunpack.c.0.s8 %v2512
          %v2514 = vperm.slane %v2510, %v2513
          %v2515 = vsel %vm1219, %v2502, %v2491
          %v2517 = vunpack.c.l.s4 1983009808
          %v2518 = vunpack.c.0.s8 %v2517
          %v2519 = vperm.slane %v2515, %v2518
          %v2520 = vrot.slane %v2503, 4
          %v2521 = vsel %vm1219, %v2520, %v2501
          %v2523 = vunpack.c.l.s4 1983009808
          %v2524 = vunpack.c.0.s8 %v2523
          %v2525 = vperm.slane %v2521, %v2524
          %v2526 = vrot.slane %v2514, 4
          %v2527 = vsel %vm1219, %v2526, %v2508
          %v2528 = vrot.slane %v2508, 4
          %v2529 = vsel %vm1219, %v2514, %v2528
          %v2531 = vunpack.c.l.s4 1934713408
          %v2532 = vunpack.c.0.s8 %v2531
          %v2533 = vperm.slane %v2527, %v2532
          %v2535 = vunpack.c.l.s4 1934713408
          %v2536 = vunpack.c.0.s8 %v2535
          %v2537 = vperm.slane %v2529, %v2536
          %v2538 = vrot.slane %v2525, 4
          %v2539 = vsel %vm1219, %v2538, %v2519
          %v2540 = vrot.slane %v2519, 4
          %v2541 = vsel %vm1219, %v2525, %v2540
          %v2543 = vunpack.c.l.s4 1934713408
          %v2544 = vunpack.c.0.s8 %v2543
          %v2545 = vperm.slane %v2539, %v2544
          %v2547 = vunpack.c.l.s4 1934713408
          %v2548 = vunpack.c.0.s8 %v2547
          %v2549 = vperm.slane %v2541, %v2548
          %v2550 = vrot.slane %v2545, 4
          %v2551 = vsel %vm1219, %v2550, %v2533
          %v2552 = vrot.slane %v2533, 4
          %v2553 = vsel %vm1219, %v2545, %v2552
          %v2554 = vrot.slane %v2549, 4
          %v2555 = vsel %vm1219, %v2554, %v2537
          %v2556 = vrot.slane %v2537, 4
          %v2557 = vsel %vm1219, %v2549, %v2556
          %v2558 = vpack.c.bf16 %v2551, %v2551
          %v2559 = vpack.c.bf16 %v2553, %v2553
          %v2560 = vpack.c.bf16 %v2555, %v2555
          %v2561 = vpack.c.bf16 %v2557, %v2557
          %v2563 = vsel %vm1585, %v2310, 0
          %v2566 = vsel %vm1585, %v2434, 0
          %2568 = vmatpush.bf16.xpose.msra.mxu0 0
          %2569 = vmatpush.bf16.xpose.msra.mxu0 0
          %2570 = vmatpush.bf16.xpose.msra.mxu0 0
          %2571 = vmatpush.bf16.xpose.msra.mxu0 0
          %2572 = vmatpush.bf16.xpose.msra.mxu0 0
          %2573 = vmatpush.bf16.xpose.msra.mxu0 0
          %2574 = vmatpush.bf16.xpose.msra.mxu0 0
          %2575 = vmatpush.bf16.xpose.msra.mxu0 %v2566
          %2576 = vmatmul.bf16.gmra.mxu0 %v2563
          %v2577 = vpop.f32.mrf.mxu0
          %v2578 = vadd.f32 0.0, %v2577
          %v2579 = vpop.f32.mrf.mxu0
          %2580 = vdwg.mxu0
          %v2582 = vsel %vm1585, %v2311, 0
          %v2585 = vsel %vm1585, %v2435, 0
          %2587 = vmatpush.bf16.xpose.msra.mxu0 0
          %2588 = vmatpush.bf16.xpose.msra.mxu0 0
          %2589 = vmatpush.bf16.xpose.msra.mxu0 0
          %2590 = vmatpush.bf16.xpose.msra.mxu0 0
          %2591 = vmatpush.bf16.xpose.msra.mxu0 0
          %2592 = vmatpush.bf16.xpose.msra.mxu0 0
          %2593 = vmatpush.bf16.xpose.msra.mxu0 0
          %2594 = vmatpush.bf16.xpose.msra.mxu0 %v2585
          %2595 = vmatmul.bf16.gmra.mxu0 %v2582
          %v2596 = vpop.f32.mrf.mxu0
          %v2597 = vadd.f32 0.0, %v2596
          %v2598 = vpop.f32.mrf.mxu0
          %2599 = vdwg.mxu0
          %v2601 = vsel %vm1585, %v2312, 0
          %v2604 = vsel %vm1585, %v2436, 0
          %2606 = vmatpush.bf16.xpose.msra.mxu0 0
          %2607 = vmatpush.bf16.xpose.msra.mxu0 0
          %2608 = vmatpush.bf16.xpose.msra.mxu0 0
          %2609 = vmatpush.bf16.xpose.msra.mxu0 0
          %2610 = vmatpush.bf16.xpose.msra.mxu0 0
          %2611 = vmatpush.bf16.xpose.msra.mxu0 0
          %2612 = vmatpush.bf16.xpose.msra.mxu0 0
          %2613 = vmatpush.bf16.xpose.msra.mxu0 %v2604
          %2614 = vmatmul.bf16.gmra.mxu0 %v2601
          %v2615 = vpop.f32.mrf.mxu0
          %v2616 = vadd.f32 0.0, %v2615
          %v2617 = vpop.f32.mrf.mxu0
          %2618 = vdwg.mxu0
          %v2620 = vsel %vm1585, %v2313, 0
          %v2623 = vsel %vm1585, %v2437, 0
          %2625 = vmatpush.bf16.xpose.msra.mxu0 0
          %2626 = vmatpush.bf16.xpose.msra.mxu0 0
          %2627 = vmatpush.bf16.xpose.msra.mxu0 0
          %2628 = vmatpush.bf16.xpose.msra.mxu0 0
          %2629 = vmatpush.bf16.xpose.msra.mxu0 0
          %2630 = vmatpush.bf16.xpose.msra.mxu0 0
          %2631 = vmatpush.bf16.xpose.msra.mxu0 0
          %2632 = vmatpush.bf16.xpose.msra.mxu0 %v2623
          %2633 = vmatmul.bf16.gmra.mxu0 %v2620
          %v2634 = vpop.f32.mrf.mxu0
          %v2635 = vadd.f32 0.0, %v2634
          %v2636 = vpop.f32.mrf.mxu0
          %2637 = vdwg.mxu0
          %v2638 = vmul.f32 %v2578, 0.35355338
          %v2639 = vmul.f32 %v2597, 0.35355338
          %v2640 = vmul.f32 %v2616, 0.35355338
          %v2641 = vmul.f32 %v2635, 0.35355338
          %vm2642 = vcmask 60416
          %v2643 = vsel %vm2642, %v2638, -inf
          %2644 = vmax.xlane.f32.xlu0 %v2643
          %v2645 = vpop.xlane.xlu0 %2644
          %v2646 = vsel %vm2642, %v2639, -inf
          %2647 = vmax.xlane.f32.xlu0 %v2646
          %v2648 = vpop.xlane.xlu0 %2647
          %v2649 = vsel %vm2642, %v2640, -inf
          %2650 = vmax.xlane.f32.xlu0 %v2649
          %v2651 = vpop.xlane.xlu0 %2650
          %v2652 = vsel %vm2642, %v2641, -inf
          %2653 = vmax.xlane.f32.xlu0 %v2652
          %v2654 = vpop.xlane.xlu0 %2653
          %v2655 = vsub.f32 %v2638, %v2645
          %v2656 = vsub.f32 %v2639, %v2648
          %v2657 = vsub.f32 %v2640, %v2651
          %v2658 = vsub.f32 %v2641, %v2654
          %v2659 = vmul.f32 %v2655, 1.442695
          %v2660 = vpow.pop %v2659
          %v2661 = vmul.f32 %v2656, 1.442695
          %v2662 = vpow.pop %v2661
          %v2663 = vmul.f32 %v2657, 1.442695
          %v2664 = vpow.pop %v2663
          %v2665 = vmul.f32 %v2658, 1.442695
          %v2666 = vpow.pop %v2665
          %v2667 = vsel %vm2642, %v2660, 0.0
          %2668 = vadd.xlane.f32.xlu0 %v2667
          %v2669 = vpop.xlane.xlu0 %2668
          %v2670 = vsel %vm2642, %v2662, 0.0
          %2671 = vadd.xlane.f32.xlu0 %v2670
          %v2672 = vpop.xlane.xlu0 %2671
          %v2673 = vsel %vm2642, %v2664, 0.0
          %2674 = vadd.xlane.f32.xlu0 %v2673
          %v2675 = vpop.xlane.xlu0 %2674
          %v2676 = vsel %vm2642, %v2666, 0.0
          %2677 = vadd.xlane.f32.xlu0 %v2676
          %v2678 = vpop.xlane.xlu0 %2677
          %v2679 = vrcp.pop %v2669
          %v2680 = vrcp.pop %v2672
          %v2681 = vrcp.pop %v2675
          %v2682 = vrcp.pop %v2678
          %v2683 = vmul.f32 %v2660, %v2679
          %v2684 = vmul.f32 %v2662, %v2680
          %v2685 = vmul.f32 %v2664, %v2681
          %v2686 = vmul.f32 %v2666, %v2682
          %v2687 = vpack.c.bf16 %v2683, %v2683
          %v2688 = vpack.c.bf16 %v2684, %v2684
          %v2689 = vpack.c.bf16 %v2685, %v2685
          %v2690 = vpack.c.bf16 %v2686, %v2686
          %v2692 = vsel %vm1585, %v2687, 0
          %v2695 = vsel %vm1717, %v2558, 0
          %2697 = vmatpush.bf16.msra.mxu0 0
          %2698 = vmatpush.bf16.msra.mxu0 0
          %2699 = vmatpush.bf16.msra.mxu0 0
          %2700 = vmatpush.bf16.msra.mxu0 0
          %2701 = vmatpush.bf16.msra.mxu0 0
          %2702 = vmatpush.bf16.msra.mxu0 0
          %2703 = vmatpush.bf16.msra.mxu0 0
          %2704 = vmatpush.bf16.msra.mxu0 %v2695
          %2705 = vmatmul.bf16.gmra.mxu0 %v2692
          %v2706 = vpop.f32.mrf.mxu0
          %v2707 = vadd.f32 0.0, %v2706
          %v2708 = vpop.f32.mrf.mxu0
          %2709 = vdwg.mxu0
          %v2711 = vsel %vm1585, %v2688, 0
          %v2714 = vsel %vm1717, %v2559, 0
          %2716 = vmatpush.bf16.msra.mxu0 0
          %2717 = vmatpush.bf16.msra.mxu0 0
          %2718 = vmatpush.bf16.msra.mxu0 0
          %2719 = vmatpush.bf16.msra.mxu0 0
          %2720 = vmatpush.bf16.msra.mxu0 0
          %2721 = vmatpush.bf16.msra.mxu0 0
          %2722 = vmatpush.bf16.msra.mxu0 0
          %2723 = vmatpush.bf16.msra.mxu0 %v2714
          %2724 = vmatmul.bf16.gmra.mxu0 %v2711
          %v2725 = vpop.f32.mrf.mxu0
          %v2726 = vadd.f32 0.0, %v2725
          %v2727 = vpop.f32.mrf.mxu0
          %2728 = vdwg.mxu0
          %v2730 = vsel %vm1585, %v2689, 0
          %v2733 = vsel %vm1717, %v2560, 0
          %2735 = vmatpush.bf16.msra.mxu0 0
          %2736 = vmatpush.bf16.msra.mxu0 0
          %2737 = vmatpush.bf16.msra.mxu0 0
          %2738 = vmatpush.bf16.msra.mxu0 0
          %2739 = vmatpush.bf16.msra.mxu0 0
          %2740 = vmatpush.bf16.msra.mxu0 0
          %2741 = vmatpush.bf16.msra.mxu0 0
          %2742 = vmatpush.bf16.msra.mxu0 %v2733
          %2743 = vmatmul.bf16.gmra.mxu0 %v2730
          %v2744 = vpop.f32.mrf.mxu0
          %v2745 = vadd.f32 0.0, %v2744
          %v2746 = vpop.f32.mrf.mxu0
          %2747 = vdwg.mxu0
          %v2749 = vsel %vm1585, %v2690, 0
          %v2752 = vsel %vm1717, %v2561, 0
          %2754 = vmatpush.bf16.msra.mxu0 0
          %2755 = vmatpush.bf16.msra.mxu0 0
          %2756 = vmatpush.bf16.msra.mxu0 0
          %2757 = vmatpush.bf16.msra.mxu0 0
          %2758 = vmatpush.bf16.msra.mxu0 0
          %2759 = vmatpush.bf16.msra.mxu0 0
          %2760 = vmatpush.bf16.msra.mxu0 0
          %2761 = vmatpush.bf16.msra.mxu0 %v2752
          %2762 = vmatmul.bf16.gmra.mxu0 %v2749
          %v2763 = vpop.f32.mrf.mxu0
          %v2764 = vadd.f32 0.0, %v2763
          %v2765 = vpop.f32.mrf.mxu0
          %2766 = vdwg.mxu0
          %v2767 = vrot.slane %v2745, 4
          %v2768 = vsel %vm1219, %v2767, %v2707
          %v2770 = vunpack.c.l.s4 1983009808
          %v2771 = vunpack.c.0.s8 %v2770
          %v2772 = vperm.slane %v2768, %v2771
          %v2773 = vrot.slane %v2764, 4
          %v2774 = vsel %vm1219, %v2773, %v2726
          %v2776 = vunpack.c.l.s4 1983009808
          %v2777 = vunpack.c.0.s8 %v2776
          %v2778 = vperm.slane %v2774, %v2777
          %v2779 = vrot.slane %v2778, 4
          %v2780 = vsel %vm1219, %v2779, %v2772
          %v2781 = vrot.slane %v2772, 4
          %v2782 = vsel %vm1219, %v2778, %v2781
          %v2784 = vunpack.c.l.s4 1934713408
          %v2785 = vunpack.c.0.s8 %v2784
          %v2786 = vperm.slane %v2780, %v2785
          %v2788 = vunpack.c.l.s4 1934713408
          %v2789 = vunpack.c.0.s8 %v2788
          %v2790 = vperm.slane %v2782, %v2789
          %v2791 = vrot.slane %v2786, 4
          %v2792 = vsel %vm1219, 0.0, %v2791
          %v2793 = vrot.slane %v2790, 4
          %v2794 = vsel %vm1219, 0.0, %v2793
          %v2795 = vsel %vm1219, %v2793, %v2786
          %v2797 = vunpack.c.l.s4 1983009808
          %v2798 = vunpack.c.0.s8 %v2797
          %v2799 = vperm.slane %v2795, %v2798
          %v2800 = vrot.slane %v2794, 4
          %v2801 = vsel %vm1219, %v2800, %v2792
          %v2803 = vunpack.c.l.s4 1983009808
          %v2804 = vunpack.c.0.s8 %v2803
          %v2805 = vperm.slane %v2801, %v2804
          %v2806 = vrot.slane %v2805, 4
          %v2807 = vsel %vm1219, %v2806, %v2799
          %v2808 = vrot.slane %v2799, 4
          %v2809 = vsel %vm1219, %v2805, %v2808
          %v2811 = vunpack.c.l.s4 1934713408
          %v2812 = vunpack.c.0.s8 %v2811
          %v2813 = vperm.slane %v2807, %v2812
          %v2815 = vunpack.c.l.s4 1934713408
          %v2816 = vunpack.c.0.s8 %v2815
          %v2817 = vperm.slane %v2809, %v2816
          %v2818 = vrot.slane %v2813, 4
          %v2819 = vsel %vm1219, 0.0, %v2818
          %v2820 = vrot.slane %v2817, 4
          %v2821 = vsel %vm1219, 0.0, %v2820
          %2823 = vrot.lane.b32.xlu0 %v2819, 8
          %v2824 = vpop.permute.xlu0 %2823
          %2827 = vrot.lane.b32.xlu0 %v2817, 16
          %v2828 = vpop.permute.xlu0 %2827
          %2831 = vrot.lane.b32.xlu0 %v2821, 24
          %v2832 = vpop.permute.xlu0 %2831
          %v2834 = vsel %vm1585, %v2813, %v2824
          %v2835 = vsel %vm1914, %v2834, %v2828
          %v2836 = vsel %vm1916, %v2835, %v2832
          %v2837 = vpack.c.bf16 %v2836, %v2836
          %v2838 = vld [vmem:[#allocation23] sm:$0xf]
          %v2839 = vld [vmem:[#allocation23 + $0x4] sm:$0xf]
          %v2840 = vld [vmem:[#allocation23 + $0x8] sm:$0xf]
          %v2841 = vld [vmem:[#allocation23 + $0xc] sm:$0xf]
          %v2842 = vld [vmem:[%s21] sm:$0x1]
          %v2844 = vperm.slane %v2842, 0
          %v2850 = vunpack.c.l.b16 %v2838
          %v2851 = vunpack.c.l.b16 %v2839
          %v2852 = vunpack.c.l.b16 %v2840
          %v2853 = vunpack.c.l.b16 %v2841
          %v2854 = vpack.c.b16 %v2851, %v2850
          %v2855 = vpack.c.b16 %v2853, %v2852
          %v2859 = vsel %vm1133, %v2837, 0
          %2861 = vmatpush.bf16.msra.mxu0 0
          %2862 = vmatpush.bf16.msra.mxu0 0
          %2863 = vmatpush.bf16.msra.mxu0 0
          %2864 = vmatpush.bf16.msra.mxu0 0
          %2865 = vmatpush.bf16.msra.mxu0 0
          %2866 = vmatpush.bf16.msra.mxu0 0
          %2867 = vmatpush.bf16.msra.mxu0 %v2855
          %2868 = vmatpush.bf16.msra.mxu0 %v2854
          %2869 = vmatmul.bf16.gmra.mxu0 %v2859
          %v2870 = vpop.f32.mrf.mxu0
          %v2871 = vadd.f32 %v2844, %v2870
          %v2872 = vpop.f32.mrf.mxu0
          %2873 = vdwg.mxu0
          %v2874 = vadd.f32 %v2137, %v2871
          %vm2875 = vcmask 257024
          %2876 = vst.msk [vmem:[%s1097] sm:$0xf] %vm2875, %v2874
        $region168: #{tpu_custom_call.1} parent=107 // pred_fallthru
          _
        %s2877 = sand.u32 %s600, 1
        %s2878 = scalar_lea.sflag [#allocation5], %s2877
        %s2879 = sand.u32 %s600, 1
        %s2880 = smul.addr %s2879, 4
        %s2881 = scalar_lea.vmem [#allocation24], %s2880
        // Predicated region
        $region169: #{tpu_custom_call.1} parent=107 // pred_check
          %p2882 = pneg %p610
        $region170: #{tpu_custom_call.1} parent=107 // pred_check_branch
          %2884 = sbr.rel (%p2882) target = $region172
        $region171: #{tpu_custom_call.1} parent=107 // pred_region
          %2886 = vsyncadd %s2878, 0
          %s2887 = smul.addr %s57, 4
          %s2888 = scalar_lea.hbm %s22, %s2887
          %s2890 = sshll.u32 %s2881, 4
          %s2891 = int_to_ptr.vmem [resolvable:$true] %s2890
          %s2892 = sshll.u32 %s2888, 4
          %s2893 = int_to_ptr.hbm [resolvable:$true] %s2892
          %2895 = dma.vmem_to_hbm [thread:$0]  %s2891, 64, %s2893, %s2878
        $region172: #{tpu_custom_call.1} parent=107 // pred_fallthru
          _
      $region108: #{tpu_custom_call.1} parent=5 // pred_fallthru
        _
      %p2896 = scmp.le.s32.totalorder 2, %s48
      // Predicated region
      $region173: #{tpu_custom_call.1} parent=5 // pred_check
        %p2897 = pneg %p2896
      $region174: #{tpu_custom_call.1} parent=5 // pred_check_branch
        %2899 = sbr.rel (%p2897) target = $region176
      $region175: #{tpu_custom_call.1} parent=5 // pred_region
        %s2900 = ssub.s32 %s48, 2
        // Predicated region
        $region177: #{tpu_custom_call.1} parent=175 // pred_check
          %p2901 = pneg %p616
        $region178: #{tpu_custom_call.1} parent=175 // pred_check_branch
          %2903 = sbr.rel (%p2901) target = $region180
        $region179: #{tpu_custom_call.1} parent=175 // pred_region
          %s2904 = sand.u32 %s601, 1
          %s2905 = scalar_lea.sflag [#allocation5], %s2904
          %s2906 = sand.u32 %s601, 1
          %s2907 = smul.addr %s2906, 4
          %s2908 = scalar_lea.vmem [#allocation24], %s2907
          %2910 = dma.done %s2905, 64
        $region180: #{tpu_custom_call.1} parent=175 // pred_fallthru
          _
      $region176: #{tpu_custom_call.1} parent=5 // pred_fallthru
        _
    $region6: #{tpu_custom_call.1} parent=1 // loop_footer
      %s52 = sadd.s32 1, %s48
    $region7: #{tpu_custom_call.1} parent=1 // loop_footer_branch
      %47 = sbr.rel target = $region3
    $region8: #{tpu_custom_call.1} parent=1 // loop_exit
      _
    %2911 = vsyncpa [#allocation4], 1
    %s2912 = scalar_lea.sflag [#allocation4], 1
    %2913 = vsyncpa %s2912, 1
    %2914 = vsyncpa [#allocation7], 1
    %s2915 = scalar_lea.sflag [#allocation7], 1
    %2916 = vsyncpa %s2915, 1
    %2917 = vsyncpa [#allocation10], 1
    %s2918 = scalar_lea.sflag [#allocation10], 1
    %2919 = vsyncpa %s2918, 1
    %2920 = vsyncpa [#allocation13], 1
    %s2921 = scalar_lea.sflag [#allocation13], 1
    %2922 = vsyncpa %s2921, 1
    %2923 = vsyncpa [#allocation16], 1
    %s2924 = scalar_lea.sflag [#allocation16], 1
    %2925 = vsyncpa %s2924, 1
    %2926 = vsyncpa [#allocation19], 1
    %2927 = vsyncpa [#allocation22], 1
    %2928 = vsyncpa [#allocation5], 1
    %s2929 = scalar_lea.sflag [#allocation5], 1
    %2930 = vsyncpa %s2929, 1

</llo_original>
